<compile_context>
chip_gen: v7x
topology: tpu7x:2x2x1
jax: 0.10.0
libtpu: 0.0.40
codegen_flags: <defaults>
</compile_context>

<pallas_src>
import functools
import math

import jax
import jax.numpy as jnp
from jax import lax
from jax.experimental import pallas as pl
from jax.experimental.pallas import tpu as pltpu

# MXU is bf16-native on v5e/v6e/v7x; feed it bf16 operands, accumulate in f32.
_MXU_DTYPE = jnp.bfloat16


# ------------------------------ fused kernel --------------------------------

def _fused_rnn_kernel(*refs, num_layers, seq_len, batch):
    """Single-invocation fused forward.

    Ref order (all full-array VMEM blocks, time-major rows t*B + b):
      x (T*B, Fin), in_w (Fin, E), in_b (1, E),
      per layer: w_ih (3, in_dim, H), w_hh (3, H, H), b_ih (3, 1, H), b_hh (3, 1, H),
      head: w1 (H, M), b1 (1, M), w2 (M, O), b2 (1, O),
      out (T*B, O),
      scratch: gi_r, gi_z, gi_n, seq  -- each (T*B, H) f32 in VMEM.
    """
    T, B = seq_len, batch

    it = iter(refs)
    x_ref = next(it)
    in_w_ref, in_b_ref = next(it), next(it)
    layers = []
    for _ in range(num_layers):
        layers.append((next(it), next(it), next(it), next(it)))
    w1_ref, b1_ref, w2_ref, b2_ref = next(it), next(it), next(it), next(it)
    out_ref = next(it)
    gi_r_ref, gi_z_ref, gi_n_ref, seq_ref = next(it), next(it), next(it), next(it)

    def mm(a, b):  # bf16 MXU matmul, f32 accumulate
        return jnp.dot(a.astype(_MXU_DTYPE), b.astype(_MXU_DTYPE),
                       preferred_element_type=jnp.float32)

    # ---- 1) input embedding: nn.Linear(input_size, embedding_size), no activation ----
    cur = mm(x_ref[...], in_w_ref[...]) + in_b_ref[...]          # (T*B, E) f32

    # ---- 2) stacked GRU layers (PyTorch gate order [r | z | n]) ----
    H = layers[0][1].shape[-1]
    for (wih_ref, whh_ref, bih_ref, bhh_ref) in layers:
        # Hoisted input-to-hidden matmuls for the WHOLE sequence (one big MXU matmul per
        # gate, M = T*B) instead of a tiny per-step matmul.
        gi_r_ref[...] = mm(cur, wih_ref[0]) + bih_ref[0]
        gi_z_ref[...] = mm(cur, wih_ref[1]) + bih_ref[1]
        gi_n_ref[...] = mm(cur, wih_ref[2]) + bih_ref[2]

        # Recurrent weights loaded + cast once, reused by every step.
        w_hr = whh_ref[0].astype(_MXU_DTYPE)
        w_hz = whh_ref[1].astype(_MXU_DTYPE)
        w_hn = whh_ref[2].astype(_MXU_DTYPE)
        b_hr, b_hz, b_hn = bhh_ref[0], bhh_ref[1], bhh_ref[2]

        def step(t, h):
            base = pl.multiple_of(t * B, B)
            rows = pl.ds(base, B)
            gi_r = gi_r_ref[rows, :]
            gi_z = gi_z_ref[rows, :]
            gi_n = gi_n_ref[rows, :]
            h16 = h.astype(_MXU_DTYPE)
            gh_r = jnp.dot(h16, w_hr, preferred_element_type=jnp.float32) + b_hr
            gh_z = jnp.dot(h16, w_hz, preferred_element_type=jnp.float32) + b_hz
            gh_n = jnp.dot(h16, w_hn, preferred_element_type=jnp.float32) + b_hn
            r = jax.nn.sigmoid(gi_r + gh_r)
            z = jax.nn.sigmoid(gi_z + gh_z)
            n = jnp.tanh(gi_n + r * gh_n)        # n = tanh(i_n + r * (h @ W_hn + b_hn))
            h_new = (1.0 - z) * n + z * h
            seq_ref[rows, :] = h_new
            return h_new

        h0 = jnp.zeros((B, H), jnp.float32)      # self.hidden = None -> zeros
        # Short static trip count -> fully unroll so the scheduler sees the whole recurrence.
        lax.fori_loop(0, T, step, h0, unroll=True)
        cur = seq_ref[...]                       # (T*B, H): next layer / head input

    # ---- 3) MLP_Softmax head: Linear -> ReLU -> Linear -> Softmax(last dim) ----
    h1 = jnp.maximum(mm(cur, w1_ref[...]) + b1_ref[...], 0.0)
    logits = mm(h1, w2_ref[...]) + b2_ref[...]
    m = jnp.max(logits, axis=-1, keepdims=True)
    e = jnp.exp(logits - m)
    # Exact divide keeps each row summing to 1 within f32 rounding; pl.reciprocal(approx=True)
    # would move this onto the EUP slot at the cost of a looser normalization tolerance.
    probs = e / jnp.sum(e, axis=-1, keepdims=True)
    out_ref[...] = probs.astype(out_ref.dtype)


# ----------------------------- parameter setup ------------------------------

def xavier_uniform(key, shape, gain):
    """shape = (fan_in, fan_out) — stored transposed relative to torch's (out, in)."""
    fan_in, fan_out = shape
    limit = gain * math.sqrt(6.0 / (fan_in + fan_out))
    return jax.random.uniform(key, shape, jnp.float32, -limit, limit)


def init_rnn_params(key, input_size, embedding_size, hidden_size, num_layers,
                    output_size, output_embedding_size=None):
    relu_gain = math.sqrt(2.0)   # calculate_gain('relu')
    sig_gain = 1.0               # calculate_gain('sigmoid')
    emb = embedding_size if output_embedding_size is None else output_embedding_size
    H = hidden_size

    keys = jax.random.split(key, 6 + 2 * num_layers)
    ki = iter(range(len(keys)))
    params = {}

    # self.input = nn.Linear(input_size, embedding_size)   (relu-gain xavier)
    params["in_w"] = xavier_uniform(keys[next(ki)], (input_size, embedding_size), relu_gain)
    params["in_b"] = 0.01 * jax.random.normal(keys[next(ki)], (1, embedding_size), jnp.float32)

    # GRU layers: weights sigmoid-gain xavier, biases constant 0.25.
    # Stored as per-gate slabs (3, in_dim, H) in PyTorch gate order [r | z | n].
    params["gru"] = []
    for layer in range(num_layers):
        in_dim = embedding_size if layer == 0 else H
        w_ih = xavier_uniform(keys[next(ki)], (in_dim, 3 * H), sig_gain)
        w_hh = xavier_uniform(keys[next(ki)], (H, 3 * H), sig_gain)
        w_ih = jnp.stack([w_ih[:, :H], w_ih[:, H:2 * H], w_ih[:, 2 * H:]], axis=0)
        w_hh = jnp.stack([w_hh[:, :H], w_hh[:, H:2 * H], w_hh[:, 2 * H:]], axis=0)
        b_ih = jnp.full((3, 1, H), 0.25, jnp.float32)
        b_hh = jnp.full((3, 1, H), 0.25, jnp.float32)
        params["gru"].append((w_ih, w_hh, b_ih, b_hh))

    # MLP_Softmax head: Linear(hidden, emb) -> ReLU -> Linear(emb, output) -> Softmax
    params["out_w1"] = xavier_uniform(keys[next(ki)], (H, emb), relu_gain)
    params["out_b1"] = 0.01 * jax.random.normal(keys[next(ki)], (1, emb), jnp.float32)
    params["out_w2"] = xavier_uniform(keys[next(ki)], (emb, output_size), relu_gain)
    params["out_b2"] = 0.01 * jax.random.normal(keys[next(ki)], (1, output_size), jnp.float32)
    return params


# ------------------------------- forward pass --------------------------------

def rnn_forward(params, x):
    """x: (B, T, input_size) -> (B, T, output_size) with softmax over the last dim."""
    B, T, Fin = x.shape
    num_layers = len(params["gru"])
    H = params["gru"][0][1].shape[-1]
    O = params["out_w2"].shape[1]

    # Time-major (row order t*B + b) so each GRU step touches a contiguous (B, .) slab.
    # Only this tiny raw input and the final probs are permuted in XLA; the large
    # (T*B, H) activations never leave VMEM between layers.
    x_tm = jnp.transpose(x, (1, 0, 2)).reshape(T * B, Fin)

    inputs = [x_tm, params["in_w"], params["in_b"]]
    for (w_ih, w_hh, b_ih, b_hh) in params["gru"]:
        inputs += [w_ih, w_hh, b_ih, b_hh]
    inputs += [params["out_w1"], params["out_b1"], params["out_w2"], params["out_b2"]]

    kernel = functools.partial(_fused_rnn_kernel, num_layers=num_layers,
                               seq_len=T, batch=B)

    out_tm = pl.pallas_call(
        kernel,
        out_shape=jax.ShapeDtypeStruct((T * B, O), jnp.float32),
        scratch_shapes=[pltpu.VMEM((T * B, H), jnp.float32) for _ in range(4)],
    )(*inputs)

    # NOTE: for large B on v7x, shard the batch across the 2 TensorCores with a
    # "parallel" batch-tile grid axis; at B=2 a single invocation is optimal.
    return out_tm.reshape(T, B, O).transpose(1, 0, 2)


# ----------------------------------- main ------------------------------------

if __name__ == "__main__":
    B, T = 2, 8
    input_size = 4
    embedding_size = 32
    hidden_size = 32
    num_layers = 2
    output_size = 16

    key = jax.random.PRNGKey(0)
    kx, kp = jax.random.split(key)
    x = jax.random.normal(kx, (B, T, input_size), jnp.float32)

    params = init_rnn_params(kp, input_size, embedding_size, hidden_size,
                             num_layers, output_size)

    out = rnn_forward(params, x)
    out = jax.block_until_ready(out)

    assert out.shape == (B, T, output_size), out.shape
    # softmax rows must be a valid distribution
    assert bool(jnp.allclose(out.sum(-1), 1.0, atol=1e-5))
    assert bool(jnp.all(out >= 0.0))
    print("KERNEL_OK")
</pallas_src>

<mosaic_0001>
module attributes {stable_mosaic.version = 11 : i64} {
  func.func @_fused_rnn_kernel(%arg0: memref<16x4xf32, #tpu.memory_space<vmem>>, %arg1: memref<4x32xf32, #tpu.memory_space<vmem>>, %arg2: memref<1x32xf32, #tpu.memory_space<vmem>>, %arg3: memref<3x32x32xf32, #tpu.memory_space<vmem>>, %arg4: memref<3x32x32xf32, #tpu.memory_space<vmem>>, %arg5: memref<3x1x32xf32, #tpu.memory_space<vmem>>, %arg6: memref<3x1x32xf32, #tpu.memory_space<vmem>>, %arg7: memref<3x32x32xf32, #tpu.memory_space<vmem>>, %arg8: memref<3x32x32xf32, #tpu.memory_space<vmem>>, %arg9: memref<3x1x32xf32, #tpu.memory_space<vmem>>, %arg10: memref<3x1x32xf32, #tpu.memory_space<vmem>>, %arg11: memref<32x32xf32, #tpu.memory_space<vmem>>, %arg12: memref<1x32xf32, #tpu.memory_space<vmem>>, %arg13: memref<32x16xf32, #tpu.memory_space<vmem>>, %arg14: memref<1x16xf32, #tpu.memory_space<vmem>>, %arg15: memref<16x16xf32, #tpu.memory_space<vmem>>, %arg16: memref<16x32xf32, #tpu.memory_space<vmem>>, %arg17: memref<16x32xf32, #tpu.memory_space<vmem>>, %arg18: memref<16x32xf32, #tpu.memory_space<vmem>>, %arg19: memref<16x32xf32, #tpu.memory_space<vmem>>) attributes {dimension_semantics = [], scalar_prefetch = 0 : i64, scratch_operands = 4 : i64, tpu.core_type = #tpu.core_type<tc>} {
    %c0 = arith.constant 0 : index
    %c0_0 = arith.constant 0 : index
    %0 = vector.load %arg0[%c0, %c0_0] : memref<16x4xf32, #tpu.memory_space<vmem>>, vector<16x4xf32>
    %c0_1 = arith.constant 0 : index
    %c0_2 = arith.constant 0 : index
    %1 = vector.load %arg1[%c0_1, %c0_2] : memref<4x32xf32, #tpu.memory_space<vmem>>, vector<4x32xf32>
    %2 = arith.truncf %0 : vector<16x4xf32> to vector<16x4xbf16>
    %3 = arith.truncf %1 : vector<4x32xf32> to vector<4x32xbf16>
    %cst = arith.constant dense<0.000000e+00> : vector<16x32xf32>
    %4 = tpu.matmul %2, %3, %cst {dimension_numbers = #tpu.dot_dimension_numbers<[1], [0], [0], [1], [0, 0, 1, 1], [], []>} : vector<16x4xbf16>, vector<4x32xbf16>, vector<16x32xf32> -> vector<16x32xf32>
    %c0_3 = arith.constant 0 : index
    %c0_4 = arith.constant 0 : index
    %5 = vector.load %arg2[%c0_3, %c0_4] : memref<1x32xf32, #tpu.memory_space<vmem>>, vector<1x32xf32>
    %6 = vector.broadcast %5 : vector<1x32xf32> to vector<16x32xf32>
    %7 = arith.addf %4, %6 : vector<16x32xf32>
    %c0_5 = arith.constant 0 : index
    %c0_6 = arith.constant 0 : index
    %c0_7 = arith.constant 0 : index
    %8 = vector.load %arg3[%c0_5, %c0_6, %c0_7] : memref<3x32x32xf32, #tpu.memory_space<vmem>>, vector<1x32x32xf32>
    %9 = vector.shape_cast %8 : vector<1x32x32xf32> to vector<32x32xf32>
    %10 = arith.truncf %7 : vector<16x32xf32> to vector<16x32xbf16>
    %11 = arith.truncf %9 : vector<32x32xf32> to vector<32x32xbf16>
    %cst_8 = arith.constant dense<0.000000e+00> : vector<16x32xf32>
    %12 = tpu.matmul %10, %11, %cst_8 {dimension_numbers = #tpu.dot_dimension_numbers<[1], [0], [0], [1], [0, 0, 1, 1], [], []>} : vector<16x32xbf16>, vector<32x32xbf16>, vector<16x32xf32> -> vector<16x32xf32>
    %c0_9 = arith.constant 0 : index
    %c0_10 = arith.constant 0 : index
    %c0_11 = arith.constant 0 : index
    %13 = vector.load %arg5[%c0_9, %c0_10, %c0_11] : memref<3x1x32xf32, #tpu.memory_space<vmem>>, vector<1x1x32xf32>
    %14 = vector.shape_cast %13 : vector<1x1x32xf32> to vector<1x32xf32>
    %15 = vector.broadcast %14 : vector<1x32xf32> to vector<16x32xf32>
    %16 = arith.addf %12, %15 : vector<16x32xf32>
    %c0_12 = arith.constant 0 : index
    %c0_13 = arith.constant 0 : index
    %17 = vector.load %arg16[%c0_12, %c0_13] : memref<16x32xf32, #tpu.memory_space<vmem>>, vector<16x32xf32>
    tpu.vector_store %arg16[%c0_12, %c0_13], %16 {strides = array<i32>} : memref<16x32xf32, #tpu.memory_space<vmem>>, vector<16x32xf32>,
    %c1 = arith.constant 1 : index
    %c0_14 = arith.constant 0 : index
    %c0_15 = arith.constant 0 : index
    %18 = vector.load %arg3[%c1, %c0_14, %c0_15] : memref<3x32x32xf32, #tpu.memory_space<vmem>>, vector<1x32x32xf32>
    %19 = vector.shape_cast %18 : vector<1x32x32xf32> to vector<32x32xf32>
    %20 = arith.truncf %7 : vector<16x32xf32> to vector<16x32xbf16>
    %21 = arith.truncf %19 : vector<32x32xf32> to vector<32x32xbf16>
    %cst_16 = arith.constant dense<0.000000e+00> : vector<16x32xf32>
    %22 = tpu.matmul %20, %21, %cst_16 {dimension_numbers = #tpu.dot_dimension_numbers<[1], [0], [0], [1], [0, 0, 1, 1], [], []>} : vector<16x32xbf16>, vector<32x32xbf16>, vector<16x32xf32> -> vector<16x32xf32>
    %c1_17 = arith.constant 1 : index
    %c0_18 = arith.constant 0 : index
    %c0_19 = arith.constant 0 : index
    %23 = vector.load %arg5[%c1_17, %c0_18, %c0_19] : memref<3x1x32xf32, #tpu.memory_space<vmem>>, vector<1x1x32xf32>
    %24 = vector.shape_cast %23 : vector<1x1x32xf32> to vector<1x32xf32>
    %25 = vector.broadcast %24 : vector<1x32xf32> to vector<16x32xf32>
    %26 = arith.addf %22, %25 : vector<16x32xf32>
    %c0_20 = arith.constant 0 : index
    %c0_21 = arith.constant 0 : index
    %27 = vector.load %arg17[%c0_20, %c0_21] : memref<16x32xf32, #tpu.memory_space<vmem>>, vector<16x32xf32>
    tpu.vector_store %arg17[%c0_20, %c0_21], %26 {strides = array<i32>} : memref<16x32xf32, #tpu.memory_space<vmem>>, vector<16x32xf32>,
    %c2 = arith.constant 2 : index
    %c0_22 = arith.constant 0 : index
    %c0_23 = arith.constant 0 : index
    %28 = vector.load %arg3[%c2, %c0_22, %c0_23] : memref<3x32x32xf32, #tpu.memory_space<vmem>>, vector<1x32x32xf32>
    %29 = vector.shape_cast %28 : vector<1x32x32xf32> to vector<32x32xf32>
    %30 = arith.truncf %7 : vector<16x32xf32> to vector<16x32xbf16>
    %31 = arith.truncf %29 : vector<32x32xf32> to vector<32x32xbf16>
    %cst_24 = arith.constant dense<0.000000e+00> : vector<16x32xf32>
    %32 = tpu.matmul %30, %31, %cst_24 {dimension_numbers = #tpu.dot_dimension_numbers<[1], [0], [0], [1], [0, 0, 1, 1], [], []>} : vector<16x32xbf16>, vector<32x32xbf16>, vector<16x32xf32> -> vector<16x32xf32>
    %c2_25 = arith.constant 2 : index
    %c0_26 = arith.constant 0 : index
    %c0_27 = arith.constant 0 : index
    %33 = vector.load %arg5[%c2_25, %c0_26, %c0_27] : memref<3x1x32xf32, #tpu.memory_space<vmem>>, vector<1x1x32xf32>
    %34 = vector.shape_cast %33 : vector<1x1x32xf32> to vector<1x32xf32>
    %35 = vector.broadcast %34 : vector<1x32xf32> to vector<16x32xf32>
    %36 = arith.addf %32, %35 : vector<16x32xf32>
    %c0_28 = arith.constant 0 : index
    %c0_29 = arith.constant 0 : index
    %37 = vector.load %arg18[%c0_28, %c0_29] : memref<16x32xf32, #tpu.memory_space<vmem>>, vector<16x32xf32>
    tpu.vector_store %arg18[%c0_28, %c0_29], %36 {strides = array<i32>} : memref<16x32xf32, #tpu.memory_space<vmem>>, vector<16x32xf32>,
    %c0_30 = arith.constant 0 : index
    %c0_31 = arith.constant 0 : index
    %c0_32 = arith.constant 0 : index
    %38 = vector.load %arg4[%c0_30, %c0_31, %c0_32] : memref<3x32x32xf32, #tpu.memory_space<vmem>>, vector<1x32x32xf32>
    %39 = vector.shape_cast %38 : vector<1x32x32xf32> to vector<32x32xf32>
    %40 = arith.truncf %39 : vector<32x32xf32> to vector<32x32xbf16>
    %c1_33 = arith.constant 1 : index
    %c0_34 = arith.constant 0 : index
    %c0_35 = arith.constant 0 : index
    %41 = vector.load %arg4[%c1_33, %c0_34, %c0_35] : memref<3x32x32xf32, #tpu.memory_space<vmem>>, vector<1x32x32xf32>
    %42 = vector.shape_cast %41 : vector<1x32x32xf32> to vector<32x32xf32>
    %43 = arith.truncf %42 : vector<32x32xf32> to vector<32x32xbf16>
    %c2_36 = arith.constant 2 : index
    %c0_37 = arith.constant 0 : index
    %c0_38 = arith.constant 0 : index
    %44 = vector.load %arg4[%c2_36, %c0_37, %c0_38] : memref<3x32x32xf32, #tpu.memory_space<vmem>>, vector<1x32x32xf32>
    %45 = vector.shape_cast %44 : vector<1x32x32xf32> to vector<32x32xf32>
    %46 = arith.truncf %45 : vector<32x32xf32> to vector<32x32xbf16>
    %c0_39 = arith.constant 0 : index
    %c0_40 = arith.constant 0 : index
    %c0_41 = arith.constant 0 : index
    %47 = vector.load %arg6[%c0_39, %c0_40, %c0_41] : memref<3x1x32xf32, #tpu.memory_space<vmem>>, vector<1x1x32xf32>
    %48 = vector.shape_cast %47 : vector<1x1x32xf32> to vector<1x32xf32>
    %c1_42 = arith.constant 1 : index
    %c0_43 = arith.constant 0 : index
    %c0_44 = arith.constant 0 : index
    %49 = vector.load %arg6[%c1_42, %c0_43, %c0_44] : memref<3x1x32xf32, #tpu.memory_space<vmem>>, vector<1x1x32xf32>
    %50 = vector.shape_cast %49 : vector<1x1x32xf32> to vector<1x32xf32>
    %c2_45 = arith.constant 2 : index
    %c0_46 = arith.constant 0 : index
    %c0_47 = arith.constant 0 : index
    %51 = vector.load %arg6[%c2_45, %c0_46, %c0_47] : memref<3x1x32xf32, #tpu.memory_space<vmem>>, vector<1x1x32xf32>
    %52 = vector.shape_cast %51 : vector<1x1x32xf32> to vector<1x32xf32>
    %cst_48 = arith.constant 0.000000e+00 : f32
    %53 = vector.broadcast %cst_48 : f32 to vector<2x32xf32>
    %c0_i32 = arith.constant 0 : i32
    %c2_i32 = arith.constant 2 : i32
    %54 = arith.muli %c0_i32, %c2_i32 : i32
    %55 = tpu.assume_multiple %54, 2 : i32
    %56 = arith.index_cast %55 : i32 to index
    %c0_49 = arith.constant 0 : index
    %57 = vector.load %arg16[%56, %c0_49] : memref<16x32xf32, #tpu.memory_space<vmem>>, vector<2x32xf32>
    %58 = arith.index_cast %55 : i32 to index
    %c0_50 = arith.constant 0 : index
    %59 = vector.load %arg17[%58, %c0_50] : memref<16x32xf32, #tpu.memory_space<vmem>>, vector<2x32xf32>
    %60 = arith.index_cast %55 : i32 to index
    %c0_51 = arith.constant 0 : index
    %61 = vector.load %arg18[%60, %c0_51] : memref<16x32xf32, #tpu.memory_space<vmem>>, vector<2x32xf32>
    %62 = arith.truncf %53 : vector<2x32xf32> to vector<2x32xbf16>
    %cst_52 = arith.constant dense<0.000000e+00> : vector<2x32xf32>
    %63 = tpu.matmul %62, %40, %cst_52 {dimension_numbers = #tpu.dot_dimension_numbers<[1], [0], [0], [1], [0, 0, 1, 1], [], []>} : vector<2x32xbf16>, vector<32x32xbf16>, vector<2x32xf32> -> vector<2x32xf32>
    %64 = vector.broadcast %48 : vector<1x32xf32> to vector<2x32xf32>
    %65 = arith.addf %63, %64 : vector<2x32xf32>
    %cst_53 = arith.constant dense<0.000000e+00> : vector<2x32xf32>
    %66 = tpu.matmul %62, %43, %cst_53 {dimension_numbers = #tpu.dot_dimension_numbers<[1], [0], [0], [1], [0, 0, 1, 1], [], []>} : vector<2x32xbf16>, vector<32x32xbf16>, vector<2x32xf32> -> vector<2x32xf32>
    %67 = vector.broadcast %50 : vector<1x32xf32> to vector<2x32xf32>
    %68 = arith.addf %66, %67 : vector<2x32xf32>
    %cst_54 = arith.constant dense<0.000000e+00> : vector<2x32xf32>
    %69 = tpu.matmul %62, %46, %cst_54 {dimension_numbers = #tpu.dot_dimension_numbers<[1], [0], [0], [1], [0, 0, 1, 1], [], []>} : vector<2x32xbf16>, vector<32x32xbf16>, vector<2x32xf32> -> vector<2x32xf32>
    %70 = vector.broadcast %52 : vector<1x32xf32> to vector<2x32xf32>
    %71 = arith.addf %69, %70 : vector<2x32xf32>
    %72 = arith.addf %57, %65 : vector<2x32xf32>
    %73 = arith.negf %72 : vector<2x32xf32>
    %74 = math.exp %73 : vector<2x32xf32>
    %cst_55 = arith.constant 1.000000e+00 : f32
    %75 = vector.broadcast %cst_55 : f32 to vector<2x32xf32>
    %76 = arith.addf %75, %74 : vector<2x32xf32>
    %77 = arith.divf %75, %76 : vector<2x32xf32>
    %78 = arith.addf %59, %68 : vector<2x32xf32>
    %79 = arith.negf %78 : vector<2x32xf32>
    %80 = math.exp %79 : vector<2x32xf32>
    %cst_56 = arith.constant 1.000000e+00 : f32
    %81 = vector.broadcast %cst_56 : f32 to vector<2x32xf32>
    %82 = arith.addf %81, %80 : vector<2x32xf32>
    %83 = arith.divf %81, %82 : vector<2x32xf32>
    %84 = arith.mulf %77, %71 : vector<2x32xf32>
    %85 = arith.addf %61, %84 : vector<2x32xf32>
    %86 = math.tanh %85 : vector<2x32xf32>
    %cst_57 = arith.constant 1.000000e+00 : f32
    %87 = vector.broadcast %cst_57 : f32 to vector<2x32xf32>
    %88 = arith.subf %87, %83 : vector<2x32xf32>
    %89 = arith.mulf %88, %86 : vector<2x32xf32>
    %90 = arith.mulf %83, %53 : vector<2x32xf32>
    %91 = arith.addf %89, %90 : vector<2x32xf32>
    %92 = arith.index_cast %55 : i32 to index
    %c0_58 = arith.constant 0 : index
    %93 = vector.load %arg19[%92, %c0_58] : memref<16x32xf32, #tpu.memory_space<vmem>>, vector<2x32xf32>
    tpu.vector_store %arg19[%92, %c0_58], %91 {strides = array<i32>} : memref<16x32xf32, #tpu.memory_space<vmem>>, vector<2x32xf32>,
    %c1_i32 = arith.constant 1 : i32
    %c2_i32_59 = arith.constant 2 : i32
    %94 = arith.muli %c1_i32, %c2_i32_59 : i32
    %95 = tpu.assume_multiple %94, 2 : i32
    %96 = arith.index_cast %95 : i32 to index
    %c0_60 = arith.constant 0 : index
    %97 = vector.load %arg16[%96, %c0_60] : memref<16x32xf32, #tpu.memory_space<vmem>>, vector<2x32xf32>
    %98 = arith.index_cast %95 : i32 to index
    %c0_61 = arith.constant 0 : index
    %99 = vector.load %arg17[%98, %c0_61] : memref<16x32xf32, #tpu.memory_space<vmem>>, vector<2x32xf32>
    %100 = arith.index_cast %95 : i32 to index
    %c0_62 = arith.constant 0 : index
    %101 = vector.load %arg18[%100, %c0_62] : memref<16x32xf32, #tpu.memory_space<vmem>>, vector<2x32xf32>
    %102 = arith.truncf %91 : vector<2x32xf32> to vector<2x32xbf16>
    %cst_63 = arith.constant dense<0.000000e+00> : vector<2x32xf32>
    %103 = tpu.matmul %102, %40, %cst_63 {dimension_numbers = #tpu.dot_dimension_numbers<[1], [0], [0], [1], [0, 0, 1, 1], [], []>} : vector<2x32xbf16>, vector<32x32xbf16>, vector<2x32xf32> -> vector<2x32xf32>
    %104 = vector.broadcast %48 : vector<1x32xf32> to vector<2x32xf32>
    %105 = arith.addf %103, %104 : vector<2x32xf32>
    %cst_64 = arith.constant dense<0.000000e+00> : vector<2x32xf32>
    %106 = tpu.matmul %102, %43, %cst_64 {dimension_numbers = #tpu.dot_dimension_numbers<[1], [0], [0], [1], [0, 0, 1, 1], [], []>} : vector<2x32xbf16>, vector<32x32xbf16>, vector<2x32xf32> -> vector<2x32xf32>
    %107 = vector.broadcast %50 : vector<1x32xf32> to vector<2x32xf32>
    %108 = arith.addf %106, %107 : vector<2x32xf32>
    %cst_65 = arith.constant dense<0.000000e+00> : vector<2x32xf32>
    %109 = tpu.matmul %102, %46, %cst_65 {dimension_numbers = #tpu.dot_dimension_numbers<[1], [0], [0], [1], [0, 0, 1, 1], [], []>} : vector<2x32xbf16>, vector<32x32xbf16>, vector<2x32xf32> -> vector<2x32xf32>
    %110 = vector.broadcast %52 : vector<1x32xf32> to vector<2x32xf32>
    %111 = arith.addf %109, %110 : vector<2x32xf32>
    %112 = arith.addf %97, %105 : vector<2x32xf32>
    %113 = arith.negf %112 : vector<2x32xf32>
    %114 = math.exp %113 : vector<2x32xf32>
    %cst_66 = arith.constant 1.000000e+00 : f32
    %115 = vector.broadcast %cst_66 : f32 to vector<2x32xf32>
    %116 = arith.addf %115, %114 : vector<2x32xf32>
    %117 = arith.divf %115, %116 : vector<2x32xf32>
    %118 = arith.addf %99, %108 : vector<2x32xf32>
    %119 = arith.negf %118 : vector<2x32xf32>
    %120 = math.exp %119 : vector<2x32xf32>
    %cst_67 = arith.constant 1.000000e+00 : f32
    %121 = vector.broadcast %cst_67 : f32 to vector<2x32xf32>
    %122 = arith.addf %121, %120 : vector<2x32xf32>
    %123 = arith.divf %121, %122 : vector<2x32xf32>
    %124 = arith.mulf %117, %111 : vector<2x32xf32>
    %125 = arith.addf %101, %124 : vector<2x32xf32>
    %126 = math.tanh %125 : vector<2x32xf32>
    %cst_68 = arith.constant 1.000000e+00 : f32
    %127 = vector.broadcast %cst_68 : f32 to vector<2x32xf32>
    %128 = arith.subf %127, %123 : vector<2x32xf32>
    %129 = arith.mulf %128, %126 : vector<2x32xf32>
    %130 = arith.mulf %123, %91 : vector<2x32xf32>
    %131 = arith.addf %129, %130 : vector<2x32xf32>
    %132 = arith.index_cast %95 : i32 to index
    %c0_69 = arith.constant 0 : index
    %133 = vector.load %arg19[%132, %c0_69] : memref<16x32xf32, #tpu.memory_space<vmem>>, vector<2x32xf32>
    tpu.vector_store %arg19[%132, %c0_69], %131 {strides = array<i32>} : memref<16x32xf32, #tpu.memory_space<vmem>>, vector<2x32xf32>,
    %c2_i32_70 = arith.constant 2 : i32
    %c2_i32_71 = arith.constant 2 : i32
    %134 = arith.muli %c2_i32_70, %c2_i32_71 : i32
    %135 = tpu.assume_multiple %134, 2 : i32
    %136 = arith.index_cast %135 : i32 to index
    %c0_72 = arith.constant 0 : index
    %137 = vector.load %arg16[%136, %c0_72] : memref<16x32xf32, #tpu.memory_space<vmem>>, vector<2x32xf32>
    %138 = arith.index_cast %135 : i32 to index
    %c0_73 = arith.constant 0 : index
    %139 = vector.load %arg17[%138, %c0_73] : memref<16x32xf32, #tpu.memory_space<vmem>>, vector<2x32xf32>
    %140 = arith.index_cast %135 : i32 to index
    %c0_74 = arith.constant 0 : index
    %141 = vector.load %arg18[%140, %c0_74] : memref<16x32xf32, #tpu.memory_space<vmem>>, vector<2x32xf32>
    %142 = arith.truncf %131 : vector<2x32xf32> to vector<2x32xbf16>
    %cst_75 = arith.constant dense<0.000000e+00> : vector<2x32xf32>
    %143 = tpu.matmul %142, %40, %cst_75 {dimension_numbers = #tpu.dot_dimension_numbers<[1], [0], [0], [1], [0, 0, 1, 1], [], []>} : vector<2x32xbf16>, vector<32x32xbf16>, vector<2x32xf32> -> vector<2x32xf32>
    %144 = vector.broadcast %48 : vector<1x32xf32> to vector<2x32xf32>
    %145 = arith.addf %143, %144 : vector<2x32xf32>
    %cst_76 = arith.constant dense<0.000000e+00> : vector<2x32xf32>
    %146 = tpu.matmul %142, %43, %cst_76 {dimension_numbers = #tpu.dot_dimension_numbers<[1], [0], [0], [1], [0, 0, 1, 1], [], []>} : vector<2x32xbf16>, vector<32x32xbf16>, vector<2x32xf32> -> vector<2x32xf32>
    %147 = vector.broadcast %50 : vector<1x32xf32> to vector<2x32xf32>
    %148 = arith.addf %146, %147 : vector<2x32xf32>
    %cst_77 = arith.constant dense<0.000000e+00> : vector<2x32xf32>
    %149 = tpu.matmul %142, %46, %cst_77 {dimension_numbers = #tpu.dot_dimension_numbers<[1], [0], [0], [1], [0, 0, 1, 1], [], []>} : vector<2x32xbf16>, vector<32x32xbf16>, vector<2x32xf32> -> vector<2x32xf32>
    %150 = vector.broadcast %52 : vector<1x32xf32> to vector<2x32xf32>
    %151 = arith.addf %149, %150 : vector<2x32xf32>
    %152 = arith.addf %137, %145 : vector<2x32xf32>
    %153 = arith.negf %152 : vector<2x32xf32>
    %154 = math.exp %153 : vector<2x32xf32>
    %cst_78 = arith.constant 1.000000e+00 : f32
    %155 = vector.broadcast %cst_78 : f32 to vector<2x32xf32>
    %156 = arith.addf %155, %154 : vector<2x32xf32>
    %157 = arith.divf %155, %156 : vector<2x32xf32>
    %158 = arith.addf %139, %148 : vector<2x32xf32>
    %159 = arith.negf %158 : vector<2x32xf32>
    %160 = math.exp %159 : vector<2x32xf32>
    %cst_79 = arith.constant 1.000000e+00 : f32
    %161 = vector.broadcast %cst_79 : f32 to vector<2x32xf32>
    %162 = arith.addf %161, %160 : vector<2x32xf32>
    %163 = arith.divf %161, %162 : vector<2x32xf32>
    %164 = arith.mulf %157, %151 : vector<2x32xf32>
    %165 = arith.addf %141, %164 : vector<2x32xf32>
    %166 = math.tanh %165 : vector<2x32xf32>
    %cst_80 = arith.constant 1.000000e+00 : f32
    %167 = vector.broadcast %cst_80 : f32 to vector<2x32xf32>
    %168 = arith.subf %167, %163 : vector<2x32xf32>
    %169 = arith.mulf %168, %166 : vector<2x32xf32>
    %170 = arith.mulf %163, %131 : vector<2x32xf32>
    %171 = arith.addf %169, %170 : vector<2x32xf32>
    %172 = arith.index_cast %135 : i32 to index
    %c0_81 = arith.constant 0 : index
    %173 = vector.load %arg19[%172, %c0_81] : memref<16x32xf32, #tpu.memory_space<vmem>>, vector<2x32xf32>
    tpu.vector_store %arg19[%172, %c0_81], %171 {strides = array<i32>} : memref<16x32xf32, #tpu.memory_space<vmem>>, vector<2x32xf32>,
    %c3_i32 = arith.constant 3 : i32
    %c2_i32_82 = arith.constant 2 : i32
    %174 = arith.muli %c3_i32, %c2_i32_82 : i32
    %175 = tpu.assume_multiple %174, 2 : i32
    %176 = arith.index_cast %175 : i32 to index
    %c0_83 = arith.constant 0 : index
    %177 = vector.load %arg16[%176, %c0_83] : memref<16x32xf32, #tpu.memory_space<vmem>>, vector<2x32xf32>
    %178 = arith.index_cast %175 : i32 to index
    %c0_84 = arith.constant 0 : index
    %179 = vector.load %arg17[%178, %c0_84] : memref<16x32xf32, #tpu.memory_space<vmem>>, vector<2x32xf32>
    %180 = arith.index_cast %175 : i32 to index
    %c0_85 = arith.constant 0 : index
    %181 = vector.load %arg18[%180, %c0_85] : memref<16x32xf32, #tpu.memory_space<vmem>>, vector<2x32xf32>
    %182 = arith.truncf %171 : vector<2x32xf32> to vector<2x32xbf16>
    %cst_86 = arith.constant dense<0.000000e+00> : vector<2x32xf32>
    %183 = tpu.matmul %182, %40, %cst_86 {dimension_numbers = #tpu.dot_dimension_numbers<[1], [0], [0], [1], [0, 0, 1, 1], [], []>} : vector<2x32xbf16>, vector<32x32xbf16>, vector<2x32xf32> -> vector<2x32xf32>
    %184 = vector.broadcast %48 : vector<1x32xf32> to vector<2x32xf32>
    %185 = arith.addf %183, %184 : vector<2x32xf32>
    %cst_87 = arith.constant dense<0.000000e+00> : vector<2x32xf32>
    %186 = tpu.matmul %182, %43, %cst_87 {dimension_numbers = #tpu.dot_dimension_numbers<[1], [0], [0], [1], [0, 0, 1, 1], [], []>} : vector<2x32xbf16>, vector<32x32xbf16>, vector<2x32xf32> -> vector<2x32xf32>
    %187 = vector.broadcast %50 : vector<1x32xf32> to vector<2x32xf32>
    %188 = arith.addf %186, %187 : vector<2x32xf32>
    %cst_88 = arith.constant dense<0.000000e+00> : vector<2x32xf32>
    %189 = tpu.matmul %182, %46, %cst_88 {dimension_numbers = #tpu.dot_dimension_numbers<[1], [0], [0], [1], [0, 0, 1, 1], [], []>} : vector<2x32xbf16>, vector<32x32xbf16>, vector<2x32xf32> -> vector<2x32xf32>
    %190 = vector.broadcast %52 : vector<1x32xf32> to vector<2x32xf32>
    %191 = arith.addf %189, %190 : vector<2x32xf32>
    %192 = arith.addf %177, %185 : vector<2x32xf32>
    %193 = arith.negf %192 : vector<2x32xf32>
    %194 = math.exp %193 : vector<2x32xf32>
    %cst_89 = arith.constant 1.000000e+00 : f32
    %195 = vector.broadcast %cst_89 : f32 to vector<2x32xf32>
    %196 = arith.addf %195, %194 : vector<2x32xf32>
    %197 = arith.divf %195, %196 : vector<2x32xf32>
    %198 = arith.addf %179, %188 : vector<2x32xf32>
    %199 = arith.negf %198 : vector<2x32xf32>
    %200 = math.exp %199 : vector<2x32xf32>
    %cst_90 = arith.constant 1.000000e+00 : f32
    %201 = vector.broadcast %cst_90 : f32 to vector<2x32xf32>
    %202 = arith.addf %201, %200 : vector<2x32xf32>
    %203 = arith.divf %201, %202 : vector<2x32xf32>
    %204 = arith.mulf %197, %191 : vector<2x32xf32>
    %205 = arith.addf %181, %204 : vector<2x32xf32>
    %206 = math.tanh %205 : vector<2x32xf32>
    %cst_91 = arith.constant 1.000000e+00 : f32
    %207 = vector.broadcast %cst_91 : f32 to vector<2x32xf32>
    %208 = arith.subf %207, %203 : vector<2x32xf32>
    %209 = arith.mulf %208, %206 : vector<2x32xf32>
    %210 = arith.mulf %203, %171 : vector<2x32xf32>
    %211 = arith.addf %209, %210 : vector<2x32xf32>
    %212 = arith.index_cast %175 : i32 to index
    %c0_92 = arith.constant 0 : index
    %213 = vector.load %arg19[%212, %c0_92] : memref<16x32xf32, #tpu.memory_space<vmem>>, vector<2x32xf32>
    tpu.vector_store %arg19[%212, %c0_92], %211 {strides = array<i32>} : memref<16x32xf32, #tpu.memory_space<vmem>>, vector<2x32xf32>,
    %c4_i32 = arith.constant 4 : i32
    %c2_i32_93 = arith.constant 2 : i32
    %214 = arith.muli %c4_i32, %c2_i32_93 : i32
    %215 = tpu.assume_multiple %214, 2 : i32
    %216 = arith.index_cast %215 : i32 to index
    %c0_94 = arith.constant 0 : index
    %217 = vector.load %arg16[%216, %c0_94] : memref<16x32xf32, #tpu.memory_space<vmem>>, vector<2x32xf32>
    %218 = arith.index_cast %215 : i32 to index
    %c0_95 = arith.constant 0 : index
    %219 = vector.load %arg17[%218, %c0_95] : memref<16x32xf32, #tpu.memory_space<vmem>>, vector<2x32xf32>
    %220 = arith.index_cast %215 : i32 to index
    %c0_96 = arith.constant 0 : index
    %221 = vector.load %arg18[%220, %c0_96] : memref<16x32xf32, #tpu.memory_space<vmem>>, vector<2x32xf32>
    %222 = arith.truncf %211 : vector<2x32xf32> to vector<2x32xbf16>
    %cst_97 = arith.constant dense<0.000000e+00> : vector<2x32xf32>
    %223 = tpu.matmul %222, %40, %cst_97 {dimension_numbers = #tpu.dot_dimension_numbers<[1], [0], [0], [1], [0, 0, 1, 1], [], []>} : vector<2x32xbf16>, vector<32x32xbf16>, vector<2x32xf32> -> vector<2x32xf32>
    %224 = vector.broadcast %48 : vector<1x32xf32> to vector<2x32xf32>
    %225 = arith.addf %223, %224 : vector<2x32xf32>
    %cst_98 = arith.constant dense<0.000000e+00> : vector<2x32xf32>
    %226 = tpu.matmul %222, %43, %cst_98 {dimension_numbers = #tpu.dot_dimension_numbers<[1], [0], [0], [1], [0, 0, 1, 1], [], []>} : vector<2x32xbf16>, vector<32x32xbf16>, vector<2x32xf32> -> vector<2x32xf32>
    %227 = vector.broadcast %50 : vector<1x32xf32> to vector<2x32xf32>
    %228 = arith.addf %226, %227 : vector<2x32xf32>
    %cst_99 = arith.constant dense<0.000000e+00> : vector<2x32xf32>
    %229 = tpu.matmul %222, %46, %cst_99 {dimension_numbers = #tpu.dot_dimension_numbers<[1], [0], [0], [1], [0, 0, 1, 1], [], []>} : vector<2x32xbf16>, vector<32x32xbf16>, vector<2x32xf32> -> vector<2x32xf32>
    %230 = vector.broadcast %52 : vector<1x32xf32> to vector<2x32xf32>
    %231 = arith.addf %229, %230 : vector<2x32xf32>
    %232 = arith.addf %217, %225 : vector<2x32xf32>
    %233 = arith.negf %232 : vector<2x32xf32>
    %234 = math.exp %233 : vector<2x32xf32>
    %cst_100 = arith.constant 1.000000e+00 : f32
    %235 = vector.broadcast %cst_100 : f32 to vector<2x32xf32>
    %236 = arith.addf %235, %234 : vector<2x32xf32>
    %237 = arith.divf %235, %236 : vector<2x32xf32>
    %238 = arith.addf %219, %228 : vector<2x32xf32>
    %239 = arith.negf %238 : vector<2x32xf32>
    %240 = math.exp %239 : vector<2x32xf32>
    %cst_101 = arith.constant 1.000000e+00 : f32
    %241 = vector.broadcast %cst_101 : f32 to vector<2x32xf32>
    %242 = arith.addf %241, %240 : vector<2x32xf32>
    %243 = arith.divf %241, %242 : vector<2x32xf32>
    %244 = arith.mulf %237, %231 : vector<2x32xf32>
    %245 = arith.addf %221, %244 : vector<2x32xf32>
    %246 = math.tanh %245 : vector<2x32xf32>
    %cst_102 = arith.constant 1.000000e+00 : f32
    %247 = vector.broadcast %cst_102 : f32 to vector<2x32xf32>
    %248 = arith.subf %247, %243 : vector<2x32xf32>
    %249 = arith.mulf %248, %246 : vector<2x32xf32>
    %250 = arith.mulf %243, %211 : vector<2x32xf32>
    %251 = arith.addf %249, %250 : vector<2x32xf32>
    %252 = arith.index_cast %215 : i32 to index
    %c0_103 = arith.constant 0 : index
    %253 = vector.load %arg19[%252, %c0_103] : memref<16x32xf32, #tpu.memory_space<vmem>>, vector<2x32xf32>
    tpu.vector_store %arg19[%252, %c0_103], %251 {strides = array<i32>} : memref<16x32xf32, #tpu.memory_space<vmem>>, vector<2x32xf32>,
    %c5_i32 = arith.constant 5 : i32
    %c2_i32_104 = arith.constant 2 : i32
    %254 = arith.muli %c5_i32, %c2_i32_104 : i32
    %255 = tpu.assume_multiple %254, 2 : i32
    %256 = arith.index_cast %255 : i32 to index
    %c0_105 = arith.constant 0 : index
    %257 = vector.load %arg16[%256, %c0_105] : memref<16x32xf32, #tpu.memory_space<vmem>>, vector<2x32xf32>
    %258 = arith.index_cast %255 : i32 to index
    %c0_106 = arith.constant 0 : index
    %259 = vector.load %arg17[%258, %c0_106] : memref<16x32xf32, #tpu.memory_space<vmem>>, vector<2x32xf32>
    %260 = arith.index_cast %255 : i32 to index
    %c0_107 = arith.constant 0 : index
    %261 = vector.load %arg18[%260, %c0_107] : memref<16x32xf32, #tpu.memory_space<vmem>>, vector<2x32xf32>
    %262 = arith.truncf %251 : vector<2x32xf32> to vector<2x32xbf16>
    %cst_108 = arith.constant dense<0.000000e+00> : vector<2x32xf32>
    %263 = tpu.matmul %262, %40, %cst_108 {dimension_numbers = #tpu.dot_dimension_numbers<[1], [0], [0], [1], [0, 0, 1, 1], [], []>} : vector<2x32xbf16>, vector<32x32xbf16>, vector<2x32xf32> -> vector<2x32xf32>
    %264 = vector.broadcast %48 : vector<1x32xf32> to vector<2x32xf32>
    %265 = arith.addf %263, %264 : vector<2x32xf32>
    %cst_109 = arith.constant dense<0.000000e+00> : vector<2x32xf32>
    %266 = tpu.matmul %262, %43, %cst_109 {dimension_numbers = #tpu.dot_dimension_numbers<[1], [0], [0], [1], [0, 0, 1, 1], [], []>} : vector<2x32xbf16>, vector<32x32xbf16>, vector<2x32xf32> -> vector<2x32xf32>
    %267 = vector.broadcast %50 : vector<1x32xf32> to vector<2x32xf32>
    %268 = arith.addf %266, %267 : vector<2x32xf32>
    %cst_110 = arith.constant dense<0.000000e+00> : vector<2x32xf32>
    %269 = tpu.matmul %262, %46, %cst_110 {dimension_numbers = #tpu.dot_dimension_numbers<[1], [0], [0], [1], [0, 0, 1, 1], [], []>} : vector<2x32xbf16>, vector<32x32xbf16>, vector<2x32xf32> -> vector<2x32xf32>
    %270 = vector.broadcast %52 : vector<1x32xf32> to vector<2x32xf32>
    %271 = arith.addf %269, %270 : vector<2x32xf32>
    %272 = arith.addf %257, %265 : vector<2x32xf32>
    %273 = arith.negf %272 : vector<2x32xf32>
    %274 = math.exp %273 : vector<2x32xf32>
    %cst_111 = arith.constant 1.000000e+00 : f32
    %275 = vector.broadcast %cst_111 : f32 to vector<2x32xf32>
    %276 = arith.addf %275, %274 : vector<2x32xf32>
    %277 = arith.divf %275, %276 : vector<2x32xf32>
    %278 = arith.addf %259, %268 : vector<2x32xf32>
    %279 = arith.negf %278 : vector<2x32xf32>
    %280 = math.exp %279 : vector<2x32xf32>
    %cst_112 = arith.constant 1.000000e+00 : f32
    %281 = vector.broadcast %cst_112 : f32 to vector<2x32xf32>
    %282 = arith.addf %281, %280 : vector<2x32xf32>
    %283 = arith.divf %281, %282 : vector<2x32xf32>
    %284 = arith.mulf %277, %271 : vector<2x32xf32>
    %285 = arith.addf %261, %284 : vector<2x32xf32>
    %286 = math.tanh %285 : vector<2x32xf32>
    %cst_113 = arith.constant 1.000000e+00 : f32
    %287 = vector.broadcast %cst_113 : f32 to vector<2x32xf32>
    %288 = arith.subf %287, %283 : vector<2x32xf32>
    %289 = arith.mulf %288, %286 : vector<2x32xf32>
    %290 = arith.mulf %283, %251 : vector<2x32xf32>
    %291 = arith.addf %289, %290 : vector<2x32xf32>
    %292 = arith.index_cast %255 : i32 to index
    %c0_114 = arith.constant 0 : index
    %293 = vector.load %arg19[%292, %c0_114] : memref<16x32xf32, #tpu.memory_space<vmem>>, vector<2x32xf32>
    tpu.vector_store %arg19[%292, %c0_114], %291 {strides = array<i32>} : memref<16x32xf32, #tpu.memory_space<vmem>>, vector<2x32xf32>,
    %c6_i32 = arith.constant 6 : i32
    %c2_i32_115 = arith.constant 2 : i32
    %294 = arith.muli %c6_i32, %c2_i32_115 : i32
    %295 = tpu.assume_multiple %294, 2 : i32
    %296 = arith.index_cast %295 : i32 to index
    %c0_116 = arith.constant 0 : index
    %297 = vector.load %arg16[%296, %c0_116] : memref<16x32xf32, #tpu.memory_space<vmem>>, vector<2x32xf32>
    %298 = arith.index_cast %295 : i32 to index
    %c0_117 = arith.constant 0 : index
    %299 = vector.load %arg17[%298, %c0_117] : memref<16x32xf32, #tpu.memory_space<vmem>>, vector<2x32xf32>
    %300 = arith.index_cast %295 : i32 to index
    %c0_118 = arith.constant 0 : index
    %301 = vector.load %arg18[%300, %c0_118] : memref<16x32xf32, #tpu.memory_space<vmem>>, vector<2x32xf32>
    %302 = arith.truncf %291 : vector<2x32xf32> to vector<2x32xbf16>
    %cst_119 = arith.constant dense<0.000000e+00> : vector<2x32xf32>
    %303 = tpu.matmul %302, %40, %cst_119 {dimension_numbers = #tpu.dot_dimension_numbers<[1], [0], [0], [1], [0, 0, 1, 1], [], []>} : vector<2x32xbf16>, vector<32x32xbf16>, vector<2x32xf32> -> vector<2x32xf32>
    %304 = vector.broadcast %48 : vector<1x32xf32> to vector<2x32xf32>
    %305 = arith.addf %303, %304 : vector<2x32xf32>
    %cst_120 = arith.constant dense<0.000000e+00> : vector<2x32xf32>
    %306 = tpu.matmul %302, %43, %cst_120 {dimension_numbers = #tpu.dot_dimension_numbers<[1], [0], [0], [1], [0, 0, 1, 1], [], []>} : vector<2x32xbf16>, vector<32x32xbf16>, vector<2x32xf32> -> vector<2x32xf32>
    %307 = vector.broadcast %50 : vector<1x32xf32> to vector<2x32xf32>
    %308 = arith.addf %306, %307 : vector<2x32xf32>
    %cst_121 = arith.constant dense<0.000000e+00> : vector<2x32xf32>
    %309 = tpu.matmul %302, %46, %cst_121 {dimension_numbers = #tpu.dot_dimension_numbers<[1], [0], [0], [1], [0, 0, 1, 1], [], []>} : vector<2x32xbf16>, vector<32x32xbf16>, vector<2x32xf32> -> vector<2x32xf32>
    %310 = vector.broadcast %52 : vector<1x32xf32> to vector<2x32xf32>
    %311 = arith.addf %309, %310 : vector<2x32xf32>
    %312 = arith.addf %297, %305 : vector<2x32xf32>
    %313 = arith.negf %312 : vector<2x32xf32>
    %314 = math.exp %313 : vector<2x32xf32>
    %cst_122 = arith.constant 1.000000e+00 : f32
    %315 = vector.broadcast %cst_122 : f32 to vector<2x32xf32>
    %316 = arith.addf %315, %314 : vector<2x32xf32>
    %317 = arith.divf %315, %316 : vector<2x32xf32>
    %318 = arith.addf %299, %308 : vector<2x32xf32>
    %319 = arith.negf %318 : vector<2x32xf32>
    %320 = math.exp %319 : vector<2x32xf32>
    %cst_123 = arith.constant 1.000000e+00 : f32
    %321 = vector.broadcast %cst_123 : f32 to vector<2x32xf32>
    %322 = arith.addf %321, %320 : vector<2x32xf32>
    %323 = arith.divf %321, %322 : vector<2x32xf32>
    %324 = arith.mulf %317, %311 : vector<2x32xf32>
    %325 = arith.addf %301, %324 : vector<2x32xf32>
    %326 = math.tanh %325 : vector<2x32xf32>
    %cst_124 = arith.constant 1.000000e+00 : f32
    %327 = vector.broadcast %cst_124 : f32 to vector<2x32xf32>
    %328 = arith.subf %327, %323 : vector<2x32xf32>
    %329 = arith.mulf %328, %326 : vector<2x32xf32>
    %330 = arith.mulf %323, %291 : vector<2x32xf32>
    %331 = arith.addf %329, %330 : vector<2x32xf32>
    %332 = arith.index_cast %295 : i32 to index
    %c0_125 = arith.constant 0 : index
    %333 = vector.load %arg19[%332, %c0_125] : memref<16x32xf32, #tpu.memory_space<vmem>>, vector<2x32xf32>
    tpu.vector_store %arg19[%332, %c0_125], %331 {strides = array<i32>} : memref<16x32xf32, #tpu.memory_space<vmem>>, vector<2x32xf32>,
    %c7_i32 = arith.constant 7 : i32
    %c2_i32_126 = arith.constant 2 : i32
    %334 = arith.muli %c7_i32, %c2_i32_126 : i32
    %335 = tpu.assume_multiple %334, 2 : i32
    %336 = arith.index_cast %335 : i32 to index
    %c0_127 = arith.constant 0 : index
    %337 = vector.load %arg16[%336, %c0_127] : memref<16x32xf32, #tpu.memory_space<vmem>>, vector<2x32xf32>
    %338 = arith.index_cast %335 : i32 to index
    %c0_128 = arith.constant 0 : index
    %339 = vector.load %arg17[%338, %c0_128] : memref<16x32xf32, #tpu.memory_space<vmem>>, vector<2x32xf32>
    %340 = arith.index_cast %335 : i32 to index
    %c0_129 = arith.constant 0 : index
    %341 = vector.load %arg18[%340, %c0_129] : memref<16x32xf32, #tpu.memory_space<vmem>>, vector<2x32xf32>
    %342 = arith.truncf %331 : vector<2x32xf32> to vector<2x32xbf16>
    %cst_130 = arith.constant dense<0.000000e+00> : vector<2x32xf32>
    %343 = tpu.matmul %342, %40, %cst_130 {dimension_numbers = #tpu.dot_dimension_numbers<[1], [0], [0], [1], [0, 0, 1, 1], [], []>} : vector<2x32xbf16>, vector<32x32xbf16>, vector<2x32xf32> -> vector<2x32xf32>
    %344 = vector.broadcast %48 : vector<1x32xf32> to vector<2x32xf32>
    %345 = arith.addf %343, %344 : vector<2x32xf32>
    %cst_131 = arith.constant dense<0.000000e+00> : vector<2x32xf32>
    %346 = tpu.matmul %342, %43, %cst_131 {dimension_numbers = #tpu.dot_dimension_numbers<[1], [0], [0], [1], [0, 0, 1, 1], [], []>} : vector<2x32xbf16>, vector<32x32xbf16>, vector<2x32xf32> -> vector<2x32xf32>
    %347 = vector.broadcast %50 : vector<1x32xf32> to vector<2x32xf32>
    %348 = arith.addf %346, %347 : vector<2x32xf32>
    %cst_132 = arith.constant dense<0.000000e+00> : vector<2x32xf32>
    %349 = tpu.matmul %342, %46, %cst_132 {dimension_numbers = #tpu.dot_dimension_numbers<[1], [0], [0], [1], [0, 0, 1, 1], [], []>} : vector<2x32xbf16>, vector<32x32xbf16>, vector<2x32xf32> -> vector<2x32xf32>
    %350 = vector.broadcast %52 : vector<1x32xf32> to vector<2x32xf32>
    %351 = arith.addf %349, %350 : vector<2x32xf32>
    %352 = arith.addf %337, %345 : vector<2x32xf32>
    %353 = arith.negf %352 : vector<2x32xf32>
    %354 = math.exp %353 : vector<2x32xf32>
    %cst_133 = arith.constant 1.000000e+00 : f32
    %355 = vector.broadcast %cst_133 : f32 to vector<2x32xf32>
    %356 = arith.addf %355, %354 : vector<2x32xf32>
    %357 = arith.divf %355, %356 : vector<2x32xf32>
    %358 = arith.addf %339, %348 : vector<2x32xf32>
    %359 = arith.negf %358 : vector<2x32xf32>
    %360 = math.exp %359 : vector<2x32xf32>
    %cst_134 = arith.constant 1.000000e+00 : f32
    %361 = vector.broadcast %cst_134 : f32 to vector<2x32xf32>
    %362 = arith.addf %361, %360 : vector<2x32xf32>
    %363 = arith.divf %361, %362 : vector<2x32xf32>
    %364 = arith.mulf %357, %351 : vector<2x32xf32>
    %365 = arith.addf %341, %364 : vector<2x32xf32>
    %366 = math.tanh %365 : vector<2x32xf32>
    %cst_135 = arith.constant 1.000000e+00 : f32
    %367 = vector.broadcast %cst_135 : f32 to vector<2x32xf32>
    %368 = arith.subf %367, %363 : vector<2x32xf32>
    %369 = arith.mulf %368, %366 : vector<2x32xf32>
    %370 = arith.mulf %363, %331 : vector<2x32xf32>
    %371 = arith.addf %369, %370 : vector<2x32xf32>
    %372 = arith.index_cast %335 : i32 to index
    %c0_136 = arith.constant 0 : index
    %373 = vector.load %arg19[%372, %c0_136] : memref<16x32xf32, #tpu.memory_space<vmem>>, vector<2x32xf32>
    tpu.vector_store %arg19[%372, %c0_136], %371 {strides = array<i32>} : memref<16x32xf32, #tpu.memory_space<vmem>>, vector<2x32xf32>,
    %c8_i32 = arith.constant 8 : i32
    %c0_137 = arith.constant 0 : index
    %c0_138 = arith.constant 0 : index
    %374 = vector.load %arg19[%c0_137, %c0_138] : memref<16x32xf32, #tpu.memory_space<vmem>>, vector<16x32xf32>
    %c0_139 = arith.constant 0 : index
    %c0_140 = arith.constant 0 : index
    %c0_141 = arith.constant 0 : index
    %375 = vector.load %arg7[%c0_139, %c0_140, %c0_141] : memref<3x32x32xf32, #tpu.memory_space<vmem>>, vector<1x32x32xf32>
    %376 = vector.shape_cast %375 : vector<1x32x32xf32> to vector<32x32xf32>
    %377 = arith.truncf %374 : vector<16x32xf32> to vector<16x32xbf16>
    %378 = arith.truncf %376 : vector<32x32xf32> to vector<32x32xbf16>
    %cst_142 = arith.constant dense<0.000000e+00> : vector<16x32xf32>
    %379 = tpu.matmul %377, %378, %cst_142 {dimension_numbers = #tpu.dot_dimension_numbers<[1], [0], [0], [1], [0, 0, 1, 1], [], []>} : vector<16x32xbf16>, vector<32x32xbf16>, vector<16x32xf32> -> vector<16x32xf32>
    %c0_143 = arith.constant 0 : index
    %c0_144 = arith.constant 0 : index
    %c0_145 = arith.constant 0 : index
    %380 = vector.load %arg9[%c0_143, %c0_144, %c0_145] : memref<3x1x32xf32, #tpu.memory_space<vmem>>, vector<1x1x32xf32>
    %381 = vector.shape_cast %380 : vector<1x1x32xf32> to vector<1x32xf32>
    %382 = vector.broadcast %381 : vector<1x32xf32> to vector<16x32xf32>
    %383 = arith.addf %379, %382 : vector<16x32xf32>
    %c0_146 = arith.constant 0 : index
    %c0_147 = arith.constant 0 : index
    %384 = vector.load %arg16[%c0_146, %c0_147] : memref<16x32xf32, #tpu.memory_space<vmem>>, vector<16x32xf32>
    tpu.vector_store %arg16[%c0_146, %c0_147], %383 {strides = array<i32>} : memref<16x32xf32, #tpu.memory_space<vmem>>, vector<16x32xf32>,
    %c1_148 = arith.constant 1 : index
    %c0_149 = arith.constant 0 : index
    %c0_150 = arith.constant 0 : index
    %385 = vector.load %arg7[%c1_148, %c0_149, %c0_150] : memref<3x32x32xf32, #tpu.memory_space<vmem>>, vector<1x32x32xf32>
    %386 = vector.shape_cast %385 : vector<1x32x32xf32> to vector<32x32xf32>
    %387 = arith.truncf %374 : vector<16x32xf32> to vector<16x32xbf16>
    %388 = arith.truncf %386 : vector<32x32xf32> to vector<32x32xbf16>
    %cst_151 = arith.constant dense<0.000000e+00> : vector<16x32xf32>
    %389 = tpu.matmul %387, %388, %cst_151 {dimension_numbers = #tpu.dot_dimension_numbers<[1], [0], [0], [1], [0, 0, 1, 1], [], []>} : vector<16x32xbf16>, vector<32x32xbf16>, vector<16x32xf32> -> vector<16x32xf32>
    %c1_152 = arith.constant 1 : index
    %c0_153 = arith.constant 0 : index
    %c0_154 = arith.constant 0 : index
    %390 = vector.load %arg9[%c1_152, %c0_153, %c0_154] : memref<3x1x32xf32, #tpu.memory_space<vmem>>, vector<1x1x32xf32>
    %391 = vector.shape_cast %390 : vector<1x1x32xf32> to vector<1x32xf32>
    %392 = vector.broadcast %391 : vector<1x32xf32> to vector<16x32xf32>
    %393 = arith.addf %389, %392 : vector<16x32xf32>
    %c0_155 = arith.constant 0 : index
    %c0_156 = arith.constant 0 : index
    %394 = vector.load %arg17[%c0_155, %c0_156] : memref<16x32xf32, #tpu.memory_space<vmem>>, vector<16x32xf32>
    tpu.vector_store %arg17[%c0_155, %c0_156], %393 {strides = array<i32>} : memref<16x32xf32, #tpu.memory_space<vmem>>, vector<16x32xf32>,
    %c2_157 = arith.constant 2 : index
    %c0_158 = arith.constant 0 : index
    %c0_159 = arith.constant 0 : index
    %395 = vector.load %arg7[%c2_157, %c0_158, %c0_159] : memref<3x32x32xf32, #tpu.memory_space<vmem>>, vector<1x32x32xf32>
    %396 = vector.shape_cast %395 : vector<1x32x32xf32> to vector<32x32xf32>
    %397 = arith.truncf %374 : vector<16x32xf32> to vector<16x32xbf16>
    %398 = arith.truncf %396 : vector<32x32xf32> to vector<32x32xbf16>
    %cst_160 = arith.constant dense<0.000000e+00> : vector<16x32xf32>
    %399 = tpu.matmul %397, %398, %cst_160 {dimension_numbers = #tpu.dot_dimension_numbers<[1], [0], [0], [1], [0, 0, 1, 1], [], []>} : vector<16x32xbf16>, vector<32x32xbf16>, vector<16x32xf32> -> vector<16x32xf32>
    %c2_161 = arith.constant 2 : index
    %c0_162 = arith.constant 0 : index
    %c0_163 = arith.constant 0 : index
    %400 = vector.load %arg9[%c2_161, %c0_162, %c0_163] : memref<3x1x32xf32, #tpu.memory_space<vmem>>, vector<1x1x32xf32>
    %401 = vector.shape_cast %400 : vector<1x1x32xf32> to vector<1x32xf32>
    %402 = vector.broadcast %401 : vector<1x32xf32> to vector<16x32xf32>
    %403 = arith.addf %399, %402 : vector<16x32xf32>
    %c0_164 = arith.constant 0 : index
    %c0_165 = arith.constant 0 : index
    %404 = vector.load %arg18[%c0_164, %c0_165] : memref<16x32xf32, #tpu.memory_space<vmem>>, vector<16x32xf32>
    tpu.vector_store %arg18[%c0_164, %c0_165], %403 {strides = array<i32>} : memref<16x32xf32, #tpu.memory_space<vmem>>, vector<16x32xf32>,
    %c0_166 = arith.constant 0 : index
    %c0_167 = arith.constant 0 : index
    %c0_168 = arith.constant 0 : index
    %405 = vector.load %arg8[%c0_166, %c0_167, %c0_168] : memref<3x32x32xf32, #tpu.memory_space<vmem>>, vector<1x32x32xf32>
    %406 = vector.shape_cast %405 : vector<1x32x32xf32> to vector<32x32xf32>
    %407 = arith.truncf %406 : vector<32x32xf32> to vector<32x32xbf16>
    %c1_169 = arith.constant 1 : index
    %c0_170 = arith.constant 0 : index
    %c0_171 = arith.constant 0 : index
    %408 = vector.load %arg8[%c1_169, %c0_170, %c0_171] : memref<3x32x32xf32, #tpu.memory_space<vmem>>, vector<1x32x32xf32>
    %409 = vector.shape_cast %408 : vector<1x32x32xf32> to vector<32x32xf32>
    %410 = arith.truncf %409 : vector<32x32xf32> to vector<32x32xbf16>
    %c2_172 = arith.constant 2 : index
    %c0_173 = arith.constant 0 : index
    %c0_174 = arith.constant 0 : index
    %411 = vector.load %arg8[%c2_172, %c0_173, %c0_174] : memref<3x32x32xf32, #tpu.memory_space<vmem>>, vector<1x32x32xf32>
    %412 = vector.shape_cast %411 : vector<1x32x32xf32> to vector<32x32xf32>
    %413 = arith.truncf %412 : vector<32x32xf32> to vector<32x32xbf16>
    %c0_175 = arith.constant 0 : index
    %c0_176 = arith.constant 0 : index
    %c0_177 = arith.constant 0 : index
    %414 = vector.load %arg10[%c0_175, %c0_176, %c0_177] : memref<3x1x32xf32, #tpu.memory_space<vmem>>, vector<1x1x32xf32>
    %415 = vector.shape_cast %414 : vector<1x1x32xf32> to vector<1x32xf32>
    %c1_178 = arith.constant 1 : index
    %c0_179 = arith.constant 0 : index
    %c0_180 = arith.constant 0 : index
    %416 = vector.load %arg10[%c1_178, %c0_179, %c0_180] : memref<3x1x32xf32, #tpu.memory_space<vmem>>, vector<1x1x32xf32>
    %417 = vector.shape_cast %416 : vector<1x1x32xf32> to vector<1x32xf32>
    %c2_181 = arith.constant 2 : index
    %c0_182 = arith.constant 0 : index
    %c0_183 = arith.constant 0 : index
    %418 = vector.load %arg10[%c2_181, %c0_182, %c0_183] : memref<3x1x32xf32, #tpu.memory_space<vmem>>, vector<1x1x32xf32>
    %419 = vector.shape_cast %418 : vector<1x1x32xf32> to vector<1x32xf32>
    %cst_184 = arith.constant 0.000000e+00 : f32
    %420 = vector.broadcast %cst_184 : f32 to vector<2x32xf32>
    %c0_i32_185 = arith.constant 0 : i32
    %c2_i32_186 = arith.constant 2 : i32
    %421 = arith.muli %c0_i32_185, %c2_i32_186 : i32
    %422 = tpu.assume_multiple %421, 2 : i32
    %423 = arith.index_cast %422 : i32 to index
    %c0_187 = arith.constant 0 : index
    %424 = vector.load %arg16[%423, %c0_187] : memref<16x32xf32, #tpu.memory_space<vmem>>, vector<2x32xf32>
    %425 = arith.index_cast %422 : i32 to index
    %c0_188 = arith.constant 0 : index
    %426 = vector.load %arg17[%425, %c0_188] : memref<16x32xf32, #tpu.memory_space<vmem>>, vector<2x32xf32>
    %427 = arith.index_cast %422 : i32 to index
    %c0_189 = arith.constant 0 : index
    %428 = vector.load %arg18[%427, %c0_189] : memref<16x32xf32, #tpu.memory_space<vmem>>, vector<2x32xf32>
    %429 = arith.truncf %420 : vector<2x32xf32> to vector<2x32xbf16>
    %cst_190 = arith.constant dense<0.000000e+00> : vector<2x32xf32>
    %430 = tpu.matmul %429, %407, %cst_190 {dimension_numbers = #tpu.dot_dimension_numbers<[1], [0], [0], [1], [0, 0, 1, 1], [], []>} : vector<2x32xbf16>, vector<32x32xbf16>, vector<2x32xf32> -> vector<2x32xf32>
    %431 = vector.broadcast %415 : vector<1x32xf32> to vector<2x32xf32>
    %432 = arith.addf %430, %431 : vector<2x32xf32>
    %cst_191 = arith.constant dense<0.000000e+00> : vector<2x32xf32>
    %433 = tpu.matmul %429, %410, %cst_191 {dimension_numbers = #tpu.dot_dimension_numbers<[1], [0], [0], [1], [0, 0, 1, 1], [], []>} : vector<2x32xbf16>, vector<32x32xbf16>, vector<2x32xf32> -> vector<2x32xf32>
    %434 = vector.broadcast %417 : vector<1x32xf32> to vector<2x32xf32>
    %435 = arith.addf %433, %434 : vector<2x32xf32>
    %cst_192 = arith.constant dense<0.000000e+00> : vector<2x32xf32>
    %436 = tpu.matmul %429, %413, %cst_192 {dimension_numbers = #tpu.dot_dimension_numbers<[1], [0], [0], [1], [0, 0, 1, 1], [], []>} : vector<2x32xbf16>, vector<32x32xbf16>, vector<2x32xf32> -> vector<2x32xf32>
    %437 = vector.broadcast %419 : vector<1x32xf32> to vector<2x32xf32>
    %438 = arith.addf %436, %437 : vector<2x32xf32>
    %439 = arith.addf %424, %432 : vector<2x32xf32>
    %440 = arith.negf %439 : vector<2x32xf32>
    %441 = math.exp %440 : vector<2x32xf32>
    %cst_193 = arith.constant 1.000000e+00 : f32
    %442 = vector.broadcast %cst_193 : f32 to vector<2x32xf32>
    %443 = arith.addf %442, %441 : vector<2x32xf32>
    %444 = arith.divf %442, %443 : vector<2x32xf32>
    %445 = arith.addf %426, %435 : vector<2x32xf32>
    %446 = arith.negf %445 : vector<2x32xf32>
    %447 = math.exp %446 : vector<2x32xf32>
    %cst_194 = arith.constant 1.000000e+00 : f32
    %448 = vector.broadcast %cst_194 : f32 to vector<2x32xf32>
    %449 = arith.addf %448, %447 : vector<2x32xf32>
    %450 = arith.divf %448, %449 : vector<2x32xf32>
    %451 = arith.mulf %444, %438 : vector<2x32xf32>
    %452 = arith.addf %428, %451 : vector<2x32xf32>
    %453 = math.tanh %452 : vector<2x32xf32>
    %cst_195 = arith.constant 1.000000e+00 : f32
    %454 = vector.broadcast %cst_195 : f32 to vector<2x32xf32>
    %455 = arith.subf %454, %450 : vector<2x32xf32>
    %456 = arith.mulf %455, %453 : vector<2x32xf32>
    %457 = arith.mulf %450, %420 : vector<2x32xf32>
    %458 = arith.addf %456, %457 : vector<2x32xf32>
    %459 = arith.index_cast %422 : i32 to index
    %c0_196 = arith.constant 0 : index
    %460 = vector.load %arg19[%459, %c0_196] : memref<16x32xf32, #tpu.memory_space<vmem>>, vector<2x32xf32>
    tpu.vector_store %arg19[%459, %c0_196], %458 {strides = array<i32>} : memref<16x32xf32, #tpu.memory_space<vmem>>, vector<2x32xf32>,
    %c1_i32_197 = arith.constant 1 : i32
    %c2_i32_198 = arith.constant 2 : i32
    %461 = arith.muli %c1_i32_197, %c2_i32_198 : i32
    %462 = tpu.assume_multiple %461, 2 : i32
    %463 = arith.index_cast %462 : i32 to index
    %c0_199 = arith.constant 0 : index
    %464 = vector.load %arg16[%463, %c0_199] : memref<16x32xf32, #tpu.memory_space<vmem>>, vector<2x32xf32>
    %465 = arith.index_cast %462 : i32 to index
    %c0_200 = arith.constant 0 : index
    %466 = vector.load %arg17[%465, %c0_200] : memref<16x32xf32, #tpu.memory_space<vmem>>, vector<2x32xf32>
    %467 = arith.index_cast %462 : i32 to index
    %c0_201 = arith.constant 0 : index
    %468 = vector.load %arg18[%467, %c0_201] : memref<16x32xf32, #tpu.memory_space<vmem>>, vector<2x32xf32>
    %469 = arith.truncf %458 : vector<2x32xf32> to vector<2x32xbf16>
    %cst_202 = arith.constant dense<0.000000e+00> : vector<2x32xf32>
    %470 = tpu.matmul %469, %407, %cst_202 {dimension_numbers = #tpu.dot_dimension_numbers<[1], [0], [0], [1], [0, 0, 1, 1], [], []>} : vector<2x32xbf16>, vector<32x32xbf16>, vector<2x32xf32> -> vector<2x32xf32>
    %471 = vector.broadcast %415 : vector<1x32xf32> to vector<2x32xf32>
    %472 = arith.addf %470, %471 : vector<2x32xf32>
    %cst_203 = arith.constant dense<0.000000e+00> : vector<2x32xf32>
    %473 = tpu.matmul %469, %410, %cst_203 {dimension_numbers = #tpu.dot_dimension_numbers<[1], [0], [0], [1], [0, 0, 1, 1], [], []>} : vector<2x32xbf16>, vector<32x32xbf16>, vector<2x32xf32> -> vector<2x32xf32>
    %474 = vector.broadcast %417 : vector<1x32xf32> to vector<2x32xf32>
    %475 = arith.addf %473, %474 : vector<2x32xf32>
    %cst_204 = arith.constant dense<0.000000e+00> : vector<2x32xf32>
    %476 = tpu.matmul %469, %413, %cst_204 {dimension_numbers = #tpu.dot_dimension_numbers<[1], [0], [0], [1], [0, 0, 1, 1], [], []>} : vector<2x32xbf16>, vector<32x32xbf16>, vector<2x32xf32> -> vector<2x32xf32>
    %477 = vector.broadcast %419 : vector<1x32xf32> to vector<2x32xf32>
    %478 = arith.addf %476, %477 : vector<2x32xf32>
    %479 = arith.addf %464, %472 : vector<2x32xf32>
    %480 = arith.negf %479 : vector<2x32xf32>
    %481 = math.exp %480 : vector<2x32xf32>
    %cst_205 = arith.constant 1.000000e+00 : f32
    %482 = vector.broadcast %cst_205 : f32 to vector<2x32xf32>
    %483 = arith.addf %482, %481 : vector<2x32xf32>
    %484 = arith.divf %482, %483 : vector<2x32xf32>
    %485 = arith.addf %466, %475 : vector<2x32xf32>
    %486 = arith.negf %485 : vector<2x32xf32>
    %487 = math.exp %486 : vector<2x32xf32>
    %cst_206 = arith.constant 1.000000e+00 : f32
    %488 = vector.broadcast %cst_206 : f32 to vector<2x32xf32>
    %489 = arith.addf %488, %487 : vector<2x32xf32>
    %490 = arith.divf %488, %489 : vector<2x32xf32>
    %491 = arith.mulf %484, %478 : vector<2x32xf32>
    %492 = arith.addf %468, %491 : vector<2x32xf32>
    %493 = math.tanh %492 : vector<2x32xf32>
    %cst_207 = arith.constant 1.000000e+00 : f32
    %494 = vector.broadcast %cst_207 : f32 to vector<2x32xf32>
    %495 = arith.subf %494, %490 : vector<2x32xf32>
    %496 = arith.mulf %495, %493 : vector<2x32xf32>
    %497 = arith.mulf %490, %458 : vector<2x32xf32>
    %498 = arith.addf %496, %497 : vector<2x32xf32>
    %499 = arith.index_cast %462 : i32 to index
    %c0_208 = arith.constant 0 : index
    %500 = vector.load %arg19[%499, %c0_208] : memref<16x32xf32, #tpu.memory_space<vmem>>, vector<2x32xf32>
    tpu.vector_store %arg19[%499, %c0_208], %498 {strides = array<i32>} : memref<16x32xf32, #tpu.memory_space<vmem>>, vector<2x32xf32>,
    %c2_i32_209 = arith.constant 2 : i32
    %c2_i32_210 = arith.constant 2 : i32
    %501 = arith.muli %c2_i32_209, %c2_i32_210 : i32
    %502 = tpu.assume_multiple %501, 2 : i32
    %503 = arith.index_cast %502 : i32 to index
    %c0_211 = arith.constant 0 : index
    %504 = vector.load %arg16[%503, %c0_211] : memref<16x32xf32, #tpu.memory_space<vmem>>, vector<2x32xf32>
    %505 = arith.index_cast %502 : i32 to index
    %c0_212 = arith.constant 0 : index
    %506 = vector.load %arg17[%505, %c0_212] : memref<16x32xf32, #tpu.memory_space<vmem>>, vector<2x32xf32>
    %507 = arith.index_cast %502 : i32 to index
    %c0_213 = arith.constant 0 : index
    %508 = vector.load %arg18[%507, %c0_213] : memref<16x32xf32, #tpu.memory_space<vmem>>, vector<2x32xf32>
    %509 = arith.truncf %498 : vector<2x32xf32> to vector<2x32xbf16>
    %cst_214 = arith.constant dense<0.000000e+00> : vector<2x32xf32>
    %510 = tpu.matmul %509, %407, %cst_214 {dimension_numbers = #tpu.dot_dimension_numbers<[1], [0], [0], [1], [0, 0, 1, 1], [], []>} : vector<2x32xbf16>, vector<32x32xbf16>, vector<2x32xf32> -> vector<2x32xf32>
    %511 = vector.broadcast %415 : vector<1x32xf32> to vector<2x32xf32>
    %512 = arith.addf %510, %511 : vector<2x32xf32>
    %cst_215 = arith.constant dense<0.000000e+00> : vector<2x32xf32>
    %513 = tpu.matmul %509, %410, %cst_215 {dimension_numbers = #tpu.dot_dimension_numbers<[1], [0], [0], [1], [0, 0, 1, 1], [], []>} : vector<2x32xbf16>, vector<32x32xbf16>, vector<2x32xf32> -> vector<2x32xf32>
    %514 = vector.broadcast %417 : vector<1x32xf32> to vector<2x32xf32>
    %515 = arith.addf %513, %514 : vector<2x32xf32>
    %cst_216 = arith.constant dense<0.000000e+00> : vector<2x32xf32>
    %516 = tpu.matmul %509, %413, %cst_216 {dimension_numbers = #tpu.dot_dimension_numbers<[1], [0], [0], [1], [0, 0, 1, 1], [], []>} : vector<2x32xbf16>, vector<32x32xbf16>, vector<2x32xf32> -> vector<2x32xf32>
    %517 = vector.broadcast %419 : vector<1x32xf32> to vector<2x32xf32>
    %518 = arith.addf %516, %517 : vector<2x32xf32>
    %519 = arith.addf %504, %512 : vector<2x32xf32>
    %520 = arith.negf %519 : vector<2x32xf32>
    %521 = math.exp %520 : vector<2x32xf32>
    %cst_217 = arith.constant 1.000000e+00 : f32
    %522 = vector.broadcast %cst_217 : f32 to vector<2x32xf32>
    %523 = arith.addf %522, %521 : vector<2x32xf32>
    %524 = arith.divf %522, %523 : vector<2x32xf32>
    %525 = arith.addf %506, %515 : vector<2x32xf32>
    %526 = arith.negf %525 : vector<2x32xf32>
    %527 = math.exp %526 : vector<2x32xf32>
    %cst_218 = arith.constant 1.000000e+00 : f32
    %528 = vector.broadcast %cst_218 : f32 to vector<2x32xf32>
    %529 = arith.addf %528, %527 : vector<2x32xf32>
    %530 = arith.divf %528, %529 : vector<2x32xf32>
    %531 = arith.mulf %524, %518 : vector<2x32xf32>
    %532 = arith.addf %508, %531 : vector<2x32xf32>
    %533 = math.tanh %532 : vector<2x32xf32>
    %cst_219 = arith.constant 1.000000e+00 : f32
    %534 = vector.broadcast %cst_219 : f32 to vector<2x32xf32>
    %535 = arith.subf %534, %530 : vector<2x32xf32>
    %536 = arith.mulf %535, %533 : vector<2x32xf32>
    %537 = arith.mulf %530, %498 : vector<2x32xf32>
    %538 = arith.addf %536, %537 : vector<2x32xf32>
    %539 = arith.index_cast %502 : i32 to index
    %c0_220 = arith.constant 0 : index
    %540 = vector.load %arg19[%539, %c0_220] : memref<16x32xf32, #tpu.memory_space<vmem>>, vector<2x32xf32>
    tpu.vector_store %arg19[%539, %c0_220], %538 {strides = array<i32>} : memref<16x32xf32, #tpu.memory_space<vmem>>, vector<2x32xf32>,
    %c3_i32_221 = arith.constant 3 : i32
    %c2_i32_222 = arith.constant 2 : i32
    %541 = arith.muli %c3_i32_221, %c2_i32_222 : i32
    %542 = tpu.assume_multiple %541, 2 : i32
    %543 = arith.index_cast %542 : i32 to index
    %c0_223 = arith.constant 0 : index
    %544 = vector.load %arg16[%543, %c0_223] : memref<16x32xf32, #tpu.memory_space<vmem>>, vector<2x32xf32>
    %545 = arith.index_cast %542 : i32 to index
    %c0_224 = arith.constant 0 : index
    %546 = vector.load %arg17[%545, %c0_224] : memref<16x32xf32, #tpu.memory_space<vmem>>, vector<2x32xf32>
    %547 = arith.index_cast %542 : i32 to index
    %c0_225 = arith.constant 0 : index
    %548 = vector.load %arg18[%547, %c0_225] : memref<16x32xf32, #tpu.memory_space<vmem>>, vector<2x32xf32>
    %549 = arith.truncf %538 : vector<2x32xf32> to vector<2x32xbf16>
    %cst_226 = arith.constant dense<0.000000e+00> : vector<2x32xf32>
    %550 = tpu.matmul %549, %407, %cst_226 {dimension_numbers = #tpu.dot_dimension_numbers<[1], [0], [0], [1], [0, 0, 1, 1], [], []>} : vector<2x32xbf16>, vector<32x32xbf16>, vector<2x32xf32> -> vector<2x32xf32>
    %551 = vector.broadcast %415 : vector<1x32xf32> to vector<2x32xf32>
    %552 = arith.addf %550, %551 : vector<2x32xf32>
    %cst_227 = arith.constant dense<0.000000e+00> : vector<2x32xf32>
    %553 = tpu.matmul %549, %410, %cst_227 {dimension_numbers = #tpu.dot_dimension_numbers<[1], [0], [0], [1], [0, 0, 1, 1], [], []>} : vector<2x32xbf16>, vector<32x32xbf16>, vector<2x32xf32> -> vector<2x32xf32>
    %554 = vector.broadcast %417 : vector<1x32xf32> to vector<2x32xf32>
    %555 = arith.addf %553, %554 : vector<2x32xf32>
    %cst_228 = arith.constant dense<0.000000e+00> : vector<2x32xf32>
    %556 = tpu.matmul %549, %413, %cst_228 {dimension_numbers = #tpu.dot_dimension_numbers<[1], [0], [0], [1], [0, 0, 1, 1], [], []>} : vector<2x32xbf16>, vector<32x32xbf16>, vector<2x32xf32> -> vector<2x32xf32>
    %557 = vector.broadcast %419 : vector<1x32xf32> to vector<2x32xf32>
    %558 = arith.addf %556, %557 : vector<2x32xf32>
    %559 = arith.addf %544, %552 : vector<2x32xf32>
    %560 = arith.negf %559 : vector<2x32xf32>
    %561 = math.exp %560 : vector<2x32xf32>
    %cst_229 = arith.constant 1.000000e+00 : f32
    %562 = vector.broadcast %cst_229 : f32 to vector<2x32xf32>
    %563 = arith.addf %562, %561 : vector<2x32xf32>
    %564 = arith.divf %562, %563 : vector<2x32xf32>
    %565 = arith.addf %546, %555 : vector<2x32xf32>
    %566 = arith.negf %565 : vector<2x32xf32>
    %567 = math.exp %566 : vector<2x32xf32>
    %cst_230 = arith.constant 1.000000e+00 : f32
    %568 = vector.broadcast %cst_230 : f32 to vector<2x32xf32>
    %569 = arith.addf %568, %567 : vector<2x32xf32>
    %570 = arith.divf %568, %569 : vector<2x32xf32>
    %571 = arith.mulf %564, %558 : vector<2x32xf32>
    %572 = arith.addf %548, %571 : vector<2x32xf32>
    %573 = math.tanh %572 : vector<2x32xf32>
    %cst_231 = arith.constant 1.000000e+00 : f32
    %574 = vector.broadcast %cst_231 : f32 to vector<2x32xf32>
    %575 = arith.subf %574, %570 : vector<2x32xf32>
    %576 = arith.mulf %575, %573 : vector<2x32xf32>
    %577 = arith.mulf %570, %538 : vector<2x32xf32>
    %578 = arith.addf %576, %577 : vector<2x32xf32>
    %579 = arith.index_cast %542 : i32 to index
    %c0_232 = arith.constant 0 : index
    %580 = vector.load %arg19[%579, %c0_232] : memref<16x32xf32, #tpu.memory_space<vmem>>, vector<2x32xf32>
    tpu.vector_store %arg19[%579, %c0_232], %578 {strides = array<i32>} : memref<16x32xf32, #tpu.memory_space<vmem>>, vector<2x32xf32>,
    %c4_i32_233 = arith.constant 4 : i32
    %c2_i32_234 = arith.constant 2 : i32
    %581 = arith.muli %c4_i32_233, %c2_i32_234 : i32
    %582 = tpu.assume_multiple %581, 2 : i32
    %583 = arith.index_cast %582 : i32 to index
    %c0_235 = arith.constant 0 : index
    %584 = vector.load %arg16[%583, %c0_235] : memref<16x32xf32, #tpu.memory_space<vmem>>, vector<2x32xf32>
    %585 = arith.index_cast %582 : i32 to index
    %c0_236 = arith.constant 0 : index
    %586 = vector.load %arg17[%585, %c0_236] : memref<16x32xf32, #tpu.memory_space<vmem>>, vector<2x32xf32>
    %587 = arith.index_cast %582 : i32 to index
    %c0_237 = arith.constant 0 : index
    %588 = vector.load %arg18[%587, %c0_237] : memref<16x32xf32, #tpu.memory_space<vmem>>, vector<2x32xf32>
    %589 = arith.truncf %578 : vector<2x32xf32> to vector<2x32xbf16>
    %cst_238 = arith.constant dense<0.000000e+00> : vector<2x32xf32>
    %590 = tpu.matmul %589, %407, %cst_238 {dimension_numbers = #tpu.dot_dimension_numbers<[1], [0], [0], [1], [0, 0, 1, 1], [], []>} : vector<2x32xbf16>, vector<32x32xbf16>, vector<2x32xf32> -> vector<2x32xf32>
    %591 = vector.broadcast %415 : vector<1x32xf32> to vector<2x32xf32>
    %592 = arith.addf %590, %591 : vector<2x32xf32>
    %cst_239 = arith.constant dense<0.000000e+00> : vector<2x32xf32>
    %593 = tpu.matmul %589, %410, %cst_239 {dimension_numbers = #tpu.dot_dimension_numbers<[1], [0], [0], [1], [0, 0, 1, 1], [], []>} : vector<2x32xbf16>, vector<32x32xbf16>, vector<2x32xf32> -> vector<2x32xf32>
    %594 = vector.broadcast %417 : vector<1x32xf32> to vector<2x32xf32>
    %595 = arith.addf %593, %594 : vector<2x32xf32>
    %cst_240 = arith.constant dense<0.000000e+00> : vector<2x32xf32>
    %596 = tpu.matmul %589, %413, %cst_240 {dimension_numbers = #tpu.dot_dimension_numbers<[1], [0], [0], [1], [0, 0, 1, 1], [], []>} : vector<2x32xbf16>, vector<32x32xbf16>, vector<2x32xf32> -> vector<2x32xf32>
    %597 = vector.broadcast %419 : vector<1x32xf32> to vector<2x32xf32>
    %598 = arith.addf %596, %597 : vector<2x32xf32>
    %599 = arith.addf %584, %592 : vector<2x32xf32>
    %600 = arith.negf %599 : vector<2x32xf32>
    %601 = math.exp %600 : vector<2x32xf32>
    %cst_241 = arith.constant 1.000000e+00 : f32
    %602 = vector.broadcast %cst_241 : f32 to vector<2x32xf32>
    %603 = arith.addf %602, %601 : vector<2x32xf32>
    %604 = arith.divf %602, %603 : vector<2x32xf32>
    %605 = arith.addf %586, %595 : vector<2x32xf32>
    %606 = arith.negf %605 : vector<2x32xf32>
    %607 = math.exp %606 : vector<2x32xf32>
    %cst_242 = arith.constant 1.000000e+00 : f32
    %608 = vector.broadcast %cst_242 : f32 to vector<2x32xf32>
    %609 = arith.addf %608, %607 : vector<2x32xf32>
    %610 = arith.divf %608, %609 : vector<2x32xf32>
    %611 = arith.mulf %604, %598 : vector<2x32xf32>
    %612 = arith.addf %588, %611 : vector<2x32xf32>
    %613 = math.tanh %612 : vector<2x32xf32>
    %cst_243 = arith.constant 1.000000e+00 : f32
    %614 = vector.broadcast %cst_243 : f32 to vector<2x32xf32>
    %615 = arith.subf %614, %610 : vector<2x32xf32>
    %616 = arith.mulf %615, %613 : vector<2x32xf32>
    %617 = arith.mulf %610, %578 : vector<2x32xf32>
    %618 = arith.addf %616, %617 : vector<2x32xf32>
    %619 = arith.index_cast %582 : i32 to index
    %c0_244 = arith.constant 0 : index
    %620 = vector.load %arg19[%619, %c0_244] : memref<16x32xf32, #tpu.memory_space<vmem>>, vector<2x32xf32>
    tpu.vector_store %arg19[%619, %c0_244], %618 {strides = array<i32>} : memref<16x32xf32, #tpu.memory_space<vmem>>, vector<2x32xf32>,
    %c5_i32_245 = arith.constant 5 : i32
    %c2_i32_246 = arith.constant 2 : i32
    %621 = arith.muli %c5_i32_245, %c2_i32_246 : i32
    %622 = tpu.assume_multiple %621, 2 : i32
    %623 = arith.index_cast %622 : i32 to index
    %c0_247 = arith.constant 0 : index
    %624 = vector.load %arg16[%623, %c0_247] : memref<16x32xf32, #tpu.memory_space<vmem>>, vector<2x32xf32>
    %625 = arith.index_cast %622 : i32 to index
    %c0_248 = arith.constant 0 : index
    %626 = vector.load %arg17[%625, %c0_248] : memref<16x32xf32, #tpu.memory_space<vmem>>, vector<2x32xf32>
    %627 = arith.index_cast %622 : i32 to index
    %c0_249 = arith.constant 0 : index
    %628 = vector.load %arg18[%627, %c0_249] : memref<16x32xf32, #tpu.memory_space<vmem>>, vector<2x32xf32>
    %629 = arith.truncf %618 : vector<2x32xf32> to vector<2x32xbf16>
    %cst_250 = arith.constant dense<0.000000e+00> : vector<2x32xf32>
    %630 = tpu.matmul %629, %407, %cst_250 {dimension_numbers = #tpu.dot_dimension_numbers<[1], [0], [0], [1], [0, 0, 1, 1], [], []>} : vector<2x32xbf16>, vector<32x32xbf16>, vector<2x32xf32> -> vector<2x32xf32>
    %631 = vector.broadcast %415 : vector<1x32xf32> to vector<2x32xf32>
    %632 = arith.addf %630, %631 : vector<2x32xf32>
    %cst_251 = arith.constant dense<0.000000e+00> : vector<2x32xf32>
    %633 = tpu.matmul %629, %410, %cst_251 {dimension_numbers = #tpu.dot_dimension_numbers<[1], [0], [0], [1], [0, 0, 1, 1], [], []>} : vector<2x32xbf16>, vector<32x32xbf16>, vector<2x32xf32> -> vector<2x32xf32>
    %634 = vector.broadcast %417 : vector<1x32xf32> to vector<2x32xf32>
    %635 = arith.addf %633, %634 : vector<2x32xf32>
    %cst_252 = arith.constant dense<0.000000e+00> : vector<2x32xf32>
    %636 = tpu.matmul %629, %413, %cst_252 {dimension_numbers = #tpu.dot_dimension_numbers<[1], [0], [0], [1], [0, 0, 1, 1], [], []>} : vector<2x32xbf16>, vector<32x32xbf16>, vector<2x32xf32> -> vector<2x32xf32>
    %637 = vector.broadcast %419 : vector<1x32xf32> to vector<2x32xf32>
    %638 = arith.addf %636, %637 : vector<2x32xf32>
    %639 = arith.addf %624, %632 : vector<2x32xf32>
    %640 = arith.negf %639 : vector<2x32xf32>
    %641 = math.exp %640 : vector<2x32xf32>
    %cst_253 = arith.constant 1.000000e+00 : f32
    %642 = vector.broadcast %cst_253 : f32 to vector<2x32xf32>
    %643 = arith.addf %642, %641 : vector<2x32xf32>
    %644 = arith.divf %642, %643 : vector<2x32xf32>
    %645 = arith.addf %626, %635 : vector<2x32xf32>
    %646 = arith.negf %645 : vector<2x32xf32>
    %647 = math.exp %646 : vector<2x32xf32>
    %cst_254 = arith.constant 1.000000e+00 : f32
    %648 = vector.broadcast %cst_254 : f32 to vector<2x32xf32>
    %649 = arith.addf %648, %647 : vector<2x32xf32>
    %650 = arith.divf %648, %649 : vector<2x32xf32>
    %651 = arith.mulf %644, %638 : vector<2x32xf32>
    %652 = arith.addf %628, %651 : vector<2x32xf32>
    %653 = math.tanh %652 : vector<2x32xf32>
    %cst_255 = arith.constant 1.000000e+00 : f32
    %654 = vector.broadcast %cst_255 : f32 to vector<2x32xf32>
    %655 = arith.subf %654, %650 : vector<2x32xf32>
    %656 = arith.mulf %655, %653 : vector<2x32xf32>
    %657 = arith.mulf %650, %618 : vector<2x32xf32>
    %658 = arith.addf %656, %657 : vector<2x32xf32>
    %659 = arith.index_cast %622 : i32 to index
    %c0_256 = arith.constant 0 : index
    %660 = vector.load %arg19[%659, %c0_256] : memref<16x32xf32, #tpu.memory_space<vmem>>, vector<2x32xf32>
    tpu.vector_store %arg19[%659, %c0_256], %658 {strides = array<i32>} : memref<16x32xf32, #tpu.memory_space<vmem>>, vector<2x32xf32>,
    %c6_i32_257 = arith.constant 6 : i32
    %c2_i32_258 = arith.constant 2 : i32
    %661 = arith.muli %c6_i32_257, %c2_i32_258 : i32
    %662 = tpu.assume_multiple %661, 2 : i32
    %663 = arith.index_cast %662 : i32 to index
    %c0_259 = arith.constant 0 : index
    %664 = vector.load %arg16[%663, %c0_259] : memref<16x32xf32, #tpu.memory_space<vmem>>, vector<2x32xf32>
    %665 = arith.index_cast %662 : i32 to index
    %c0_260 = arith.constant 0 : index
    %666 = vector.load %arg17[%665, %c0_260] : memref<16x32xf32, #tpu.memory_space<vmem>>, vector<2x32xf32>
    %667 = arith.index_cast %662 : i32 to index
    %c0_261 = arith.constant 0 : index
    %668 = vector.load %arg18[%667, %c0_261] : memref<16x32xf32, #tpu.memory_space<vmem>>, vector<2x32xf32>
    %669 = arith.truncf %658 : vector<2x32xf32> to vector<2x32xbf16>
    %cst_262 = arith.constant dense<0.000000e+00> : vector<2x32xf32>
    %670 = tpu.matmul %669, %407, %cst_262 {dimension_numbers = #tpu.dot_dimension_numbers<[1], [0], [0], [1], [0, 0, 1, 1], [], []>} : vector<2x32xbf16>, vector<32x32xbf16>, vector<2x32xf32> -> vector<2x32xf32>
    %671 = vector.broadcast %415 : vector<1x32xf32> to vector<2x32xf32>
    %672 = arith.addf %670, %671 : vector<2x32xf32>
    %cst_263 = arith.constant dense<0.000000e+00> : vector<2x32xf32>
    %673 = tpu.matmul %669, %410, %cst_263 {dimension_numbers = #tpu.dot_dimension_numbers<[1], [0], [0], [1], [0, 0, 1, 1], [], []>} : vector<2x32xbf16>, vector<32x32xbf16>, vector<2x32xf32> -> vector<2x32xf32>
    %674 = vector.broadcast %417 : vector<1x32xf32> to vector<2x32xf32>
    %675 = arith.addf %673, %674 : vector<2x32xf32>
    %cst_264 = arith.constant dense<0.000000e+00> : vector<2x32xf32>
    %676 = tpu.matmul %669, %413, %cst_264 {dimension_numbers = #tpu.dot_dimension_numbers<[1], [0], [0], [1], [0, 0, 1, 1], [], []>} : vector<2x32xbf16>, vector<32x32xbf16>, vector<2x32xf32> -> vector<2x32xf32>
    %677 = vector.broadcast %419 : vector<1x32xf32> to vector<2x32xf32>
    %678 = arith.addf %676, %677 : vector<2x32xf32>
    %679 = arith.addf %664, %672 : vector<2x32xf32>
    %680 = arith.negf %679 : vector<2x32xf32>
    %681 = math.exp %680 : vector<2x32xf32>
    %cst_265 = arith.constant 1.000000e+00 : f32
    %682 = vector.broadcast %cst_265 : f32 to vector<2x32xf32>
    %683 = arith.addf %682, %681 : vector<2x32xf32>
    %684 = arith.divf %682, %683 : vector<2x32xf32>
    %685 = arith.addf %666, %675 : vector<2x32xf32>
    %686 = arith.negf %685 : vector<2x32xf32>
    %687 = math.exp %686 : vector<2x32xf32>
    %cst_266 = arith.constant 1.000000e+00 : f32
    %688 = vector.broadcast %cst_266 : f32 to vector<2x32xf32>
    %689 = arith.addf %688, %687 : vector<2x32xf32>
    %690 = arith.divf %688, %689 : vector<2x32xf32>
    %691 = arith.mulf %684, %678 : vector<2x32xf32>
    %692 = arith.addf %668, %691 : vector<2x32xf32>
    %693 = math.tanh %692 : vector<2x32xf32>
    %cst_267 = arith.constant 1.000000e+00 : f32
    %694 = vector.broadcast %cst_267 : f32 to vector<2x32xf32>
    %695 = arith.subf %694, %690 : vector<2x32xf32>
    %696 = arith.mulf %695, %693 : vector<2x32xf32>
    %697 = arith.mulf %690, %658 : vector<2x32xf32>
    %698 = arith.addf %696, %697 : vector<2x32xf32>
    %699 = arith.index_cast %662 : i32 to index
    %c0_268 = arith.constant 0 : index
    %700 = vector.load %arg19[%699, %c0_268] : memref<16x32xf32, #tpu.memory_space<vmem>>, vector<2x32xf32>
    tpu.vector_store %arg19[%699, %c0_268], %698 {strides = array<i32>} : memref<16x32xf32, #tpu.memory_space<vmem>>, vector<2x32xf32>,
    %c7_i32_269 = arith.constant 7 : i32
    %c2_i32_270 = arith.constant 2 : i32
    %701 = arith.muli %c7_i32_269, %c2_i32_270 : i32
    %702 = tpu.assume_multiple %701, 2 : i32
    %703 = arith.index_cast %702 : i32 to index
    %c0_271 = arith.constant 0 : index
    %704 = vector.load %arg16[%703, %c0_271] : memref<16x32xf32, #tpu.memory_space<vmem>>, vector<2x32xf32>
    %705 = arith.index_cast %702 : i32 to index
    %c0_272 = arith.constant 0 : index
    %706 = vector.load %arg17[%705, %c0_272] : memref<16x32xf32, #tpu.memory_space<vmem>>, vector<2x32xf32>
    %707 = arith.index_cast %702 : i32 to index
    %c0_273 = arith.constant 0 : index
    %708 = vector.load %arg18[%707, %c0_273] : memref<16x32xf32, #tpu.memory_space<vmem>>, vector<2x32xf32>
    %709 = arith.truncf %698 : vector<2x32xf32> to vector<2x32xbf16>
    %cst_274 = arith.constant dense<0.000000e+00> : vector<2x32xf32>
    %710 = tpu.matmul %709, %407, %cst_274 {dimension_numbers = #tpu.dot_dimension_numbers<[1], [0], [0], [1], [0, 0, 1, 1], [], []>} : vector<2x32xbf16>, vector<32x32xbf16>, vector<2x32xf32> -> vector<2x32xf32>
    %711 = vector.broadcast %415 : vector<1x32xf32> to vector<2x32xf32>
    %712 = arith.addf %710, %711 : vector<2x32xf32>
    %cst_275 = arith.constant dense<0.000000e+00> : vector<2x32xf32>
    %713 = tpu.matmul %709, %410, %cst_275 {dimension_numbers = #tpu.dot_dimension_numbers<[1], [0], [0], [1], [0, 0, 1, 1], [], []>} : vector<2x32xbf16>, vector<32x32xbf16>, vector<2x32xf32> -> vector<2x32xf32>
    %714 = vector.broadcast %417 : vector<1x32xf32> to vector<2x32xf32>
    %715 = arith.addf %713, %714 : vector<2x32xf32>
    %cst_276 = arith.constant dense<0.000000e+00> : vector<2x32xf32>
    %716 = tpu.matmul %709, %413, %cst_276 {dimension_numbers = #tpu.dot_dimension_numbers<[1], [0], [0], [1], [0, 0, 1, 1], [], []>} : vector<2x32xbf16>, vector<32x32xbf16>, vector<2x32xf32> -> vector<2x32xf32>
    %717 = vector.broadcast %419 : vector<1x32xf32> to vector<2x32xf32>
    %718 = arith.addf %716, %717 : vector<2x32xf32>
    %719 = arith.addf %704, %712 : vector<2x32xf32>
    %720 = arith.negf %719 : vector<2x32xf32>
    %721 = math.exp %720 : vector<2x32xf32>
    %cst_277 = arith.constant 1.000000e+00 : f32
    %722 = vector.broadcast %cst_277 : f32 to vector<2x32xf32>
    %723 = arith.addf %722, %721 : vector<2x32xf32>
    %724 = arith.divf %722, %723 : vector<2x32xf32>
    %725 = arith.addf %706, %715 : vector<2x32xf32>
    %726 = arith.negf %725 : vector<2x32xf32>
    %727 = math.exp %726 : vector<2x32xf32>
    %cst_278 = arith.constant 1.000000e+00 : f32
    %728 = vector.broadcast %cst_278 : f32 to vector<2x32xf32>
    %729 = arith.addf %728, %727 : vector<2x32xf32>
    %730 = arith.divf %728, %729 : vector<2x32xf32>
    %731 = arith.mulf %724, %718 : vector<2x32xf32>
    %732 = arith.addf %708, %731 : vector<2x32xf32>
    %733 = math.tanh %732 : vector<2x32xf32>
    %cst_279 = arith.constant 1.000000e+00 : f32
    %734 = vector.broadcast %cst_279 : f32 to vector<2x32xf32>
    %735 = arith.subf %734, %730 : vector<2x32xf32>
    %736 = arith.mulf %735, %733 : vector<2x32xf32>
    %737 = arith.mulf %730, %698 : vector<2x32xf32>
    %738 = arith.addf %736, %737 : vector<2x32xf32>
    %739 = arith.index_cast %702 : i32 to index
    %c0_280 = arith.constant 0 : index
    %740 = vector.load %arg19[%739, %c0_280] : memref<16x32xf32, #tpu.memory_space<vmem>>, vector<2x32xf32>
    tpu.vector_store %arg19[%739, %c0_280], %738 {strides = array<i32>} : memref<16x32xf32, #tpu.memory_space<vmem>>, vector<2x32xf32>,
    %c8_i32_281 = arith.constant 8 : i32
    %c0_282 = arith.constant 0 : index
    %c0_283 = arith.constant 0 : index
    %741 = vector.load %arg19[%c0_282, %c0_283] : memref<16x32xf32, #tpu.memory_space<vmem>>, vector<16x32xf32>
    %c0_284 = arith.constant 0 : index
    %c0_285 = arith.constant 0 : index
    %742 = vector.load %arg11[%c0_284, %c0_285] : memref<32x32xf32, #tpu.memory_space<vmem>>, vector<32x32xf32>
    %743 = arith.truncf %741 : vector<16x32xf32> to vector<16x32xbf16>
    %744 = arith.truncf %742 : vector<32x32xf32> to vector<32x32xbf16>
    %cst_286 = arith.constant dense<0.000000e+00> : vector<16x32xf32>
    %745 = tpu.matmul %743, %744, %cst_286 {dimension_numbers = #tpu.dot_dimension_numbers<[1], [0], [0], [1], [0, 0, 1, 1], [], []>} : vector<16x32xbf16>, vector<32x32xbf16>, vector<16x32xf32> -> vector<16x32xf32>
    %c0_287 = arith.constant 0 : index
    %c0_288 = arith.constant 0 : index
    %746 = vector.load %arg12[%c0_287, %c0_288] : memref<1x32xf32, #tpu.memory_space<vmem>>, vector<1x32xf32>
    %747 = vector.broadcast %746 : vector<1x32xf32> to vector<16x32xf32>
    %748 = arith.addf %745, %747 : vector<16x32xf32>
    %cst_289 = arith.constant 0.000000e+00 : f32
    %749 = vector.broadcast %cst_289 : f32 to vector<16x32xf32>
    %750 = arith.maximumf %748, %749 : vector<16x32xf32>
    %c0_290 = arith.constant 0 : index
    %c0_291 = arith.constant 0 : index
    %751 = vector.load %arg13[%c0_290, %c0_291] : memref<32x16xf32, #tpu.memory_space<vmem>>, vector<32x16xf32>
    %752 = arith.truncf %750 : vector<16x32xf32> to vector<16x32xbf16>
    %753 = arith.truncf %751 : vector<32x16xf32> to vector<32x16xbf16>
    %cst_292 = arith.constant dense<0.000000e+00> : vector<16x16xf32>
    %754 = tpu.matmul %752, %753, %cst_292 {dimension_numbers = #tpu.dot_dimension_numbers<[1], [0], [0], [1], [0, 0, 1, 1], [], []>} : vector<16x32xbf16>, vector<32x16xbf16>, vector<16x16xf32> -> vector<16x16xf32>
    %c0_293 = arith.constant 0 : index
    %c0_294 = arith.constant 0 : index
    %755 = vector.load %arg14[%c0_293, %c0_294] : memref<1x16xf32, #tpu.memory_space<vmem>>, vector<1x16xf32>
    %756 = vector.broadcast %755 : vector<1x16xf32> to vector<16x16xf32>
    %757 = arith.addf %754, %756 : vector<16x16xf32>
    %cst_295 = arith.constant dense<0xFF800000> : vector<16xf32>
    %758 = vector.multi_reduction <maximumf>, %757, %cst_295 [1] : vector<16x16xf32> to vector<16xf32>
    %759 = vector.shape_cast %758 : vector<16xf32> to vector<16x1xf32>
    %760 = vector.broadcast %759 : vector<16x1xf32> to vector<16x16xf32>
    %761 = arith.subf %757, %760 : vector<16x16xf32>
    %762 = math.exp %761 : vector<16x16xf32>
    %cst_296 = arith.constant dense<0.000000e+00> : vector<16xf32>
    %763 = vector.multi_reduction <add>, %762, %cst_296 [1] : vector<16x16xf32> to vector<16xf32>
    %764 = vector.shape_cast %763 : vector<16xf32> to vector<16x1xf32>
    %765 = vector.broadcast %764 : vector<16x1xf32> to vector<16x16xf32>
    %766 = arith.divf %762, %765 : vector<16x16xf32>
    %c0_297 = arith.constant 0 : index
    %c0_298 = arith.constant 0 : index
    %767 = vector.load %arg15[%c0_297, %c0_298] : memref<16x16xf32, #tpu.memory_space<vmem>>, vector<16x16xf32>
    tpu.vector_store %arg15[%c0_297, %c0_298], %766 {strides = array<i32>} : memref<16x16xf32, #tpu.memory_space<vmem>>, vector<16x16xf32>,
    return
  }
}

</mosaic_0001>

<llo_original>
// kernel: tpu_custom_call.1
$region0: #{tpu_custom_call.1}
  #allocation0 [shape = 'u32[]', space=smem, size = 0x4, offset = 0x4, fixed_abs, tag = 'smem constant byte address 0x4 - core index']
  #allocation1 [shape = 'u32[144,128]{1,0:T(1,128)}', space=vmem, size = 0x12000, scoped, tag = 'internal scratch']
  #allocation2 [shape = 'f32[16,32]{1,0:T(8,128)}', space=vmem, size = 0x2000, scoped, tag = 'scratch operand']
  #allocation3 [shape = 'f32[16,32]{1,0:T(8,128)}', space=vmem, size = 0x2000, scoped, tag = 'scratch operand']
  #allocation4 [shape = 'f32[16,32]{1,0:T(8,128)}', space=vmem, size = 0x2000, scoped, tag = 'scratch operand']
  #allocation5 [shape = 'f32[16,32]{1,0:T(8,128)}', space=vmem, size = 0x2000, scoped, tag = 'scratch operand']
  %s0 = inlined_call_operand.vmem [shape: f32[16,4], index: 0, kind: input, shape index: {}]
  %s1 = inlined_call_operand.hbm [shape: f32[4,32], index: 1, kind: input, shape index: {}]
  %s2 = inlined_call_operand.vmem [shape: f32[1,32], index: 2, kind: input, shape index: {}]
  %s3 = inlined_call_operand.hbm [shape: f32[3,32,32], index: 3, kind: input, shape index: {}]
  %s4 = inlined_call_operand.hbm [shape: f32[3,32,32], index: 4, kind: input, shape index: {}]
  %s5 = inlined_call_operand.hbm [shape: f32[3,1,32], index: 5, kind: input, shape index: {}]
  %s6 = inlined_call_operand.hbm [shape: f32[3,1,32], index: 6, kind: input, shape index: {}]
  %s7 = inlined_call_operand.hbm [shape: f32[3,32,32], index: 7, kind: input, shape index: {}]
  %s8 = inlined_call_operand.vmem [shape: f32[3,32,32], index: 8, kind: input, shape index: {}]
  %s9 = inlined_call_operand.hbm [shape: f32[3,1,32], index: 9, kind: input, shape index: {}]
  %s10 = inlined_call_operand.hbm [shape: f32[3,1,32], index: 10, kind: input, shape index: {}]
  %s11 = inlined_call_operand.hbm [shape: f32[32,32], index: 11, kind: input, shape index: {}]
  %s12 = inlined_call_operand.hbm [shape: f32[1,32], index: 12, kind: input, shape index: {}]
  %s13 = inlined_call_operand.vmem [shape: f32[32,16], index: 13, kind: input, shape index: {}]
  %s14 = inlined_call_operand.vmem [shape: f32[1,16], index: 14, kind: input, shape index: {}]
  %s15 = inlined_call_operand.hbm [shape: f32[16,16], index: 15, kind: output, shape index: {}]
  %s16 = sld [smem:[#allocation0]]
  $region110: #{tpu_custom_call.1} parent=0
    _
  %s18 = ssub.s32 1, %s16
  %s19 = scalar_select 0, %s18, %s16
  $region1: #{tpu_custom_call.1} parent=0
    #allocation6 [shape = 'u8[2048]{0}', space=vmem, size = 0x800, scoped, tag = 'input window, operand 1, single buffered']
    #allocation7 [shape = 's32[1]{0}', space=sflag, size = 0x4, scoped, tag = 'scoped memory for tpu_custom_call.1']
    #allocation8 [shape = 's32[1]{0}', space=sflag, size = 0x4, scoped, tag = 'scoped memory for tpu_custom_call.1']
    #allocation9 [shape = 'u8[49152]{0}', space=vmem, size = 0xc000, scoped, tag = 'input window, operand 3, single buffered']
    #allocation10 [shape = 's32[1]{0}', space=sflag, size = 0x4, scoped, tag = 'scoped memory for tpu_custom_call.1']
    #allocation11 [shape = 'u8[49152]{0}', space=vmem, size = 0xc000, scoped, tag = 'input window, operand 4, single buffered']
    #allocation12 [shape = 'u8[1536]{0}', space=vmem, size = 0x800, scoped, tag = 'input window, operand 5, single buffered']
    #allocation13 [shape = 's32[1]{0}', space=sflag, size = 0x4, scoped, tag = 'scoped memory for tpu_custom_call.1']
    #allocation14 [shape = 'u8[1536]{0}', space=vmem, size = 0x800, scoped, tag = 'input window, operand 6, single buffered']
    #allocation15 [shape = 'u8[49152]{0}', space=vmem, size = 0xc000, scoped, tag = 'input window, operand 7, single buffered']
    #allocation16 [shape = 's32[1]{0}', space=sflag, size = 0x4, scoped, tag = 'scoped memory for tpu_custom_call.1']
    #allocation17 [shape = 'u8[1536]{0}', space=vmem, size = 0x800, scoped, tag = 'input window, operand 9, single buffered']
    #allocation18 [shape = 'u8[1536]{0}', space=vmem, size = 0x800, scoped, tag = 'input window, operand 10, single buffered']
    #allocation19 [shape = 's32[1]{0}', space=sflag, size = 0x4, scoped, tag = 'scoped memory for tpu_custom_call.1']
    #allocation20 [shape = 'u8[16384]{0}', space=vmem, size = 0x4000, scoped, tag = 'input window, operand 11, single buffered']
    #allocation21 [shape = 'u8[512]{0}', space=vmem, size = 0x400, scoped, tag = 'input window, operand 12, single buffered']
    #allocation22 [shape = 's32[1]{0}', space=sflag, size = 0x4, scoped, tag = 'scoped memory for tpu_custom_call.1']
    #allocation23 [shape = 'u8[8192]{0}', space=vmem, size = 0x2000, scoped, tag = 'output window, operand 0, single buffered']
    %20 = vsyncpa [#allocation7], 0
    %21 = vsyncpa [#allocation10], 0
    %22 = vsyncpa [#allocation13], 0
    %23 = vsyncpa [#allocation16], 0
    %24 = vsyncpa [#allocation19], 0
    %25 = vsyncpa [#allocation22], 0
    %26 = vsyncpa [#allocation8], 0
    // Predicated region
    $region2: #{tpu_custom_call.1} parent=1 // pred_check
      _
    $region3: #{tpu_custom_call.1} parent=1 // pred_check_branch
      %28 = sbr.rel (0) target = $region5
    $region4: #{tpu_custom_call.1} parent=1 // pred_region
      _
    $region5: #{tpu_custom_call.1} parent=1 // pred_fallthru
      _
    // Predicated region
    $region6: #{tpu_custom_call.1} parent=1 // pred_check
      _
    $region7: #{tpu_custom_call.1} parent=1 // pred_check_branch
      %30 = sbr.rel (0) target = $region9
    $region8: #{tpu_custom_call.1} parent=1 // pred_region
      %s32 = ssub.s32 64, 64
      %33 = vsyncadd [#allocation7], %s32
      %s35 = sshll.u32 [#allocation6], 4
      %s36 = int_to_ptr.vmem [resolvable:$true] %s35
      %38 = dma.hbm_to_vmem [thread:$0]  %s1, 64, %s36, [#allocation7]
    $region9: #{tpu_custom_call.1} parent=1 // pred_fallthru
      _
    // Predicated region
    $region10: #{tpu_custom_call.1} parent=1 // pred_check
      _
    $region11: #{tpu_custom_call.1} parent=1 // pred_check_branch
      %40 = sbr.rel (0) target = $region13
    $region12: #{tpu_custom_call.1} parent=1 // pred_region
      _
    $region13: #{tpu_custom_call.1} parent=1 // pred_fallthru
      _
    // Predicated region
    $region14: #{tpu_custom_call.1} parent=1 // pred_check
      _
    $region15: #{tpu_custom_call.1} parent=1 // pred_check_branch
      %42 = sbr.rel (0) target = $region17
    $region16: #{tpu_custom_call.1} parent=1 // pred_region
      %s44 = ssub.s32 1536, 1536
      %45 = vsyncadd [#allocation10], %s44
      %s46 = sshll.u32 [#allocation9], 4
      %s47 = int_to_ptr.vmem [resolvable:$true] %s46
      %52 = dma.hbm_to_vmem [thread:$0]  %s3, 1536, %s47, [#allocation10], 128, 128, 8
    $region17: #{tpu_custom_call.1} parent=1 // pred_fallthru
      _
    // Predicated region
    $region18: #{tpu_custom_call.1} parent=1 // pred_check
      _
    $region19: #{tpu_custom_call.1} parent=1 // pred_check_branch
      %54 = sbr.rel (0) target = $region21
    $region20: #{tpu_custom_call.1} parent=1 // pred_region
      %s56 = ssub.s32 1536, 1536
      %57 = vsyncadd [#allocation10], %s56
      %s58 = sshll.u32 [#allocation11], 4
      %s59 = int_to_ptr.vmem [resolvable:$true] %s58
      %64 = dma.hbm_to_vmem [thread:$0]  %s4, 1536, %s59, [#allocation10], 128, 128, 8
    $region21: #{tpu_custom_call.1} parent=1 // pred_fallthru
      _
    // Predicated region
    $region22: #{tpu_custom_call.1} parent=1 // pred_check
      _
    $region23: #{tpu_custom_call.1} parent=1 // pred_check_branch
      %66 = sbr.rel (0) target = $region25
    $region24: #{tpu_custom_call.1} parent=1 // pred_region
      %s68 = ssub.s32 48, 48
      %69 = vsyncadd [#allocation13], %s68
      %s70 = sshll.u32 [#allocation12], 4
      %s71 = int_to_ptr.vmem [resolvable:$true] %s70
      %76 = dma.hbm_to_vmem [thread:$0]  %s5, 48, %s71, [#allocation13], 16, 16, 1
    $region25: #{tpu_custom_call.1} parent=1 // pred_fallthru
      _
    // Predicated region
    $region26: #{tpu_custom_call.1} parent=1 // pred_check
      _
    $region27: #{tpu_custom_call.1} parent=1 // pred_check_branch
      %78 = sbr.rel (0) target = $region29
    $region28: #{tpu_custom_call.1} parent=1 // pred_region
      %s80 = ssub.s32 48, 48
      %81 = vsyncadd [#allocation13], %s80
      %s82 = sshll.u32 [#allocation14], 4
      %s83 = int_to_ptr.vmem [resolvable:$true] %s82
      %88 = dma.hbm_to_vmem [thread:$0]  %s6, 48, %s83, [#allocation13], 16, 16, 1
    $region29: #{tpu_custom_call.1} parent=1 // pred_fallthru
      _
    // Predicated region
    $region30: #{tpu_custom_call.1} parent=1 // pred_check
      _
    $region31: #{tpu_custom_call.1} parent=1 // pred_check_branch
      %90 = sbr.rel (0) target = $region33
    $region32: #{tpu_custom_call.1} parent=1 // pred_region
      %s92 = ssub.s32 1536, 1536
      %93 = vsyncadd [#allocation16], %s92
      %s94 = sshll.u32 [#allocation15], 4
      %s95 = int_to_ptr.vmem [resolvable:$true] %s94
      %100 = dma.hbm_to_vmem [thread:$0]  %s7, 1536, %s95, [#allocation16], 128, 128, 8
    $region33: #{tpu_custom_call.1} parent=1 // pred_fallthru
      _
    // Predicated region
    $region34: #{tpu_custom_call.1} parent=1 // pred_check
      _
    $region35: #{tpu_custom_call.1} parent=1 // pred_check_branch
      %102 = sbr.rel (0) target = $region37
    $region36: #{tpu_custom_call.1} parent=1 // pred_region
      _
    $region37: #{tpu_custom_call.1} parent=1 // pred_fallthru
      _
    // Predicated region
    $region38: #{tpu_custom_call.1} parent=1 // pred_check
      _
    $region39: #{tpu_custom_call.1} parent=1 // pred_check_branch
      %104 = sbr.rel (0) target = $region41
    $region40: #{tpu_custom_call.1} parent=1 // pred_region
      %s106 = ssub.s32 48, 48
      %107 = vsyncadd [#allocation16], %s106
      %s108 = sshll.u32 [#allocation17], 4
      %s109 = int_to_ptr.vmem [resolvable:$true] %s108
      %114 = dma.hbm_to_vmem [thread:$0]  %s9, 48, %s109, [#allocation16], 16, 16, 1
    $region41: #{tpu_custom_call.1} parent=1 // pred_fallthru
      _
    // Predicated region
    $region42: #{tpu_custom_call.1} parent=1 // pred_check
      _
    $region43: #{tpu_custom_call.1} parent=1 // pred_check_branch
      %116 = sbr.rel (0) target = $region45
    $region44: #{tpu_custom_call.1} parent=1 // pred_region
      %s118 = ssub.s32 48, 48
      %119 = vsyncadd [#allocation19], %s118
      %s120 = sshll.u32 [#allocation18], 4
      %s121 = int_to_ptr.vmem [resolvable:$true] %s120
      %126 = dma.hbm_to_vmem [thread:$0]  %s10, 48, %s121, [#allocation19], 16, 16, 1
    $region45: #{tpu_custom_call.1} parent=1 // pred_fallthru
      _
    // Predicated region
    $region46: #{tpu_custom_call.1} parent=1 // pred_check
      _
    $region47: #{tpu_custom_call.1} parent=1 // pred_check_branch
      %128 = sbr.rel (0) target = $region49
    $region48: #{tpu_custom_call.1} parent=1 // pred_region
      %s130 = ssub.s32 512, 512
      %131 = vsyncadd [#allocation19], %s130
      %s132 = sshll.u32 [#allocation20], 4
      %s133 = int_to_ptr.vmem [resolvable:$true] %s132
      %138 = dma.hbm_to_vmem [thread:$0]  %s11, 512, %s133, [#allocation19], 128, 128, 8
    $region49: #{tpu_custom_call.1} parent=1 // pred_fallthru
      _
    // Predicated region
    $region50: #{tpu_custom_call.1} parent=1 // pred_check
      _
    $region51: #{tpu_custom_call.1} parent=1 // pred_check_branch
      %140 = sbr.rel (0) target = $region53
    $region52: #{tpu_custom_call.1} parent=1 // pred_region
      %s142 = ssub.s32 16, 16
      %143 = vsyncadd [#allocation22], %s142
      %s145 = sshll.u32 [#allocation21], 4
      %s146 = int_to_ptr.vmem [resolvable:$true] %s145
      %148 = dma.hbm_to_vmem [thread:$0]  %s12, 16, %s146, [#allocation22]
    $region53: #{tpu_custom_call.1} parent=1 // pred_fallthru
      _
    // Predicated region
    $region54: #{tpu_custom_call.1} parent=1 // pred_check
      _
    $region55: #{tpu_custom_call.1} parent=1 // pred_check_branch
      %150 = sbr.rel (0) target = $region57
    $region56: #{tpu_custom_call.1} parent=1 // pred_region
      _
    $region57: #{tpu_custom_call.1} parent=1 // pred_fallthru
      _
    // Predicated region
    $region58: #{tpu_custom_call.1} parent=1 // pred_check
      _
    $region59: #{tpu_custom_call.1} parent=1 // pred_check_branch
      %152 = sbr.rel (0) target = $region61
    $region60: #{tpu_custom_call.1} parent=1 // pred_region
      _
    $region61: #{tpu_custom_call.1} parent=1 // pred_fallthru
      _
    // Predicated region
    $region62: #{tpu_custom_call.1} parent=1 // pred_check
      _
    $region63: #{tpu_custom_call.1} parent=1 // pred_check_branch
      %154 = sbr.rel (0) target = $region65
    $region64: #{tpu_custom_call.1} parent=1 // pred_region
      %155 = dma.done [#allocation7], 64
    $region65: #{tpu_custom_call.1} parent=1 // pred_fallthru
      _
    // Predicated region
    $region66: #{tpu_custom_call.1} parent=1 // pred_check
      _
    $region67: #{tpu_custom_call.1} parent=1 // pred_check_branch
      %157 = sbr.rel (0) target = $region69
    $region68: #{tpu_custom_call.1} parent=1 // pred_region
      %158 = dma.done [#allocation10], 1536
    $region69: #{tpu_custom_call.1} parent=1 // pred_fallthru
      _
    // Predicated region
    $region70: #{tpu_custom_call.1} parent=1 // pred_check
      _
    $region71: #{tpu_custom_call.1} parent=1 // pred_check_branch
      %160 = sbr.rel (0) target = $region73
    $region72: #{tpu_custom_call.1} parent=1 // pred_region
      %161 = dma.done [#allocation10], 1536
    $region73: #{tpu_custom_call.1} parent=1 // pred_fallthru
      _
    // Predicated region
    $region74: #{tpu_custom_call.1} parent=1 // pred_check
      _
    $region75: #{tpu_custom_call.1} parent=1 // pred_check_branch
      %163 = sbr.rel (0) target = $region77
    $region76: #{tpu_custom_call.1} parent=1 // pred_region
      %164 = dma.done [#allocation13], 48
    $region77: #{tpu_custom_call.1} parent=1 // pred_fallthru
      _
    // Predicated region
    $region78: #{tpu_custom_call.1} parent=1 // pred_check
      _
    $region79: #{tpu_custom_call.1} parent=1 // pred_check_branch
      %166 = sbr.rel (0) target = $region81
    $region80: #{tpu_custom_call.1} parent=1 // pred_region
      %167 = dma.done [#allocation13], 48
    $region81: #{tpu_custom_call.1} parent=1 // pred_fallthru
      _
    // Predicated region
    $region82: #{tpu_custom_call.1} parent=1 // pred_check
      _
    $region83: #{tpu_custom_call.1} parent=1 // pred_check_branch
      %169 = sbr.rel (0) target = $region85
    $region84: #{tpu_custom_call.1} parent=1 // pred_region
      %170 = dma.done [#allocation16], 1536
    $region85: #{tpu_custom_call.1} parent=1 // pred_fallthru
      _
    // Predicated region
    $region86: #{tpu_custom_call.1} parent=1 // pred_check
      _
    $region87: #{tpu_custom_call.1} parent=1 // pred_check_branch
      %172 = sbr.rel (0) target = $region89
    $region88: #{tpu_custom_call.1} parent=1 // pred_region
      %173 = dma.done [#allocation16], 48
    $region89: #{tpu_custom_call.1} parent=1 // pred_fallthru
      _
    // Predicated region
    $region90: #{tpu_custom_call.1} parent=1 // pred_check
      _
    $region91: #{tpu_custom_call.1} parent=1 // pred_check_branch
      %175 = sbr.rel (0) target = $region93
    $region92: #{tpu_custom_call.1} parent=1 // pred_region
      %176 = dma.done [#allocation19], 48
    $region93: #{tpu_custom_call.1} parent=1 // pred_fallthru
      _
    // Predicated region
    $region94: #{tpu_custom_call.1} parent=1 // pred_check
      _
    $region95: #{tpu_custom_call.1} parent=1 // pred_check_branch
      %178 = sbr.rel (0) target = $region97
    $region96: #{tpu_custom_call.1} parent=1 // pred_region
      %179 = dma.done [#allocation19], 512
    $region97: #{tpu_custom_call.1} parent=1 // pred_fallthru
      _
    // Predicated region
    $region98: #{tpu_custom_call.1} parent=1 // pred_check
      _
    $region99: #{tpu_custom_call.1} parent=1 // pred_check_branch
      %181 = sbr.rel (0) target = $region101
    $region100: #{tpu_custom_call.1} parent=1 // pred_region
      %182 = dma.done [#allocation22], 16
    $region101: #{tpu_custom_call.1} parent=1 // pred_fallthru
      _
    %v184 = vld [vmem:[%s0] sm:$0xff]
    %v185 = vld [vmem:[%s0 + $0x8] sm:$0xff]
    %v186 = vld [vmem:[#allocation6] sm:$0xf]
    %v187 = vpack.c.bf16 %v185, %v184
    %v188 = vpack.c.bf16 %v186, %v186
    %v189 = vld [vmem:[%s2] sm:$0x1]
    %v191 = vlaneseq
    %v192 = vshrl.u32 %v191, 7
    %v193 = vsub.s32 0, %v192
    %v194 = vrot.slane %v189, %v193
    %vm196 = vcmask 31744
    %v198 = vsel %vm196, %v187, 0
    %vm200 = vcmask 1041408
    %v202 = vsel %vm200, %v188, 0
    %204 = vmatprep.subr.bf16.mxu0 0
    %205 = vmatpush1.bf16.msra.mxu0 %v202
    %206 = vmatprep.subr.bf16.mxu0 0
    %207 = vmatpush1.bf16.msra.mxu0 0
    %208 = vmatprep.subr.bf16.mxu0 0
    %209 = vmatpush1.bf16.msra.mxu0 0
    %210 = vmatprep.subr.bf16.mxu0 0
    %211 = vmatpush1.bf16.msra.mxu0 0
    %212 = vmatprep.subr.bf16.mxu0 0
    %213 = vmatpush1.bf16.msra.mxu0 0
    %214 = vmatprep.subr.bf16.mxu0 0
    %215 = vmatpush1.bf16.msra.mxu0 0
    %216 = vmatprep.subr.bf16.mxu0 0
    %217 = vmatpush1.bf16.msra.mxu0 0
    %218 = vmatprep.subr.bf16.mxu0 0
    %219 = vmatpush1.bf16.msra.mxu0 0
    %220 = vmatprep.subr.bf16.mxu0 0
    %221 = vmatpush1.bf16.msra.mxu0 0
    %222 = vmatprep.subr.bf16.mxu0 0
    %223 = vmatpush1.bf16.msra.mxu0 0
    %224 = vmatprep.subr.bf16.mxu0 0
    %225 = vmatpush1.bf16.msra.mxu0 0
    %226 = vmatprep.subr.bf16.mxu0 0
    %227 = vmatpush1.bf16.msra.mxu0 0
    %228 = vmatprep.subr.bf16.mxu0 0
    %229 = vmatpush1.bf16.msra.mxu0 0
    %230 = vmatprep.subr.bf16.mxu0 0
    %231 = vmatpush1.bf16.msra.mxu0 0
    %232 = vmatprep.subr.bf16.mxu0 0
    %233 = vmatpush1.bf16.msra.mxu0 0
    %234 = vmatprep.subr.bf16.mxu0 0
    %235 = vmatpush1.bf16.msra.mxu0 0
    %236 = vmatprep.mubr.bf16.mxu0 0
    %237 = vmatmul.mubr.bf16.gmra.mrb[0].mxu0 %v198
    %v238 = vpop.f32.mrb[0].mxu0
    %v239 = vadd.f32 %v194, %v238
    %v240 = vpop.f32.mrb[0].mxu0
    %v241 = vpop.f32.mrb[0].mxu0
    %v242 = vadd.f32 %v194, %v241
    %v243 = vpop.f32.mrb[0].mxu0
    %244 = vdwg.mxu0
    %v245 = vld [vmem:[#allocation9] sm:$0xff]
    %v246 = vld [vmem:[#allocation9 + $0x8] sm:$0xff]
    %v247 = vld [vmem:[#allocation9 + $0x10] sm:$0xff]
    %v248 = vld [vmem:[#allocation9 + $0x18] sm:$0xff]
    %v249 = vpack.c.bf16 %v242, %v239
    %v250 = vpack.c.bf16 %v246, %v245
    %v251 = vpack.c.bf16 %v248, %v247
    %v252 = vld [vmem:[#allocation12] sm:$0x1]
    %v254 = vlaneseq
    %v255 = vshrl.u32 %v254, 7
    %v256 = vsub.s32 0, %v255
    %v257 = vrot.slane %v252, %v256
    %vm259 = vcmask 261120
    %v261 = vsel %vm259, %v249, 0
    %263 = vmatprep.subr.bf16.mxu0 0
    %264 = vmatpush1.bf16.msra.mxu0 %v250
    %265 = vmatprep.subr.bf16.mxu0 0
    %266 = vmatpush1.bf16.msra.mxu0 %v251
    %267 = vmatprep.subr.bf16.mxu0 0
    %268 = vmatpush1.bf16.msra.mxu0 0
    %269 = vmatprep.subr.bf16.mxu0 0
    %270 = vmatpush1.bf16.msra.mxu0 0
    %271 = vmatprep.subr.bf16.mxu0 0
    %272 = vmatpush1.bf16.msra.mxu0 0
    %273 = vmatprep.subr.bf16.mxu0 0
    %274 = vmatpush1.bf16.msra.mxu0 0
    %275 = vmatprep.subr.bf16.mxu0 0
    %276 = vmatpush1.bf16.msra.mxu0 0
    %277 = vmatprep.subr.bf16.mxu0 0
    %278 = vmatpush1.bf16.msra.mxu0 0
    %279 = vmatprep.subr.bf16.mxu0 0
    %280 = vmatpush1.bf16.msra.mxu0 0
    %281 = vmatprep.subr.bf16.mxu0 0
    %282 = vmatpush1.bf16.msra.mxu0 0
    %283 = vmatprep.subr.bf16.mxu0 0
    %284 = vmatpush1.bf16.msra.mxu0 0
    %285 = vmatprep.subr.bf16.mxu0 0
    %286 = vmatpush1.bf16.msra.mxu0 0
    %287 = vmatprep.subr.bf16.mxu0 0
    %288 = vmatpush1.bf16.msra.mxu0 0
    %289 = vmatprep.subr.bf16.mxu0 0
    %290 = vmatpush1.bf16.msra.mxu0 0
    %291 = vmatprep.subr.bf16.mxu0 0
    %292 = vmatpush1.bf16.msra.mxu0 0
    %293 = vmatprep.subr.bf16.mxu0 0
    %294 = vmatpush1.bf16.msra.mxu0 0
    %295 = vmatprep.mubr.bf16.mxu0 0
    %296 = vmatmul.mubr.bf16.gmra.mrb[0].mxu0 %v261
    %v297 = vpop.f32.mrb[0].mxu0
    %v298 = vadd.f32 %v257, %v297
    %v299 = vpop.f32.mrb[0].mxu0
    %v300 = vpop.f32.mrb[0].mxu0
    %v301 = vadd.f32 %v257, %v300
    %v302 = vpop.f32.mrb[0].mxu0
    %303 = vdwg.mxu0
    %304 = vst.msk [vmem:[#allocation2] sm:$0xff] %vm259, %v298
    %305 = vst.msk [vmem:[#allocation2 + $0x8] sm:$0xff] %vm259, %v301
    %s306 = scalar_lea.vmem [#allocation9], 32
    %v307 = vld [vmem:[%s306] sm:$0xff]
    %v308 = vld [vmem:[%s306 + $0x8] sm:$0xff]
    %v309 = vld [vmem:[%s306 + $0x10] sm:$0xff]
    %v310 = vld [vmem:[%s306 + $0x18] sm:$0xff]
    %v311 = vpack.c.bf16 %v308, %v307
    %v312 = vpack.c.bf16 %v310, %v309
    %s313 = scalar_lea.vmem [#allocation12], 1
    %v314 = vld [vmem:[%s313] sm:$0x1]
    %v316 = vlaneseq
    %v317 = vshrl.u32 %v316, 7
    %v318 = vsub.s32 0, %v317
    %v319 = vrot.slane %v314, %v318
    %321 = vmatprep.subr.bf16.mxu0 0
    %322 = vmatpush1.bf16.msra.mxu0 %v311
    %323 = vmatprep.subr.bf16.mxu0 0
    %324 = vmatpush1.bf16.msra.mxu0 %v312
    %325 = vmatprep.subr.bf16.mxu0 0
    %326 = vmatpush1.bf16.msra.mxu0 0
    %327 = vmatprep.subr.bf16.mxu0 0
    %328 = vmatpush1.bf16.msra.mxu0 0
    %329 = vmatprep.subr.bf16.mxu0 0
    %330 = vmatpush1.bf16.msra.mxu0 0
    %331 = vmatprep.subr.bf16.mxu0 0
    %332 = vmatpush1.bf16.msra.mxu0 0
    %333 = vmatprep.subr.bf16.mxu0 0
    %334 = vmatpush1.bf16.msra.mxu0 0
    %335 = vmatprep.subr.bf16.mxu0 0
    %336 = vmatpush1.bf16.msra.mxu0 0
    %337 = vmatprep.subr.bf16.mxu0 0
    %338 = vmatpush1.bf16.msra.mxu0 0
    %339 = vmatprep.subr.bf16.mxu0 0
    %340 = vmatpush1.bf16.msra.mxu0 0
    %341 = vmatprep.subr.bf16.mxu0 0
    %342 = vmatpush1.bf16.msra.mxu0 0
    %343 = vmatprep.subr.bf16.mxu0 0
    %344 = vmatpush1.bf16.msra.mxu0 0
    %345 = vmatprep.subr.bf16.mxu0 0
    %346 = vmatpush1.bf16.msra.mxu0 0
    %347 = vmatprep.subr.bf16.mxu0 0
    %348 = vmatpush1.bf16.msra.mxu0 0
    %349 = vmatprep.subr.bf16.mxu0 0
    %350 = vmatpush1.bf16.msra.mxu0 0
    %351 = vmatprep.subr.bf16.mxu0 0
    %352 = vmatpush1.bf16.msra.mxu0 0
    %353 = vmatprep.mubr.bf16.mxu0 0
    %354 = vmatmul.mubr.bf16.gmra.mrb[0].mxu0 %v261
    %v355 = vpop.f32.mrb[0].mxu0
    %v356 = vadd.f32 %v319, %v355
    %v357 = vpop.f32.mrb[0].mxu0
    %v358 = vpop.f32.mrb[0].mxu0
    %v359 = vadd.f32 %v319, %v358
    %v360 = vpop.f32.mrb[0].mxu0
    %361 = vdwg.mxu0
    %362 = vst.msk [vmem:[#allocation3] sm:$0xff] %vm259, %v356
    %363 = vst.msk [vmem:[#allocation3 + $0x8] sm:$0xff] %vm259, %v359
    %s364 = scalar_lea.vmem [#allocation9], 64
    %v365 = vld [vmem:[%s364] sm:$0xff]
    %v366 = vld [vmem:[%s364 + $0x8] sm:$0xff]
    %v367 = vld [vmem:[%s364 + $0x10] sm:$0xff]
    %v368 = vld [vmem:[%s364 + $0x18] sm:$0xff]
    %v369 = vpack.c.bf16 %v366, %v365
    %v370 = vpack.c.bf16 %v368, %v367
    %s371 = scalar_lea.vmem [#allocation12], 2
    %v372 = vld [vmem:[%s371] sm:$0x1]
    %v374 = vlaneseq
    %v375 = vshrl.u32 %v374, 7
    %v376 = vsub.s32 0, %v375
    %v377 = vrot.slane %v372, %v376
    %379 = vmatprep.subr.bf16.mxu0 0
    %380 = vmatpush1.bf16.msra.mxu0 %v369
    %381 = vmatprep.subr.bf16.mxu0 0
    %382 = vmatpush1.bf16.msra.mxu0 %v370
    %383 = vmatprep.subr.bf16.mxu0 0
    %384 = vmatpush1.bf16.msra.mxu0 0
    %385 = vmatprep.subr.bf16.mxu0 0
    %386 = vmatpush1.bf16.msra.mxu0 0
    %387 = vmatprep.subr.bf16.mxu0 0
    %388 = vmatpush1.bf16.msra.mxu0 0
    %389 = vmatprep.subr.bf16.mxu0 0
    %390 = vmatpush1.bf16.msra.mxu0 0
    %391 = vmatprep.subr.bf16.mxu0 0
    %392 = vmatpush1.bf16.msra.mxu0 0
    %393 = vmatprep.subr.bf16.mxu0 0
    %394 = vmatpush1.bf16.msra.mxu0 0
    %395 = vmatprep.subr.bf16.mxu0 0
    %396 = vmatpush1.bf16.msra.mxu0 0
    %397 = vmatprep.subr.bf16.mxu0 0
    %398 = vmatpush1.bf16.msra.mxu0 0
    %399 = vmatprep.subr.bf16.mxu0 0
    %400 = vmatpush1.bf16.msra.mxu0 0
    %401 = vmatprep.subr.bf16.mxu0 0
    %402 = vmatpush1.bf16.msra.mxu0 0
    %403 = vmatprep.subr.bf16.mxu0 0
    %404 = vmatpush1.bf16.msra.mxu0 0
    %405 = vmatprep.subr.bf16.mxu0 0
    %406 = vmatpush1.bf16.msra.mxu0 0
    %407 = vmatprep.subr.bf16.mxu0 0
    %408 = vmatpush1.bf16.msra.mxu0 0
    %409 = vmatprep.subr.bf16.mxu0 0
    %410 = vmatpush1.bf16.msra.mxu0 0
    %411 = vmatprep.mubr.bf16.mxu0 0
    %412 = vmatmul.mubr.bf16.gmra.mrb[0].mxu0 %v261
    %v413 = vpop.f32.mrb[0].mxu0
    %v414 = vadd.f32 %v377, %v413
    %v415 = vpop.f32.mrb[0].mxu0
    %v416 = vpop.f32.mrb[0].mxu0
    %v417 = vadd.f32 %v377, %v416
    %v418 = vpop.f32.mrb[0].mxu0
    %419 = vdwg.mxu0
    %420 = vst.msk [vmem:[#allocation4] sm:$0xff] %vm259, %v414
    %421 = vst.msk [vmem:[#allocation4 + $0x8] sm:$0xff] %vm259, %v417
    %v422 = vld [vmem:[#allocation11] sm:$0xff]
    %v423 = vld [vmem:[#allocation11 + $0x8] sm:$0xff]
    %v424 = vld [vmem:[#allocation11 + $0x10] sm:$0xff]
    %v425 = vld [vmem:[#allocation11 + $0x18] sm:$0xff]
    %v426 = vpack.c.bf16 %v423, %v422
    %v427 = vpack.c.bf16 %v425, %v424
    %s428 = scalar_lea.vmem [#allocation11], 32
    %v429 = vld [vmem:[%s428] sm:$0xff]
    %v430 = vld [vmem:[%s428 + $0x8] sm:$0xff]
    %v431 = vld [vmem:[%s428 + $0x10] sm:$0xff]
    %v432 = vld [vmem:[%s428 + $0x18] sm:$0xff]
    %v433 = vpack.c.bf16 %v430, %v429
    %v434 = vpack.c.bf16 %v432, %v431
    %s435 = scalar_lea.vmem [#allocation11], 64
    %v436 = vld [vmem:[%s435] sm:$0xff]
    %v437 = vld [vmem:[%s435 + $0x8] sm:$0xff]
    %v438 = vld [vmem:[%s435 + $0x10] sm:$0xff]
    %v439 = vld [vmem:[%s435 + $0x18] sm:$0xff]
    %v440 = vpack.c.bf16 %v437, %v436
    %v441 = vpack.c.bf16 %v439, %v438
    %v442 = vld [vmem:[#allocation14] sm:$0x1]
    %s443 = scalar_lea.vmem [#allocation14], 1
    %v444 = vld [vmem:[%s443] sm:$0x1]
    %s445 = scalar_lea.vmem [#allocation14], 2
    %v446 = vld [vmem:[%s445] sm:$0x1]
    %v447 = vld [vmem:[#allocation2] sm:$0x3]
    %v448 = vld [vmem:[#allocation3] sm:$0x3]
    %v449 = vld [vmem:[#allocation4] sm:$0x3]
    %v451 = vlaneseq
    %v452 = vshrl.u32 %v451, 7
    %v453 = vsub.s32 0, %v452
    %v454 = vrot.slane %v442, %v453
    %v457 = vsel %vm259, 0, 0
    %459 = vmatprep.subr.bf16.mxu0 0
    %460 = vmatpush1.bf16.msra.mxu0 %v426
    %461 = vmatprep.subr.bf16.mxu0 0
    %462 = vmatpush1.bf16.msra.mxu0 %v427
    %463 = vmatprep.subr.bf16.mxu0 0
    %464 = vmatpush1.bf16.msra.mxu0 0
    %465 = vmatprep.subr.bf16.mxu0 0
    %466 = vmatpush1.bf16.msra.mxu0 0
    %467 = vmatprep.subr.bf16.mxu0 0
    %468 = vmatpush1.bf16.msra.mxu0 0
    %469 = vmatprep.subr.bf16.mxu0 0
    %470 = vmatpush1.bf16.msra.mxu0 0
    %471 = vmatprep.subr.bf16.mxu0 0
    %472 = vmatpush1.bf16.msra.mxu0 0
    %473 = vmatprep.subr.bf16.mxu0 0
    %474 = vmatpush1.bf16.msra.mxu0 0
    %475 = vmatprep.subr.bf16.mxu0 0
    %476 = vmatpush1.bf16.msra.mxu0 0
    %477 = vmatprep.subr.bf16.mxu0 0
    %478 = vmatpush1.bf16.msra.mxu0 0
    %479 = vmatprep.subr.bf16.mxu0 0
    %480 = vmatpush1.bf16.msra.mxu0 0
    %481 = vmatprep.subr.bf16.mxu0 0
    %482 = vmatpush1.bf16.msra.mxu0 0
    %483 = vmatprep.subr.bf16.mxu0 0
    %484 = vmatpush1.bf16.msra.mxu0 0
    %485 = vmatprep.subr.bf16.mxu0 0
    %486 = vmatpush1.bf16.msra.mxu0 0
    %487 = vmatprep.subr.bf16.mxu0 0
    %488 = vmatpush1.bf16.msra.mxu0 0
    %489 = vmatprep.subr.bf16.mxu0 0
    %490 = vmatpush1.bf16.msra.mxu0 0
    %491 = vmatprep.mubr.bf16.mxu0 0
    %492 = vmatmul.mubr.bf16.gmra.mrb[0].mxu0 %v457
    %v493 = vpop.f32.mrb[0].mxu0
    %v494 = vadd.f32 %v454, %v493
    %v495 = vpop.f32.mrb[0].mxu0
    %v496 = vpop.f32.mrb[0].mxu0
    %v497 = vpop.f32.mrb[0].mxu0
    %498 = vdwg.mxu0
    %v500 = vlaneseq
    %v501 = vshrl.u32 %v500, 7
    %v502 = vsub.s32 0, %v501
    %v503 = vrot.slane %v444, %v502
    %505 = vmatprep.subr.bf16.mxu0 0
    %506 = vmatpush1.bf16.msra.mxu0 %v433
    %507 = vmatprep.subr.bf16.mxu0 0
    %508 = vmatpush1.bf16.msra.mxu0 %v434
    %509 = vmatprep.subr.bf16.mxu0 0
    %510 = vmatpush1.bf16.msra.mxu0 0
    %511 = vmatprep.subr.bf16.mxu0 0
    %512 = vmatpush1.bf16.msra.mxu0 0
    %513 = vmatprep.subr.bf16.mxu0 0
    %514 = vmatpush1.bf16.msra.mxu0 0
    %515 = vmatprep.subr.bf16.mxu0 0
    %516 = vmatpush1.bf16.msra.mxu0 0
    %517 = vmatprep.subr.bf16.mxu0 0
    %518 = vmatpush1.bf16.msra.mxu0 0
    %519 = vmatprep.subr.bf16.mxu0 0
    %520 = vmatpush1.bf16.msra.mxu0 0
    %521 = vmatprep.subr.bf16.mxu0 0
    %522 = vmatpush1.bf16.msra.mxu0 0
    %523 = vmatprep.subr.bf16.mxu0 0
    %524 = vmatpush1.bf16.msra.mxu0 0
    %525 = vmatprep.subr.bf16.mxu0 0
    %526 = vmatpush1.bf16.msra.mxu0 0
    %527 = vmatprep.subr.bf16.mxu0 0
    %528 = vmatpush1.bf16.msra.mxu0 0
    %529 = vmatprep.subr.bf16.mxu0 0
    %530 = vmatpush1.bf16.msra.mxu0 0
    %531 = vmatprep.subr.bf16.mxu0 0
    %532 = vmatpush1.bf16.msra.mxu0 0
    %533 = vmatprep.subr.bf16.mxu0 0
    %534 = vmatpush1.bf16.msra.mxu0 0
    %535 = vmatprep.subr.bf16.mxu0 0
    %536 = vmatpush1.bf16.msra.mxu0 0
    %537 = vmatprep.mubr.bf16.mxu0 0
    %538 = vmatmul.mubr.bf16.gmra.mrb[0].mxu0 %v457
    %v539 = vpop.f32.mrb[0].mxu0
    %v540 = vadd.f32 %v503, %v539
    %v541 = vpop.f32.mrb[0].mxu0
    %v542 = vpop.f32.mrb[0].mxu0
    %v543 = vpop.f32.mrb[0].mxu0
    %544 = vdwg.mxu0
    %v546 = vlaneseq
    %v547 = vshrl.u32 %v546, 7
    %v548 = vsub.s32 0, %v547
    %v549 = vrot.slane %v446, %v548
    %551 = vmatprep.subr.bf16.mxu0 0
    %552 = vmatpush1.bf16.msra.mxu0 %v440
    %553 = vmatprep.subr.bf16.mxu0 0
    %554 = vmatpush1.bf16.msra.mxu0 %v441
    %555 = vmatprep.subr.bf16.mxu0 0
    %556 = vmatpush1.bf16.msra.mxu0 0
    %557 = vmatprep.subr.bf16.mxu0 0
    %558 = vmatpush1.bf16.msra.mxu0 0
    %559 = vmatprep.subr.bf16.mxu0 0
    %560 = vmatpush1.bf16.msra.mxu0 0
    %561 = vmatprep.subr.bf16.mxu0 0
    %562 = vmatpush1.bf16.msra.mxu0 0
    %563 = vmatprep.subr.bf16.mxu0 0
    %564 = vmatpush1.bf16.msra.mxu0 0
    %565 = vmatprep.subr.bf16.mxu0 0
    %566 = vmatpush1.bf16.msra.mxu0 0
    %567 = vmatprep.subr.bf16.mxu0 0
    %568 = vmatpush1.bf16.msra.mxu0 0
    %569 = vmatprep.subr.bf16.mxu0 0
    %570 = vmatpush1.bf16.msra.mxu0 0
    %571 = vmatprep.subr.bf16.mxu0 0
    %572 = vmatpush1.bf16.msra.mxu0 0
    %573 = vmatprep.subr.bf16.mxu0 0
    %574 = vmatpush1.bf16.msra.mxu0 0
    %575 = vmatprep.subr.bf16.mxu0 0
    %576 = vmatpush1.bf16.msra.mxu0 0
    %577 = vmatprep.subr.bf16.mxu0 0
    %578 = vmatpush1.bf16.msra.mxu0 0
    %579 = vmatprep.subr.bf16.mxu0 0
    %580 = vmatpush1.bf16.msra.mxu0 0
    %581 = vmatprep.subr.bf16.mxu0 0
    %582 = vmatpush1.bf16.msra.mxu0 0
    %583 = vmatprep.mubr.bf16.mxu0 0
    %584 = vmatmul.mubr.bf16.gmra.mrb[0].mxu0 %v457
    %v585 = vpop.f32.mrb[0].mxu0
    %v586 = vadd.f32 %v549, %v585
    %v587 = vpop.f32.mrb[0].mxu0
    %v588 = vpop.f32.mrb[0].mxu0
    %v589 = vpop.f32.mrb[0].mxu0
    %590 = vdwg.mxu0
    %v591 = vadd.f32 %v447, %v494
    %v592 = vxor.u32 %v591, 2147483648
    %v593 = vmul.f32 %v592, 1.442695
    %v594 = vpow.pop %v593
    %v595 = vadd.f32 %v594, 1.0
    %v596 = vrcp.pop %v595
    %v597 = vmul.f32 1.0, %v596
    %v598 = vadd.f32 %v448, %v540
    %v599 = vxor.u32 %v598, 2147483648
    %v600 = vmul.f32 %v599, 1.442695
    %v601 = vpow.pop %v600
    %v602 = vadd.f32 %v601, 1.0
    %v603 = vrcp.pop %v602
    %v604 = vmul.f32 1.0, %v603
    %v605 = vmul.f32 %v597, %v586
    %v606 = vadd.f32 %v449, %v605
    %v607 = vtanh.pop %v606
    %v608 = vsub.f32 1.0, %v604
    %v609 = vmul.f32 %v608, %v607
    %v610 = vmul.f32 %v604, 0.0
    %v611 = vadd.f32 %v609, %v610
    %vm612 = vcmask 254976
    %613 = vst.msk [vmem:[#allocation5] sm:$0x3] %vm612, %v611
    %s614 = scalar_lea.vmem [#allocation2], 2
    %v615 = vld [vmem:[%s614] sm:$0x3]
    %s616 = scalar_lea.vmem [#allocation3], 2
    %v617 = vld [vmem:[%s616] sm:$0x3]
    %s618 = scalar_lea.vmem [#allocation4], 2
    %v619 = vld [vmem:[%s618] sm:$0x3]
    %v620 = vpack.c.bf16 %v611, %v611
    %v622 = vsel %vm259, %v620, 0
    %624 = vmatprep.subr.bf16.mxu0 0
    %625 = vmatpush1.bf16.msra.mxu0 %v426
    %626 = vmatprep.subr.bf16.mxu0 0
    %627 = vmatpush1.bf16.msra.mxu0 %v427
    %628 = vmatprep.subr.bf16.mxu0 0
    %629 = vmatpush1.bf16.msra.mxu0 0
    %630 = vmatprep.subr.bf16.mxu0 0
    %631 = vmatpush1.bf16.msra.mxu0 0
    %632 = vmatprep.subr.bf16.mxu0 0
    %633 = vmatpush1.bf16.msra.mxu0 0
    %634 = vmatprep.subr.bf16.mxu0 0
    %635 = vmatpush1.bf16.msra.mxu0 0
    %636 = vmatprep.subr.bf16.mxu0 0
    %637 = vmatpush1.bf16.msra.mxu0 0
    %638 = vmatprep.subr.bf16.mxu0 0
    %639 = vmatpush1.bf16.msra.mxu0 0
    %640 = vmatprep.subr.bf16.mxu0 0
    %641 = vmatpush1.bf16.msra.mxu0 0
    %642 = vmatprep.subr.bf16.mxu0 0
    %643 = vmatpush1.bf16.msra.mxu0 0
    %644 = vmatprep.subr.bf16.mxu0 0
    %645 = vmatpush1.bf16.msra.mxu0 0
    %646 = vmatprep.subr.bf16.mxu0 0
    %647 = vmatpush1.bf16.msra.mxu0 0
    %648 = vmatprep.subr.bf16.mxu0 0
    %649 = vmatpush1.bf16.msra.mxu0 0
    %650 = vmatprep.subr.bf16.mxu0 0
    %651 = vmatpush1.bf16.msra.mxu0 0
    %652 = vmatprep.subr.bf16.mxu0 0
    %653 = vmatpush1.bf16.msra.mxu0 0
    %654 = vmatprep.subr.bf16.mxu0 0
    %655 = vmatpush1.bf16.msra.mxu0 0
    %656 = vmatprep.mubr.bf16.mxu0 0
    %657 = vmatmul.mubr.bf16.gmra.mrb[0].mxu0 %v622
    %v658 = vpop.f32.mrb[0].mxu0
    %v659 = vadd.f32 %v454, %v658
    %v660 = vpop.f32.mrb[0].mxu0
    %v661 = vpop.f32.mrb[0].mxu0
    %v662 = vpop.f32.mrb[0].mxu0
    %663 = vdwg.mxu0
    %664 = vmatprep.subr.bf16.mxu0 0
    %665 = vmatpush1.bf16.msra.mxu0 %v433
    %666 = vmatprep.subr.bf16.mxu0 0
    %667 = vmatpush1.bf16.msra.mxu0 %v434
    %668 = vmatprep.subr.bf16.mxu0 0
    %669 = vmatpush1.bf16.msra.mxu0 0
    %670 = vmatprep.subr.bf16.mxu0 0
    %671 = vmatpush1.bf16.msra.mxu0 0
    %672 = vmatprep.subr.bf16.mxu0 0
    %673 = vmatpush1.bf16.msra.mxu0 0
    %674 = vmatprep.subr.bf16.mxu0 0
    %675 = vmatpush1.bf16.msra.mxu0 0
    %676 = vmatprep.subr.bf16.mxu0 0
    %677 = vmatpush1.bf16.msra.mxu0 0
    %678 = vmatprep.subr.bf16.mxu0 0
    %679 = vmatpush1.bf16.msra.mxu0 0
    %680 = vmatprep.subr.bf16.mxu0 0
    %681 = vmatpush1.bf16.msra.mxu0 0
    %682 = vmatprep.subr.bf16.mxu0 0
    %683 = vmatpush1.bf16.msra.mxu0 0
    %684 = vmatprep.subr.bf16.mxu0 0
    %685 = vmatpush1.bf16.msra.mxu0 0
    %686 = vmatprep.subr.bf16.mxu0 0
    %687 = vmatpush1.bf16.msra.mxu0 0
    %688 = vmatprep.subr.bf16.mxu0 0
    %689 = vmatpush1.bf16.msra.mxu0 0
    %690 = vmatprep.subr.bf16.mxu0 0
    %691 = vmatpush1.bf16.msra.mxu0 0
    %692 = vmatprep.subr.bf16.mxu0 0
    %693 = vmatpush1.bf16.msra.mxu0 0
    %694 = vmatprep.subr.bf16.mxu0 0
    %695 = vmatpush1.bf16.msra.mxu0 0
    %696 = vmatprep.mubr.bf16.mxu0 0
    %697 = vmatmul.mubr.bf16.gmra.mrb[0].mxu0 %v622
    %v698 = vpop.f32.mrb[0].mxu0
    %v699 = vadd.f32 %v503, %v698
    %v700 = vpop.f32.mrb[0].mxu0
    %v701 = vpop.f32.mrb[0].mxu0
    %v702 = vpop.f32.mrb[0].mxu0
    %703 = vdwg.mxu0
    %704 = vmatprep.subr.bf16.mxu0 0
    %705 = vmatpush1.bf16.msra.mxu0 %v440
    %706 = vmatprep.subr.bf16.mxu0 0
    %707 = vmatpush1.bf16.msra.mxu0 %v441
    %708 = vmatprep.subr.bf16.mxu0 0
    %709 = vmatpush1.bf16.msra.mxu0 0
    %710 = vmatprep.subr.bf16.mxu0 0
    %711 = vmatpush1.bf16.msra.mxu0 0
    %712 = vmatprep.subr.bf16.mxu0 0
    %713 = vmatpush1.bf16.msra.mxu0 0
    %714 = vmatprep.subr.bf16.mxu0 0
    %715 = vmatpush1.bf16.msra.mxu0 0
    %716 = vmatprep.subr.bf16.mxu0 0
    %717 = vmatpush1.bf16.msra.mxu0 0
    %718 = vmatprep.subr.bf16.mxu0 0
    %719 = vmatpush1.bf16.msra.mxu0 0
    %720 = vmatprep.subr.bf16.mxu0 0
    %721 = vmatpush1.bf16.msra.mxu0 0
    %722 = vmatprep.subr.bf16.mxu0 0
    %723 = vmatpush1.bf16.msra.mxu0 0
    %724 = vmatprep.subr.bf16.mxu0 0
    %725 = vmatpush1.bf16.msra.mxu0 0
    %726 = vmatprep.subr.bf16.mxu0 0
    %727 = vmatpush1.bf16.msra.mxu0 0
    %728 = vmatprep.subr.bf16.mxu0 0
    %729 = vmatpush1.bf16.msra.mxu0 0
    %730 = vmatprep.subr.bf16.mxu0 0
    %731 = vmatpush1.bf16.msra.mxu0 0
    %732 = vmatprep.subr.bf16.mxu0 0
    %733 = vmatpush1.bf16.msra.mxu0 0
    %734 = vmatprep.subr.bf16.mxu0 0
    %735 = vmatpush1.bf16.msra.mxu0 0
    %736 = vmatprep.mubr.bf16.mxu0 0
    %737 = vmatmul.mubr.bf16.gmra.mrb[0].mxu0 %v622
    %v738 = vpop.f32.mrb[0].mxu0
    %v739 = vadd.f32 %v549, %v738
    %v740 = vpop.f32.mrb[0].mxu0
    %v741 = vpop.f32.mrb[0].mxu0
    %v742 = vpop.f32.mrb[0].mxu0
    %743 = vdwg.mxu0
    %v744 = vadd.f32 %v615, %v659
    %v745 = vxor.u32 %v744, 2147483648
    %v746 = vmul.f32 %v745, 1.442695
    %v747 = vpow.pop %v746
    %v748 = vadd.f32 %v747, 1.0
    %v749 = vrcp.pop %v748
    %v750 = vmul.f32 1.0, %v749
    %v751 = vadd.f32 %v617, %v699
    %v752 = vxor.u32 %v751, 2147483648
    %v753 = vmul.f32 %v752, 1.442695
    %v754 = vpow.pop %v753
    %v755 = vadd.f32 %v754, 1.0
    %v756 = vrcp.pop %v755
    %v757 = vmul.f32 1.0, %v756
    %v758 = vmul.f32 %v750, %v739
    %v759 = vadd.f32 %v619, %v758
    %v760 = vtanh.pop %v759
    %v761 = vsub.f32 1.0, %v757
    %v762 = vmul.f32 %v761, %v760
    %v763 = vmul.f32 %v757, %v611
    %v764 = vadd.f32 %v762, %v763
    %s765 = scalar_lea.vmem [#allocation5], 2
    %766 = vst.msk [vmem:[%s765] sm:$0x3] %vm612, %v764
    %s767 = scalar_lea.vmem [#allocation2], 4
    %v768 = vld [vmem:[%s767] sm:$0x3]
    %s769 = scalar_lea.vmem [#allocation3], 4
    %v770 = vld [vmem:[%s769] sm:$0x3]
    %s771 = scalar_lea.vmem [#allocation4], 4
    %v772 = vld [vmem:[%s771] sm:$0x3]
    %v773 = vpack.c.bf16 %v764, %v764
    %v775 = vsel %vm259, %v773, 0
    %777 = vmatprep.subr.bf16.mxu0 0
    %778 = vmatpush1.bf16.msra.mxu0 %v426
    %779 = vmatprep.subr.bf16.mxu0 0
    %780 = vmatpush1.bf16.msra.mxu0 %v427
    %781 = vmatprep.subr.bf16.mxu0 0
    %782 = vmatpush1.bf16.msra.mxu0 0
    %783 = vmatprep.subr.bf16.mxu0 0
    %784 = vmatpush1.bf16.msra.mxu0 0
    %785 = vmatprep.subr.bf16.mxu0 0
    %786 = vmatpush1.bf16.msra.mxu0 0
    %787 = vmatprep.subr.bf16.mxu0 0
    %788 = vmatpush1.bf16.msra.mxu0 0
    %789 = vmatprep.subr.bf16.mxu0 0
    %790 = vmatpush1.bf16.msra.mxu0 0
    %791 = vmatprep.subr.bf16.mxu0 0
    %792 = vmatpush1.bf16.msra.mxu0 0
    %793 = vmatprep.subr.bf16.mxu0 0
    %794 = vmatpush1.bf16.msra.mxu0 0
    %795 = vmatprep.subr.bf16.mxu0 0
    %796 = vmatpush1.bf16.msra.mxu0 0
    %797 = vmatprep.subr.bf16.mxu0 0
    %798 = vmatpush1.bf16.msra.mxu0 0
    %799 = vmatprep.subr.bf16.mxu0 0
    %800 = vmatpush1.bf16.msra.mxu0 0
    %801 = vmatprep.subr.bf16.mxu0 0
    %802 = vmatpush1.bf16.msra.mxu0 0
    %803 = vmatprep.subr.bf16.mxu0 0
    %804 = vmatpush1.bf16.msra.mxu0 0
    %805 = vmatprep.subr.bf16.mxu0 0
    %806 = vmatpush1.bf16.msra.mxu0 0
    %807 = vmatprep.subr.bf16.mxu0 0
    %808 = vmatpush1.bf16.msra.mxu0 0
    %809 = vmatprep.mubr.bf16.mxu0 0
    %810 = vmatmul.mubr.bf16.gmra.mrb[0].mxu0 %v775
    %v811 = vpop.f32.mrb[0].mxu0
    %v812 = vadd.f32 %v454, %v811
    %v813 = vpop.f32.mrb[0].mxu0
    %v814 = vpop.f32.mrb[0].mxu0
    %v815 = vpop.f32.mrb[0].mxu0
    %816 = vdwg.mxu0
    %817 = vmatprep.subr.bf16.mxu0 0
    %818 = vmatpush1.bf16.msra.mxu0 %v433
    %819 = vmatprep.subr.bf16.mxu0 0
    %820 = vmatpush1.bf16.msra.mxu0 %v434
    %821 = vmatprep.subr.bf16.mxu0 0
    %822 = vmatpush1.bf16.msra.mxu0 0
    %823 = vmatprep.subr.bf16.mxu0 0
    %824 = vmatpush1.bf16.msra.mxu0 0
    %825 = vmatprep.subr.bf16.mxu0 0
    %826 = vmatpush1.bf16.msra.mxu0 0
    %827 = vmatprep.subr.bf16.mxu0 0
    %828 = vmatpush1.bf16.msra.mxu0 0
    %829 = vmatprep.subr.bf16.mxu0 0
    %830 = vmatpush1.bf16.msra.mxu0 0
    %831 = vmatprep.subr.bf16.mxu0 0
    %832 = vmatpush1.bf16.msra.mxu0 0
    %833 = vmatprep.subr.bf16.mxu0 0
    %834 = vmatpush1.bf16.msra.mxu0 0
    %835 = vmatprep.subr.bf16.mxu0 0
    %836 = vmatpush1.bf16.msra.mxu0 0
    %837 = vmatprep.subr.bf16.mxu0 0
    %838 = vmatpush1.bf16.msra.mxu0 0
    %839 = vmatprep.subr.bf16.mxu0 0
    %840 = vmatpush1.bf16.msra.mxu0 0
    %841 = vmatprep.subr.bf16.mxu0 0
    %842 = vmatpush1.bf16.msra.mxu0 0
    %843 = vmatprep.subr.bf16.mxu0 0
    %844 = vmatpush1.bf16.msra.mxu0 0
    %845 = vmatprep.subr.bf16.mxu0 0
    %846 = vmatpush1.bf16.msra.mxu0 0
    %847 = vmatprep.subr.bf16.mxu0 0
    %848 = vmatpush1.bf16.msra.mxu0 0
    %849 = vmatprep.mubr.bf16.mxu0 0
    %850 = vmatmul.mubr.bf16.gmra.mrb[0].mxu0 %v775
    %v851 = vpop.f32.mrb[0].mxu0
    %v852 = vadd.f32 %v503, %v851
    %v853 = vpop.f32.mrb[0].mxu0
    %v854 = vpop.f32.mrb[0].mxu0
    %v855 = vpop.f32.mrb[0].mxu0
    %856 = vdwg.mxu0
    %857 = vmatprep.subr.bf16.mxu0 0
    %858 = vmatpush1.bf16.msra.mxu0 %v440
    %859 = vmatprep.subr.bf16.mxu0 0
    %860 = vmatpush1.bf16.msra.mxu0 %v441
    %861 = vmatprep.subr.bf16.mxu0 0
    %862 = vmatpush1.bf16.msra.mxu0 0
    %863 = vmatprep.subr.bf16.mxu0 0
    %864 = vmatpush1.bf16.msra.mxu0 0
    %865 = vmatprep.subr.bf16.mxu0 0
    %866 = vmatpush1.bf16.msra.mxu0 0
    %867 = vmatprep.subr.bf16.mxu0 0
    %868 = vmatpush1.bf16.msra.mxu0 0
    %869 = vmatprep.subr.bf16.mxu0 0
    %870 = vmatpush1.bf16.msra.mxu0 0
    %871 = vmatprep.subr.bf16.mxu0 0
    %872 = vmatpush1.bf16.msra.mxu0 0
    %873 = vmatprep.subr.bf16.mxu0 0
    %874 = vmatpush1.bf16.msra.mxu0 0
    %875 = vmatprep.subr.bf16.mxu0 0
    %876 = vmatpush1.bf16.msra.mxu0 0
    %877 = vmatprep.subr.bf16.mxu0 0
    %878 = vmatpush1.bf16.msra.mxu0 0
    %879 = vmatprep.subr.bf16.mxu0 0
    %880 = vmatpush1.bf16.msra.mxu0 0
    %881 = vmatprep.subr.bf16.mxu0 0
    %882 = vmatpush1.bf16.msra.mxu0 0
    %883 = vmatprep.subr.bf16.mxu0 0
    %884 = vmatpush1.bf16.msra.mxu0 0
    %885 = vmatprep.subr.bf16.mxu0 0
    %886 = vmatpush1.bf16.msra.mxu0 0
    %887 = vmatprep.subr.bf16.mxu0 0
    %888 = vmatpush1.bf16.msra.mxu0 0
    %889 = vmatprep.mubr.bf16.mxu0 0
    %890 = vmatmul.mubr.bf16.gmra.mrb[0].mxu0 %v775
    %v891 = vpop.f32.mrb[0].mxu0
    %v892 = vadd.f32 %v549, %v891
    %v893 = vpop.f32.mrb[0].mxu0
    %v894 = vpop.f32.mrb[0].mxu0
    %v895 = vpop.f32.mrb[0].mxu0
    %896 = vdwg.mxu0
    %v897 = vadd.f32 %v768, %v812
    %v898 = vxor.u32 %v897, 2147483648
    %v899 = vmul.f32 %v898, 1.442695
    %v900 = vpow.pop %v899
    %v901 = vadd.f32 %v900, 1.0
    %v902 = vrcp.pop %v901
    %v903 = vmul.f32 1.0, %v902
    %v904 = vadd.f32 %v770, %v852
    %v905 = vxor.u32 %v904, 2147483648
    %v906 = vmul.f32 %v905, 1.442695
    %v907 = vpow.pop %v906
    %v908 = vadd.f32 %v907, 1.0
    %v909 = vrcp.pop %v908
    %v910 = vmul.f32 1.0, %v909
    %v911 = vmul.f32 %v903, %v892
    %v912 = vadd.f32 %v772, %v911
    %v913 = vtanh.pop %v912
    %v914 = vsub.f32 1.0, %v910
    %v915 = vmul.f32 %v914, %v913
    %v916 = vmul.f32 %v910, %v764
    %v917 = vadd.f32 %v915, %v916
    %s918 = scalar_lea.vmem [#allocation5], 4
    %919 = vst.msk [vmem:[%s918] sm:$0x3] %vm612, %v917
    %s920 = scalar_lea.vmem [#allocation2], 6
    %v921 = vld [vmem:[%s920] sm:$0x3]
    %s922 = scalar_lea.vmem [#allocation3], 6
    %v923 = vld [vmem:[%s922] sm:$0x3]
    %s924 = scalar_lea.vmem [#allocation4], 6
    %v925 = vld [vmem:[%s924] sm:$0x3]
    %v926 = vpack.c.bf16 %v917, %v917
    %v928 = vsel %vm259, %v926, 0
    %930 = vmatprep.subr.bf16.mxu0 0
    %931 = vmatpush1.bf16.msra.mxu0 %v426
    %932 = vmatprep.subr.bf16.mxu0 0
    %933 = vmatpush1.bf16.msra.mxu0 %v427
    %934 = vmatprep.subr.bf16.mxu0 0
    %935 = vmatpush1.bf16.msra.mxu0 0
    %936 = vmatprep.subr.bf16.mxu0 0
    %937 = vmatpush1.bf16.msra.mxu0 0
    %938 = vmatprep.subr.bf16.mxu0 0
    %939 = vmatpush1.bf16.msra.mxu0 0
    %940 = vmatprep.subr.bf16.mxu0 0
    %941 = vmatpush1.bf16.msra.mxu0 0
    %942 = vmatprep.subr.bf16.mxu0 0
    %943 = vmatpush1.bf16.msra.mxu0 0
    %944 = vmatprep.subr.bf16.mxu0 0
    %945 = vmatpush1.bf16.msra.mxu0 0
    %946 = vmatprep.subr.bf16.mxu0 0
    %947 = vmatpush1.bf16.msra.mxu0 0
    %948 = vmatprep.subr.bf16.mxu0 0
    %949 = vmatpush1.bf16.msra.mxu0 0
    %950 = vmatprep.subr.bf16.mxu0 0
    %951 = vmatpush1.bf16.msra.mxu0 0
    %952 = vmatprep.subr.bf16.mxu0 0
    %953 = vmatpush1.bf16.msra.mxu0 0
    %954 = vmatprep.subr.bf16.mxu0 0
    %955 = vmatpush1.bf16.msra.mxu0 0
    %956 = vmatprep.subr.bf16.mxu0 0
    %957 = vmatpush1.bf16.msra.mxu0 0
    %958 = vmatprep.subr.bf16.mxu0 0
    %959 = vmatpush1.bf16.msra.mxu0 0
    %960 = vmatprep.subr.bf16.mxu0 0
    %961 = vmatpush1.bf16.msra.mxu0 0
    %962 = vmatprep.mubr.bf16.mxu0 0
    %963 = vmatmul.mubr.bf16.gmra.mrb[0].mxu0 %v928
    %v964 = vpop.f32.mrb[0].mxu0
    %v965 = vadd.f32 %v454, %v964
    %v966 = vpop.f32.mrb[0].mxu0
    %v967 = vpop.f32.mrb[0].mxu0
    %v968 = vpop.f32.mrb[0].mxu0
    %969 = vdwg.mxu0
    %970 = vmatprep.subr.bf16.mxu0 0
    %971 = vmatpush1.bf16.msra.mxu0 %v433
    %972 = vmatprep.subr.bf16.mxu0 0
    %973 = vmatpush1.bf16.msra.mxu0 %v434
    %974 = vmatprep.subr.bf16.mxu0 0
    %975 = vmatpush1.bf16.msra.mxu0 0
    %976 = vmatprep.subr.bf16.mxu0 0
    %977 = vmatpush1.bf16.msra.mxu0 0
    %978 = vmatprep.subr.bf16.mxu0 0
    %979 = vmatpush1.bf16.msra.mxu0 0
    %980 = vmatprep.subr.bf16.mxu0 0
    %981 = vmatpush1.bf16.msra.mxu0 0
    %982 = vmatprep.subr.bf16.mxu0 0
    %983 = vmatpush1.bf16.msra.mxu0 0
    %984 = vmatprep.subr.bf16.mxu0 0
    %985 = vmatpush1.bf16.msra.mxu0 0
    %986 = vmatprep.subr.bf16.mxu0 0
    %987 = vmatpush1.bf16.msra.mxu0 0
    %988 = vmatprep.subr.bf16.mxu0 0
    %989 = vmatpush1.bf16.msra.mxu0 0
    %990 = vmatprep.subr.bf16.mxu0 0
    %991 = vmatpush1.bf16.msra.mxu0 0
    %992 = vmatprep.subr.bf16.mxu0 0
    %993 = vmatpush1.bf16.msra.mxu0 0
    %994 = vmatprep.subr.bf16.mxu0 0
    %995 = vmatpush1.bf16.msra.mxu0 0
    %996 = vmatprep.subr.bf16.mxu0 0
    %997 = vmatpush1.bf16.msra.mxu0 0
    %998 = vmatprep.subr.bf16.mxu0 0
    %999 = vmatpush1.bf16.msra.mxu0 0
    %1000 = vmatprep.subr.bf16.mxu0 0
    %1001 = vmatpush1.bf16.msra.mxu0 0
    %1002 = vmatprep.mubr.bf16.mxu0 0
    %1003 = vmatmul.mubr.bf16.gmra.mrb[0].mxu0 %v928
    %v1004 = vpop.f32.mrb[0].mxu0
    %v1005 = vadd.f32 %v503, %v1004
    %v1006 = vpop.f32.mrb[0].mxu0
    %v1007 = vpop.f32.mrb[0].mxu0
    %v1008 = vpop.f32.mrb[0].mxu0
    %1009 = vdwg.mxu0
    %1010 = vmatprep.subr.bf16.mxu0 0
    %1011 = vmatpush1.bf16.msra.mxu0 %v440
    %1012 = vmatprep.subr.bf16.mxu0 0
    %1013 = vmatpush1.bf16.msra.mxu0 %v441
    %1014 = vmatprep.subr.bf16.mxu0 0
    %1015 = vmatpush1.bf16.msra.mxu0 0
    %1016 = vmatprep.subr.bf16.mxu0 0
    %1017 = vmatpush1.bf16.msra.mxu0 0
    %1018 = vmatprep.subr.bf16.mxu0 0
    %1019 = vmatpush1.bf16.msra.mxu0 0
    %1020 = vmatprep.subr.bf16.mxu0 0
    %1021 = vmatpush1.bf16.msra.mxu0 0
    %1022 = vmatprep.subr.bf16.mxu0 0
    %1023 = vmatpush1.bf16.msra.mxu0 0
    %1024 = vmatprep.subr.bf16.mxu0 0
    %1025 = vmatpush1.bf16.msra.mxu0 0
    %1026 = vmatprep.subr.bf16.mxu0 0
    %1027 = vmatpush1.bf16.msra.mxu0 0
    %1028 = vmatprep.subr.bf16.mxu0 0
    %1029 = vmatpush1.bf16.msra.mxu0 0
    %1030 = vmatprep.subr.bf16.mxu0 0
    %1031 = vmatpush1.bf16.msra.mxu0 0
    %1032 = vmatprep.subr.bf16.mxu0 0
    %1033 = vmatpush1.bf16.msra.mxu0 0
    %1034 = vmatprep.subr.bf16.mxu0 0
    %1035 = vmatpush1.bf16.msra.mxu0 0
    %1036 = vmatprep.subr.bf16.mxu0 0
    %1037 = vmatpush1.bf16.msra.mxu0 0
    %1038 = vmatprep.subr.bf16.mxu0 0
    %1039 = vmatpush1.bf16.msra.mxu0 0
    %1040 = vmatprep.subr.bf16.mxu0 0
    %1041 = vmatpush1.bf16.msra.mxu0 0
    %1042 = vmatprep.mubr.bf16.mxu0 0
    %1043 = vmatmul.mubr.bf16.gmra.mrb[0].mxu0 %v928
    %v1044 = vpop.f32.mrb[0].mxu0
    %v1045 = vadd.f32 %v549, %v1044
    %v1046 = vpop.f32.mrb[0].mxu0
    %v1047 = vpop.f32.mrb[0].mxu0
    %v1048 = vpop.f32.mrb[0].mxu0
    %1049 = vdwg.mxu0
    %v1050 = vadd.f32 %v921, %v965
    %v1051 = vxor.u32 %v1050, 2147483648
    %v1052 = vmul.f32 %v1051, 1.442695
    %v1053 = vpow.pop %v1052
    %v1054 = vadd.f32 %v1053, 1.0
    %v1055 = vrcp.pop %v1054
    %v1056 = vmul.f32 1.0, %v1055
    %v1057 = vadd.f32 %v923, %v1005
    %v1058 = vxor.u32 %v1057, 2147483648
    %v1059 = vmul.f32 %v1058, 1.442695
    %v1060 = vpow.pop %v1059
    %v1061 = vadd.f32 %v1060, 1.0
    %v1062 = vrcp.pop %v1061
    %v1063 = vmul.f32 1.0, %v1062
    %v1064 = vmul.f32 %v1056, %v1045
    %v1065 = vadd.f32 %v925, %v1064
    %v1066 = vtanh.pop %v1065
    %v1067 = vsub.f32 1.0, %v1063
    %v1068 = vmul.f32 %v1067, %v1066
    %v1069 = vmul.f32 %v1063, %v917
    %v1070 = vadd.f32 %v1068, %v1069
    %s1071 = scalar_lea.vmem [#allocation5], 6
    %1072 = vst.msk [vmem:[%s1071] sm:$0x3] %vm612, %v1070
    %s1073 = scalar_lea.vmem [#allocation2], 8
    %v1074 = vld [vmem:[%s1073] sm:$0x3]
    %s1075 = scalar_lea.vmem [#allocation3], 8
    %v1076 = vld [vmem:[%s1075] sm:$0x3]
    %s1077 = scalar_lea.vmem [#allocation4], 8
    %v1078 = vld [vmem:[%s1077] sm:$0x3]
    %v1079 = vpack.c.bf16 %v1070, %v1070
    %v1081 = vsel %vm259, %v1079, 0
    %1083 = vmatprep.subr.bf16.mxu0 0
    %1084 = vmatpush1.bf16.msra.mxu0 %v426
    %1085 = vmatprep.subr.bf16.mxu0 0
    %1086 = vmatpush1.bf16.msra.mxu0 %v427
    %1087 = vmatprep.subr.bf16.mxu0 0
    %1088 = vmatpush1.bf16.msra.mxu0 0
    %1089 = vmatprep.subr.bf16.mxu0 0
    %1090 = vmatpush1.bf16.msra.mxu0 0
    %1091 = vmatprep.subr.bf16.mxu0 0
    %1092 = vmatpush1.bf16.msra.mxu0 0
    %1093 = vmatprep.subr.bf16.mxu0 0
    %1094 = vmatpush1.bf16.msra.mxu0 0
    %1095 = vmatprep.subr.bf16.mxu0 0
    %1096 = vmatpush1.bf16.msra.mxu0 0
    %1097 = vmatprep.subr.bf16.mxu0 0
    %1098 = vmatpush1.bf16.msra.mxu0 0
    %1099 = vmatprep.subr.bf16.mxu0 0
    %1100 = vmatpush1.bf16.msra.mxu0 0
    %1101 = vmatprep.subr.bf16.mxu0 0
    %1102 = vmatpush1.bf16.msra.mxu0 0
    %1103 = vmatprep.subr.bf16.mxu0 0
    %1104 = vmatpush1.bf16.msra.mxu0 0
    %1105 = vmatprep.subr.bf16.mxu0 0
    %1106 = vmatpush1.bf16.msra.mxu0 0
    %1107 = vmatprep.subr.bf16.mxu0 0
    %1108 = vmatpush1.bf16.msra.mxu0 0
    %1109 = vmatprep.subr.bf16.mxu0 0
    %1110 = vmatpush1.bf16.msra.mxu0 0
    %1111 = vmatprep.subr.bf16.mxu0 0
    %1112 = vmatpush1.bf16.msra.mxu0 0
    %1113 = vmatprep.subr.bf16.mxu0 0
    %1114 = vmatpush1.bf16.msra.mxu0 0
    %1115 = vmatprep.mubr.bf16.mxu0 0
    %1116 = vmatmul.mubr.bf16.gmra.mrb[0].mxu0 %v1081
    %v1117 = vpop.f32.mrb[0].mxu0
    %v1118 = vadd.f32 %v454, %v1117
    %v1119 = vpop.f32.mrb[0].mxu0
    %v1120 = vpop.f32.mrb[0].mxu0
    %v1121 = vpop.f32.mrb[0].mxu0
    %1122 = vdwg.mxu0
    %1123 = vmatprep.subr.bf16.mxu0 0
    %1124 = vmatpush1.bf16.msra.mxu0 %v433
    %1125 = vmatprep.subr.bf16.mxu0 0
    %1126 = vmatpush1.bf16.msra.mxu0 %v434
    %1127 = vmatprep.subr.bf16.mxu0 0
    %1128 = vmatpush1.bf16.msra.mxu0 0
    %1129 = vmatprep.subr.bf16.mxu0 0
    %1130 = vmatpush1.bf16.msra.mxu0 0
    %1131 = vmatprep.subr.bf16.mxu0 0
    %1132 = vmatpush1.bf16.msra.mxu0 0
    %1133 = vmatprep.subr.bf16.mxu0 0
    %1134 = vmatpush1.bf16.msra.mxu0 0
    %1135 = vmatprep.subr.bf16.mxu0 0
    %1136 = vmatpush1.bf16.msra.mxu0 0
    %1137 = vmatprep.subr.bf16.mxu0 0
    %1138 = vmatpush1.bf16.msra.mxu0 0
    %1139 = vmatprep.subr.bf16.mxu0 0
    %1140 = vmatpush1.bf16.msra.mxu0 0
    %1141 = vmatprep.subr.bf16.mxu0 0
    %1142 = vmatpush1.bf16.msra.mxu0 0
    %1143 = vmatprep.subr.bf16.mxu0 0
    %1144 = vmatpush1.bf16.msra.mxu0 0
    %1145 = vmatprep.subr.bf16.mxu0 0
    %1146 = vmatpush1.bf16.msra.mxu0 0
    %1147 = vmatprep.subr.bf16.mxu0 0
    %1148 = vmatpush1.bf16.msra.mxu0 0
    %1149 = vmatprep.subr.bf16.mxu0 0
    %1150 = vmatpush1.bf16.msra.mxu0 0
    %1151 = vmatprep.subr.bf16.mxu0 0
    %1152 = vmatpush1.bf16.msra.mxu0 0
    %1153 = vmatprep.subr.bf16.mxu0 0
    %1154 = vmatpush1.bf16.msra.mxu0 0
    %1155 = vmatprep.mubr.bf16.mxu0 0
    %1156 = vmatmul.mubr.bf16.gmra.mrb[0].mxu0 %v1081
    %v1157 = vpop.f32.mrb[0].mxu0
    %v1158 = vadd.f32 %v503, %v1157
    %v1159 = vpop.f32.mrb[0].mxu0
    %v1160 = vpop.f32.mrb[0].mxu0
    %v1161 = vpop.f32.mrb[0].mxu0
    %1162 = vdwg.mxu0
    %1163 = vmatprep.subr.bf16.mxu0 0
    %1164 = vmatpush1.bf16.msra.mxu0 %v440
    %1165 = vmatprep.subr.bf16.mxu0 0
    %1166 = vmatpush1.bf16.msra.mxu0 %v441
    %1167 = vmatprep.subr.bf16.mxu0 0
    %1168 = vmatpush1.bf16.msra.mxu0 0
    %1169 = vmatprep.subr.bf16.mxu0 0
    %1170 = vmatpush1.bf16.msra.mxu0 0
    %1171 = vmatprep.subr.bf16.mxu0 0
    %1172 = vmatpush1.bf16.msra.mxu0 0
    %1173 = vmatprep.subr.bf16.mxu0 0
    %1174 = vmatpush1.bf16.msra.mxu0 0
    %1175 = vmatprep.subr.bf16.mxu0 0
    %1176 = vmatpush1.bf16.msra.mxu0 0
    %1177 = vmatprep.subr.bf16.mxu0 0
    %1178 = vmatpush1.bf16.msra.mxu0 0
    %1179 = vmatprep.subr.bf16.mxu0 0
    %1180 = vmatpush1.bf16.msra.mxu0 0
    %1181 = vmatprep.subr.bf16.mxu0 0
    %1182 = vmatpush1.bf16.msra.mxu0 0
    %1183 = vmatprep.subr.bf16.mxu0 0
    %1184 = vmatpush1.bf16.msra.mxu0 0
    %1185 = vmatprep.subr.bf16.mxu0 0
    %1186 = vmatpush1.bf16.msra.mxu0 0
    %1187 = vmatprep.subr.bf16.mxu0 0
    %1188 = vmatpush1.bf16.msra.mxu0 0
    %1189 = vmatprep.subr.bf16.mxu0 0
    %1190 = vmatpush1.bf16.msra.mxu0 0
    %1191 = vmatprep.subr.bf16.mxu0 0
    %1192 = vmatpush1.bf16.msra.mxu0 0
    %1193 = vmatprep.subr.bf16.mxu0 0
    %1194 = vmatpush1.bf16.msra.mxu0 0
    %1195 = vmatprep.mubr.bf16.mxu0 0
    %1196 = vmatmul.mubr.bf16.gmra.mrb[0].mxu0 %v1081
    %v1197 = vpop.f32.mrb[0].mxu0
    %v1198 = vadd.f32 %v549, %v1197
    %v1199 = vpop.f32.mrb[0].mxu0
    %v1200 = vpop.f32.mrb[0].mxu0
    %v1201 = vpop.f32.mrb[0].mxu0
    %1202 = vdwg.mxu0
    %v1203 = vadd.f32 %v1074, %v1118
    %v1204 = vxor.u32 %v1203, 2147483648
    %v1205 = vmul.f32 %v1204, 1.442695
    %v1206 = vpow.pop %v1205
    %v1207 = vadd.f32 %v1206, 1.0
    %v1208 = vrcp.pop %v1207
    %v1209 = vmul.f32 1.0, %v1208
    %v1210 = vadd.f32 %v1076, %v1158
    %v1211 = vxor.u32 %v1210, 2147483648
    %v1212 = vmul.f32 %v1211, 1.442695
    %v1213 = vpow.pop %v1212
    %v1214 = vadd.f32 %v1213, 1.0
    %v1215 = vrcp.pop %v1214
    %v1216 = vmul.f32 1.0, %v1215
    %v1217 = vmul.f32 %v1209, %v1198
    %v1218 = vadd.f32 %v1078, %v1217
    %v1219 = vtanh.pop %v1218
    %v1220 = vsub.f32 1.0, %v1216
    %v1221 = vmul.f32 %v1220, %v1219
    %v1222 = vmul.f32 %v1216, %v1070
    %v1223 = vadd.f32 %v1221, %v1222
    %s1224 = scalar_lea.vmem [#allocation5], 8
    %1225 = vst.msk [vmem:[%s1224] sm:$0x3] %vm612, %v1223
    %s1226 = scalar_lea.vmem [#allocation2], 10
    %v1227 = vld [vmem:[%s1226] sm:$0x3]
    %s1228 = scalar_lea.vmem [#allocation3], 10
    %v1229 = vld [vmem:[%s1228] sm:$0x3]
    %s1230 = scalar_lea.vmem [#allocation4], 10
    %v1231 = vld [vmem:[%s1230] sm:$0x3]
    %v1232 = vpack.c.bf16 %v1223, %v1223
    %v1234 = vsel %vm259, %v1232, 0
    %1236 = vmatprep.subr.bf16.mxu0 0
    %1237 = vmatpush1.bf16.msra.mxu0 %v426
    %1238 = vmatprep.subr.bf16.mxu0 0
    %1239 = vmatpush1.bf16.msra.mxu0 %v427
    %1240 = vmatprep.subr.bf16.mxu0 0
    %1241 = vmatpush1.bf16.msra.mxu0 0
    %1242 = vmatprep.subr.bf16.mxu0 0
    %1243 = vmatpush1.bf16.msra.mxu0 0
    %1244 = vmatprep.subr.bf16.mxu0 0
    %1245 = vmatpush1.bf16.msra.mxu0 0
    %1246 = vmatprep.subr.bf16.mxu0 0
    %1247 = vmatpush1.bf16.msra.mxu0 0
    %1248 = vmatprep.subr.bf16.mxu0 0
    %1249 = vmatpush1.bf16.msra.mxu0 0
    %1250 = vmatprep.subr.bf16.mxu0 0
    %1251 = vmatpush1.bf16.msra.mxu0 0
    %1252 = vmatprep.subr.bf16.mxu0 0
    %1253 = vmatpush1.bf16.msra.mxu0 0
    %1254 = vmatprep.subr.bf16.mxu0 0
    %1255 = vmatpush1.bf16.msra.mxu0 0
    %1256 = vmatprep.subr.bf16.mxu0 0
    %1257 = vmatpush1.bf16.msra.mxu0 0
    %1258 = vmatprep.subr.bf16.mxu0 0
    %1259 = vmatpush1.bf16.msra.mxu0 0
    %1260 = vmatprep.subr.bf16.mxu0 0
    %1261 = vmatpush1.bf16.msra.mxu0 0
    %1262 = vmatprep.subr.bf16.mxu0 0
    %1263 = vmatpush1.bf16.msra.mxu0 0
    %1264 = vmatprep.subr.bf16.mxu0 0
    %1265 = vmatpush1.bf16.msra.mxu0 0
    %1266 = vmatprep.subr.bf16.mxu0 0
    %1267 = vmatpush1.bf16.msra.mxu0 0
    %1268 = vmatprep.mubr.bf16.mxu0 0
    %1269 = vmatmul.mubr.bf16.gmra.mrb[0].mxu0 %v1234
    %v1270 = vpop.f32.mrb[0].mxu0
    %v1271 = vadd.f32 %v454, %v1270
    %v1272 = vpop.f32.mrb[0].mxu0
    %v1273 = vpop.f32.mrb[0].mxu0
    %v1274 = vpop.f32.mrb[0].mxu0
    %1275 = vdwg.mxu0
    %1276 = vmatprep.subr.bf16.mxu0 0
    %1277 = vmatpush1.bf16.msra.mxu0 %v433
    %1278 = vmatprep.subr.bf16.mxu0 0
    %1279 = vmatpush1.bf16.msra.mxu0 %v434
    %1280 = vmatprep.subr.bf16.mxu0 0
    %1281 = vmatpush1.bf16.msra.mxu0 0
    %1282 = vmatprep.subr.bf16.mxu0 0
    %1283 = vmatpush1.bf16.msra.mxu0 0
    %1284 = vmatprep.subr.bf16.mxu0 0
    %1285 = vmatpush1.bf16.msra.mxu0 0
    %1286 = vmatprep.subr.bf16.mxu0 0
    %1287 = vmatpush1.bf16.msra.mxu0 0
    %1288 = vmatprep.subr.bf16.mxu0 0
    %1289 = vmatpush1.bf16.msra.mxu0 0
    %1290 = vmatprep.subr.bf16.mxu0 0
    %1291 = vmatpush1.bf16.msra.mxu0 0
    %1292 = vmatprep.subr.bf16.mxu0 0
    %1293 = vmatpush1.bf16.msra.mxu0 0
    %1294 = vmatprep.subr.bf16.mxu0 0
    %1295 = vmatpush1.bf16.msra.mxu0 0
    %1296 = vmatprep.subr.bf16.mxu0 0
    %1297 = vmatpush1.bf16.msra.mxu0 0
    %1298 = vmatprep.subr.bf16.mxu0 0
    %1299 = vmatpush1.bf16.msra.mxu0 0
    %1300 = vmatprep.subr.bf16.mxu0 0
    %1301 = vmatpush1.bf16.msra.mxu0 0
    %1302 = vmatprep.subr.bf16.mxu0 0
    %1303 = vmatpush1.bf16.msra.mxu0 0
    %1304 = vmatprep.subr.bf16.mxu0 0
    %1305 = vmatpush1.bf16.msra.mxu0 0
    %1306 = vmatprep.subr.bf16.mxu0 0
    %1307 = vmatpush1.bf16.msra.mxu0 0
    %1308 = vmatprep.mubr.bf16.mxu0 0
    %1309 = vmatmul.mubr.bf16.gmra.mrb[0].mxu0 %v1234
    %v1310 = vpop.f32.mrb[0].mxu0
    %v1311 = vadd.f32 %v503, %v1310
    %v1312 = vpop.f32.mrb[0].mxu0
    %v1313 = vpop.f32.mrb[0].mxu0
    %v1314 = vpop.f32.mrb[0].mxu0
    %1315 = vdwg.mxu0
    %1316 = vmatprep.subr.bf16.mxu0 0
    %1317 = vmatpush1.bf16.msra.mxu0 %v440
    %1318 = vmatprep.subr.bf16.mxu0 0
    %1319 = vmatpush1.bf16.msra.mxu0 %v441
    %1320 = vmatprep.subr.bf16.mxu0 0
    %1321 = vmatpush1.bf16.msra.mxu0 0
    %1322 = vmatprep.subr.bf16.mxu0 0
    %1323 = vmatpush1.bf16.msra.mxu0 0
    %1324 = vmatprep.subr.bf16.mxu0 0
    %1325 = vmatpush1.bf16.msra.mxu0 0
    %1326 = vmatprep.subr.bf16.mxu0 0
    %1327 = vmatpush1.bf16.msra.mxu0 0
    %1328 = vmatprep.subr.bf16.mxu0 0
    %1329 = vmatpush1.bf16.msra.mxu0 0
    %1330 = vmatprep.subr.bf16.mxu0 0
    %1331 = vmatpush1.bf16.msra.mxu0 0
    %1332 = vmatprep.subr.bf16.mxu0 0
    %1333 = vmatpush1.bf16.msra.mxu0 0
    %1334 = vmatprep.subr.bf16.mxu0 0
    %1335 = vmatpush1.bf16.msra.mxu0 0
    %1336 = vmatprep.subr.bf16.mxu0 0
    %1337 = vmatpush1.bf16.msra.mxu0 0
    %1338 = vmatprep.subr.bf16.mxu0 0
    %1339 = vmatpush1.bf16.msra.mxu0 0
    %1340 = vmatprep.subr.bf16.mxu0 0
    %1341 = vmatpush1.bf16.msra.mxu0 0
    %1342 = vmatprep.subr.bf16.mxu0 0
    %1343 = vmatpush1.bf16.msra.mxu0 0
    %1344 = vmatprep.subr.bf16.mxu0 0
    %1345 = vmatpush1.bf16.msra.mxu0 0
    %1346 = vmatprep.subr.bf16.mxu0 0
    %1347 = vmatpush1.bf16.msra.mxu0 0
    %1348 = vmatprep.mubr.bf16.mxu0 0
    %1349 = vmatmul.mubr.bf16.gmra.mrb[0].mxu0 %v1234
    %v1350 = vpop.f32.mrb[0].mxu0
    %v1351 = vadd.f32 %v549, %v1350
    %v1352 = vpop.f32.mrb[0].mxu0
    %v1353 = vpop.f32.mrb[0].mxu0
    %v1354 = vpop.f32.mrb[0].mxu0
    %1355 = vdwg.mxu0
    %v1356 = vadd.f32 %v1227, %v1271
    %v1357 = vxor.u32 %v1356, 2147483648
    %v1358 = vmul.f32 %v1357, 1.442695
    %v1359 = vpow.pop %v1358
    %v1360 = vadd.f32 %v1359, 1.0
    %v1361 = vrcp.pop %v1360
    %v1362 = vmul.f32 1.0, %v1361
    %v1363 = vadd.f32 %v1229, %v1311
    %v1364 = vxor.u32 %v1363, 2147483648
    %v1365 = vmul.f32 %v1364, 1.442695
    %v1366 = vpow.pop %v1365
    %v1367 = vadd.f32 %v1366, 1.0
    %v1368 = vrcp.pop %v1367
    %v1369 = vmul.f32 1.0, %v1368
    %v1370 = vmul.f32 %v1362, %v1351
    %v1371 = vadd.f32 %v1231, %v1370
    %v1372 = vtanh.pop %v1371
    %v1373 = vsub.f32 1.0, %v1369
    %v1374 = vmul.f32 %v1373, %v1372
    %v1375 = vmul.f32 %v1369, %v1223
    %v1376 = vadd.f32 %v1374, %v1375
    %s1377 = scalar_lea.vmem [#allocation5], 10
    %1378 = vst.msk [vmem:[%s1377] sm:$0x3] %vm612, %v1376
    %s1379 = scalar_lea.vmem [#allocation2], 12
    %v1380 = vld [vmem:[%s1379] sm:$0x3]
    %s1381 = scalar_lea.vmem [#allocation3], 12
    %v1382 = vld [vmem:[%s1381] sm:$0x3]
    %s1383 = scalar_lea.vmem [#allocation4], 12
    %v1384 = vld [vmem:[%s1383] sm:$0x3]
    %v1385 = vpack.c.bf16 %v1376, %v1376
    %v1387 = vsel %vm259, %v1385, 0
    %1389 = vmatprep.subr.bf16.mxu0 0
    %1390 = vmatpush1.bf16.msra.mxu0 %v426
    %1391 = vmatprep.subr.bf16.mxu0 0
    %1392 = vmatpush1.bf16.msra.mxu0 %v427
    %1393 = vmatprep.subr.bf16.mxu0 0
    %1394 = vmatpush1.bf16.msra.mxu0 0
    %1395 = vmatprep.subr.bf16.mxu0 0
    %1396 = vmatpush1.bf16.msra.mxu0 0
    %1397 = vmatprep.subr.bf16.mxu0 0
    %1398 = vmatpush1.bf16.msra.mxu0 0
    %1399 = vmatprep.subr.bf16.mxu0 0
    %1400 = vmatpush1.bf16.msra.mxu0 0
    %1401 = vmatprep.subr.bf16.mxu0 0
    %1402 = vmatpush1.bf16.msra.mxu0 0
    %1403 = vmatprep.subr.bf16.mxu0 0
    %1404 = vmatpush1.bf16.msra.mxu0 0
    %1405 = vmatprep.subr.bf16.mxu0 0
    %1406 = vmatpush1.bf16.msra.mxu0 0
    %1407 = vmatprep.subr.bf16.mxu0 0
    %1408 = vmatpush1.bf16.msra.mxu0 0
    %1409 = vmatprep.subr.bf16.mxu0 0
    %1410 = vmatpush1.bf16.msra.mxu0 0
    %1411 = vmatprep.subr.bf16.mxu0 0
    %1412 = vmatpush1.bf16.msra.mxu0 0
    %1413 = vmatprep.subr.bf16.mxu0 0
    %1414 = vmatpush1.bf16.msra.mxu0 0
    %1415 = vmatprep.subr.bf16.mxu0 0
    %1416 = vmatpush1.bf16.msra.mxu0 0
    %1417 = vmatprep.subr.bf16.mxu0 0
    %1418 = vmatpush1.bf16.msra.mxu0 0
    %1419 = vmatprep.subr.bf16.mxu0 0
    %1420 = vmatpush1.bf16.msra.mxu0 0
    %1421 = vmatprep.mubr.bf16.mxu0 0
    %1422 = vmatmul.mubr.bf16.gmra.mrb[0].mxu0 %v1387
    %v1423 = vpop.f32.mrb[0].mxu0
    %v1424 = vadd.f32 %v454, %v1423
    %v1425 = vpop.f32.mrb[0].mxu0
    %v1426 = vpop.f32.mrb[0].mxu0
    %v1427 = vpop.f32.mrb[0].mxu0
    %1428 = vdwg.mxu0
    %1429 = vmatprep.subr.bf16.mxu0 0
    %1430 = vmatpush1.bf16.msra.mxu0 %v433
    %1431 = vmatprep.subr.bf16.mxu0 0
    %1432 = vmatpush1.bf16.msra.mxu0 %v434
    %1433 = vmatprep.subr.bf16.mxu0 0
    %1434 = vmatpush1.bf16.msra.mxu0 0
    %1435 = vmatprep.subr.bf16.mxu0 0
    %1436 = vmatpush1.bf16.msra.mxu0 0
    %1437 = vmatprep.subr.bf16.mxu0 0
    %1438 = vmatpush1.bf16.msra.mxu0 0
    %1439 = vmatprep.subr.bf16.mxu0 0
    %1440 = vmatpush1.bf16.msra.mxu0 0
    %1441 = vmatprep.subr.bf16.mxu0 0
    %1442 = vmatpush1.bf16.msra.mxu0 0
    %1443 = vmatprep.subr.bf16.mxu0 0
    %1444 = vmatpush1.bf16.msra.mxu0 0
    %1445 = vmatprep.subr.bf16.mxu0 0
    %1446 = vmatpush1.bf16.msra.mxu0 0
    %1447 = vmatprep.subr.bf16.mxu0 0
    %1448 = vmatpush1.bf16.msra.mxu0 0
    %1449 = vmatprep.subr.bf16.mxu0 0
    %1450 = vmatpush1.bf16.msra.mxu0 0
    %1451 = vmatprep.subr.bf16.mxu0 0
    %1452 = vmatpush1.bf16.msra.mxu0 0
    %1453 = vmatprep.subr.bf16.mxu0 0
    %1454 = vmatpush1.bf16.msra.mxu0 0
    %1455 = vmatprep.subr.bf16.mxu0 0
    %1456 = vmatpush1.bf16.msra.mxu0 0
    %1457 = vmatprep.subr.bf16.mxu0 0
    %1458 = vmatpush1.bf16.msra.mxu0 0
    %1459 = vmatprep.subr.bf16.mxu0 0
    %1460 = vmatpush1.bf16.msra.mxu0 0
    %1461 = vmatprep.mubr.bf16.mxu0 0
    %1462 = vmatmul.mubr.bf16.gmra.mrb[0].mxu0 %v1387
    %v1463 = vpop.f32.mrb[0].mxu0
    %v1464 = vadd.f32 %v503, %v1463
    %v1465 = vpop.f32.mrb[0].mxu0
    %v1466 = vpop.f32.mrb[0].mxu0
    %v1467 = vpop.f32.mrb[0].mxu0
    %1468 = vdwg.mxu0
    %1469 = vmatprep.subr.bf16.mxu0 0
    %1470 = vmatpush1.bf16.msra.mxu0 %v440
    %1471 = vmatprep.subr.bf16.mxu0 0
    %1472 = vmatpush1.bf16.msra.mxu0 %v441
    %1473 = vmatprep.subr.bf16.mxu0 0
    %1474 = vmatpush1.bf16.msra.mxu0 0
    %1475 = vmatprep.subr.bf16.mxu0 0
    %1476 = vmatpush1.bf16.msra.mxu0 0
    %1477 = vmatprep.subr.bf16.mxu0 0
    %1478 = vmatpush1.bf16.msra.mxu0 0
    %1479 = vmatprep.subr.bf16.mxu0 0
    %1480 = vmatpush1.bf16.msra.mxu0 0
    %1481 = vmatprep.subr.bf16.mxu0 0
    %1482 = vmatpush1.bf16.msra.mxu0 0
    %1483 = vmatprep.subr.bf16.mxu0 0
    %1484 = vmatpush1.bf16.msra.mxu0 0
    %1485 = vmatprep.subr.bf16.mxu0 0
    %1486 = vmatpush1.bf16.msra.mxu0 0
    %1487 = vmatprep.subr.bf16.mxu0 0
    %1488 = vmatpush1.bf16.msra.mxu0 0
    %1489 = vmatprep.subr.bf16.mxu0 0
    %1490 = vmatpush1.bf16.msra.mxu0 0
    %1491 = vmatprep.subr.bf16.mxu0 0
    %1492 = vmatpush1.bf16.msra.mxu0 0
    %1493 = vmatprep.subr.bf16.mxu0 0
    %1494 = vmatpush1.bf16.msra.mxu0 0
    %1495 = vmatprep.subr.bf16.mxu0 0
    %1496 = vmatpush1.bf16.msra.mxu0 0
    %1497 = vmatprep.subr.bf16.mxu0 0
    %1498 = vmatpush1.bf16.msra.mxu0 0
    %1499 = vmatprep.subr.bf16.mxu0 0
    %1500 = vmatpush1.bf16.msra.mxu0 0
    %1501 = vmatprep.mubr.bf16.mxu0 0
    %1502 = vmatmul.mubr.bf16.gmra.mrb[0].mxu0 %v1387
    %v1503 = vpop.f32.mrb[0].mxu0
    %v1504 = vadd.f32 %v549, %v1503
    %v1505 = vpop.f32.mrb[0].mxu0
    %v1506 = vpop.f32.mrb[0].mxu0
    %v1507 = vpop.f32.mrb[0].mxu0
    %1508 = vdwg.mxu0
    %v1509 = vadd.f32 %v1380, %v1424
    %v1510 = vxor.u32 %v1509, 2147483648
    %v1511 = vmul.f32 %v1510, 1.442695
    %v1512 = vpow.pop %v1511
    %v1513 = vadd.f32 %v1512, 1.0
    %v1514 = vrcp.pop %v1513
    %v1515 = vmul.f32 1.0, %v1514
    %v1516 = vadd.f32 %v1382, %v1464
    %v1517 = vxor.u32 %v1516, 2147483648
    %v1518 = vmul.f32 %v1517, 1.442695
    %v1519 = vpow.pop %v1518
    %v1520 = vadd.f32 %v1519, 1.0
    %v1521 = vrcp.pop %v1520
    %v1522 = vmul.f32 1.0, %v1521
    %v1523 = vmul.f32 %v1515, %v1504
    %v1524 = vadd.f32 %v1384, %v1523
    %v1525 = vtanh.pop %v1524
    %v1526 = vsub.f32 1.0, %v1522
    %v1527 = vmul.f32 %v1526, %v1525
    %v1528 = vmul.f32 %v1522, %v1376
    %v1529 = vadd.f32 %v1527, %v1528
    %s1530 = scalar_lea.vmem [#allocation5], 12
    %1531 = vst.msk [vmem:[%s1530] sm:$0x3] %vm612, %v1529
    %s1532 = scalar_lea.vmem [#allocation2], 14
    %v1533 = vld [vmem:[%s1532] sm:$0x3]
    %s1534 = scalar_lea.vmem [#allocation3], 14
    %v1535 = vld [vmem:[%s1534] sm:$0x3]
    %s1536 = scalar_lea.vmem [#allocation4], 14
    %v1537 = vld [vmem:[%s1536] sm:$0x3]
    %v1538 = vpack.c.bf16 %v1529, %v1529
    %v1540 = vsel %vm259, %v1538, 0
    %1542 = vmatprep.subr.bf16.mxu0 0
    %1543 = vmatpush1.bf16.msra.mxu0 %v426
    %1544 = vmatprep.subr.bf16.mxu0 0
    %1545 = vmatpush1.bf16.msra.mxu0 %v427
    %1546 = vmatprep.subr.bf16.mxu0 0
    %1547 = vmatpush1.bf16.msra.mxu0 0
    %1548 = vmatprep.subr.bf16.mxu0 0
    %1549 = vmatpush1.bf16.msra.mxu0 0
    %1550 = vmatprep.subr.bf16.mxu0 0
    %1551 = vmatpush1.bf16.msra.mxu0 0
    %1552 = vmatprep.subr.bf16.mxu0 0
    %1553 = vmatpush1.bf16.msra.mxu0 0
    %1554 = vmatprep.subr.bf16.mxu0 0
    %1555 = vmatpush1.bf16.msra.mxu0 0
    %1556 = vmatprep.subr.bf16.mxu0 0
    %1557 = vmatpush1.bf16.msra.mxu0 0
    %1558 = vmatprep.subr.bf16.mxu0 0
    %1559 = vmatpush1.bf16.msra.mxu0 0
    %1560 = vmatprep.subr.bf16.mxu0 0
    %1561 = vmatpush1.bf16.msra.mxu0 0
    %1562 = vmatprep.subr.bf16.mxu0 0
    %1563 = vmatpush1.bf16.msra.mxu0 0
    %1564 = vmatprep.subr.bf16.mxu0 0
    %1565 = vmatpush1.bf16.msra.mxu0 0
    %1566 = vmatprep.subr.bf16.mxu0 0
    %1567 = vmatpush1.bf16.msra.mxu0 0
    %1568 = vmatprep.subr.bf16.mxu0 0
    %1569 = vmatpush1.bf16.msra.mxu0 0
    %1570 = vmatprep.subr.bf16.mxu0 0
    %1571 = vmatpush1.bf16.msra.mxu0 0
    %1572 = vmatprep.subr.bf16.mxu0 0
    %1573 = vmatpush1.bf16.msra.mxu0 0
    %1574 = vmatprep.mubr.bf16.mxu0 0
    %1575 = vmatmul.mubr.bf16.gmra.mrb[0].mxu0 %v1540
    %v1576 = vpop.f32.mrb[0].mxu0
    %v1577 = vadd.f32 %v454, %v1576
    %v1578 = vpop.f32.mrb[0].mxu0
    %v1579 = vpop.f32.mrb[0].mxu0
    %v1580 = vpop.f32.mrb[0].mxu0
    %1581 = vdwg.mxu0
    %1582 = vmatprep.subr.bf16.mxu0 0
    %1583 = vmatpush1.bf16.msra.mxu0 %v433
    %1584 = vmatprep.subr.bf16.mxu0 0
    %1585 = vmatpush1.bf16.msra.mxu0 %v434
    %1586 = vmatprep.subr.bf16.mxu0 0
    %1587 = vmatpush1.bf16.msra.mxu0 0
    %1588 = vmatprep.subr.bf16.mxu0 0
    %1589 = vmatpush1.bf16.msra.mxu0 0
    %1590 = vmatprep.subr.bf16.mxu0 0
    %1591 = vmatpush1.bf16.msra.mxu0 0
    %1592 = vmatprep.subr.bf16.mxu0 0
    %1593 = vmatpush1.bf16.msra.mxu0 0
    %1594 = vmatprep.subr.bf16.mxu0 0
    %1595 = vmatpush1.bf16.msra.mxu0 0
    %1596 = vmatprep.subr.bf16.mxu0 0
    %1597 = vmatpush1.bf16.msra.mxu0 0
    %1598 = vmatprep.subr.bf16.mxu0 0
    %1599 = vmatpush1.bf16.msra.mxu0 0
    %1600 = vmatprep.subr.bf16.mxu0 0
    %1601 = vmatpush1.bf16.msra.mxu0 0
    %1602 = vmatprep.subr.bf16.mxu0 0
    %1603 = vmatpush1.bf16.msra.mxu0 0
    %1604 = vmatprep.subr.bf16.mxu0 0
    %1605 = vmatpush1.bf16.msra.mxu0 0
    %1606 = vmatprep.subr.bf16.mxu0 0
    %1607 = vmatpush1.bf16.msra.mxu0 0
    %1608 = vmatprep.subr.bf16.mxu0 0
    %1609 = vmatpush1.bf16.msra.mxu0 0
    %1610 = vmatprep.subr.bf16.mxu0 0
    %1611 = vmatpush1.bf16.msra.mxu0 0
    %1612 = vmatprep.subr.bf16.mxu0 0
    %1613 = vmatpush1.bf16.msra.mxu0 0
    %1614 = vmatprep.mubr.bf16.mxu0 0
    %1615 = vmatmul.mubr.bf16.gmra.mrb[0].mxu0 %v1540
    %v1616 = vpop.f32.mrb[0].mxu0
    %v1617 = vadd.f32 %v503, %v1616
    %v1618 = vpop.f32.mrb[0].mxu0
    %v1619 = vpop.f32.mrb[0].mxu0
    %v1620 = vpop.f32.mrb[0].mxu0
    %1621 = vdwg.mxu0
    %1622 = vmatprep.subr.bf16.mxu0 0
    %1623 = vmatpush1.bf16.msra.mxu0 %v440
    %1624 = vmatprep.subr.bf16.mxu0 0
    %1625 = vmatpush1.bf16.msra.mxu0 %v441
    %1626 = vmatprep.subr.bf16.mxu0 0
    %1627 = vmatpush1.bf16.msra.mxu0 0
    %1628 = vmatprep.subr.bf16.mxu0 0
    %1629 = vmatpush1.bf16.msra.mxu0 0
    %1630 = vmatprep.subr.bf16.mxu0 0
    %1631 = vmatpush1.bf16.msra.mxu0 0
    %1632 = vmatprep.subr.bf16.mxu0 0
    %1633 = vmatpush1.bf16.msra.mxu0 0
    %1634 = vmatprep.subr.bf16.mxu0 0
    %1635 = vmatpush1.bf16.msra.mxu0 0
    %1636 = vmatprep.subr.bf16.mxu0 0
    %1637 = vmatpush1.bf16.msra.mxu0 0
    %1638 = vmatprep.subr.bf16.mxu0 0
    %1639 = vmatpush1.bf16.msra.mxu0 0
    %1640 = vmatprep.subr.bf16.mxu0 0
    %1641 = vmatpush1.bf16.msra.mxu0 0
    %1642 = vmatprep.subr.bf16.mxu0 0
    %1643 = vmatpush1.bf16.msra.mxu0 0
    %1644 = vmatprep.subr.bf16.mxu0 0
    %1645 = vmatpush1.bf16.msra.mxu0 0
    %1646 = vmatprep.subr.bf16.mxu0 0
    %1647 = vmatpush1.bf16.msra.mxu0 0
    %1648 = vmatprep.subr.bf16.mxu0 0
    %1649 = vmatpush1.bf16.msra.mxu0 0
    %1650 = vmatprep.subr.bf16.mxu0 0
    %1651 = vmatpush1.bf16.msra.mxu0 0
    %1652 = vmatprep.subr.bf16.mxu0 0
    %1653 = vmatpush1.bf16.msra.mxu0 0
    %1654 = vmatprep.mubr.bf16.mxu0 0
    %1655 = vmatmul.mubr.bf16.gmra.mrb[0].mxu0 %v1540
    %v1656 = vpop.f32.mrb[0].mxu0
    %v1657 = vadd.f32 %v549, %v1656
    %v1658 = vpop.f32.mrb[0].mxu0
    %v1659 = vpop.f32.mrb[0].mxu0
    %v1660 = vpop.f32.mrb[0].mxu0
    %1661 = vdwg.mxu0
    %v1662 = vadd.f32 %v1533, %v1577
    %v1663 = vxor.u32 %v1662, 2147483648
    %v1664 = vmul.f32 %v1663, 1.442695
    %v1665 = vpow.pop %v1664
    %v1666 = vadd.f32 %v1665, 1.0
    %v1667 = vrcp.pop %v1666
    %v1668 = vmul.f32 1.0, %v1667
    %v1669 = vadd.f32 %v1535, %v1617
    %v1670 = vxor.u32 %v1669, 2147483648
    %v1671 = vmul.f32 %v1670, 1.442695
    %v1672 = vpow.pop %v1671
    %v1673 = vadd.f32 %v1672, 1.0
    %v1674 = vrcp.pop %v1673
    %v1675 = vmul.f32 1.0, %v1674
    %v1676 = vmul.f32 %v1668, %v1657
    %v1677 = vadd.f32 %v1537, %v1676
    %v1678 = vtanh.pop %v1677
    %v1679 = vsub.f32 1.0, %v1675
    %v1680 = vmul.f32 %v1679, %v1678
    %v1681 = vmul.f32 %v1675, %v1529
    %v1682 = vadd.f32 %v1680, %v1681
    %s1683 = scalar_lea.vmem [#allocation5], 14
    %1684 = vst.msk [vmem:[%s1683] sm:$0x3] %vm612, %v1682
    %v1685 = vld [vmem:[#allocation5] sm:$0xff]
    %v1686 = vld [vmem:[#allocation5 + $0x8] sm:$0xff]
    %v1687 = vld [vmem:[#allocation15] sm:$0xff]
    %v1688 = vld [vmem:[#allocation15 + $0x8] sm:$0xff]
    %v1689 = vld [vmem:[#allocation15 + $0x10] sm:$0xff]
    %v1690 = vld [vmem:[#allocation15 + $0x18] sm:$0xff]
    %v1691 = vpack.c.bf16 %v1686, %v1685
    %v1692 = vpack.c.bf16 %v1688, %v1687
    %v1693 = vpack.c.bf16 %v1690, %v1689
    %v1694 = vld [vmem:[#allocation17] sm:$0x1]
    %v1696 = vlaneseq
    %v1697 = vshrl.u32 %v1696, 7
    %v1698 = vsub.s32 0, %v1697
    %v1699 = vrot.slane %v1694, %v1698
    %v1702 = vsel %vm259, %v1691, 0
    %1704 = vmatprep.subr.bf16.mxu0 0
    %1705 = vmatpush1.bf16.msra.mxu0 %v1692
    %1706 = vmatprep.subr.bf16.mxu0 0
    %1707 = vmatpush1.bf16.msra.mxu0 %v1693
    %1708 = vmatprep.subr.bf16.mxu0 0
    %1709 = vmatpush1.bf16.msra.mxu0 0
    %1710 = vmatprep.subr.bf16.mxu0 0
    %1711 = vmatpush1.bf16.msra.mxu0 0
    %1712 = vmatprep.subr.bf16.mxu0 0
    %1713 = vmatpush1.bf16.msra.mxu0 0
    %1714 = vmatprep.subr.bf16.mxu0 0
    %1715 = vmatpush1.bf16.msra.mxu0 0
    %1716 = vmatprep.subr.bf16.mxu0 0
    %1717 = vmatpush1.bf16.msra.mxu0 0
    %1718 = vmatprep.subr.bf16.mxu0 0
    %1719 = vmatpush1.bf16.msra.mxu0 0
    %1720 = vmatprep.subr.bf16.mxu0 0
    %1721 = vmatpush1.bf16.msra.mxu0 0
    %1722 = vmatprep.subr.bf16.mxu0 0
    %1723 = vmatpush1.bf16.msra.mxu0 0
    %1724 = vmatprep.subr.bf16.mxu0 0
    %1725 = vmatpush1.bf16.msra.mxu0 0
    %1726 = vmatprep.subr.bf16.mxu0 0
    %1727 = vmatpush1.bf16.msra.mxu0 0
    %1728 = vmatprep.subr.bf16.mxu0 0
    %1729 = vmatpush1.bf16.msra.mxu0 0
    %1730 = vmatprep.subr.bf16.mxu0 0
    %1731 = vmatpush1.bf16.msra.mxu0 0
    %1732 = vmatprep.subr.bf16.mxu0 0
    %1733 = vmatpush1.bf16.msra.mxu0 0
    %1734 = vmatprep.subr.bf16.mxu0 0
    %1735 = vmatpush1.bf16.msra.mxu0 0
    %1736 = vmatprep.mubr.bf16.mxu0 0
    %1737 = vmatmul.mubr.bf16.gmra.mrb[0].mxu0 %v1702
    %v1738 = vpop.f32.mrb[0].mxu0
    %v1739 = vadd.f32 %v1699, %v1738
    %v1740 = vpop.f32.mrb[0].mxu0
    %v1741 = vpop.f32.mrb[0].mxu0
    %v1742 = vadd.f32 %v1699, %v1741
    %v1743 = vpop.f32.mrb[0].mxu0
    %1744 = vdwg.mxu0
    %1745 = vst.msk [vmem:[#allocation2] sm:$0xff] %vm259, %v1739
    %1746 = vst.msk [vmem:[#allocation2 + $0x8] sm:$0xff] %vm259, %v1742
    %s1747 = scalar_lea.vmem [#allocation15], 32
    %v1748 = vld [vmem:[%s1747] sm:$0xff]
    %v1749 = vld [vmem:[%s1747 + $0x8] sm:$0xff]
    %v1750 = vld [vmem:[%s1747 + $0x10] sm:$0xff]
    %v1751 = vld [vmem:[%s1747 + $0x18] sm:$0xff]
    %v1752 = vpack.c.bf16 %v1749, %v1748
    %v1753 = vpack.c.bf16 %v1751, %v1750
    %s1754 = scalar_lea.vmem [#allocation17], 1
    %v1755 = vld [vmem:[%s1754] sm:$0x1]
    %v1757 = vlaneseq
    %v1758 = vshrl.u32 %v1757, 7
    %v1759 = vsub.s32 0, %v1758
    %v1760 = vrot.slane %v1755, %v1759
    %1762 = vmatprep.subr.bf16.mxu0 0
    %1763 = vmatpush1.bf16.msra.mxu0 %v1752
    %1764 = vmatprep.subr.bf16.mxu0 0
    %1765 = vmatpush1.bf16.msra.mxu0 %v1753
    %1766 = vmatprep.subr.bf16.mxu0 0
    %1767 = vmatpush1.bf16.msra.mxu0 0
    %1768 = vmatprep.subr.bf16.mxu0 0
    %1769 = vmatpush1.bf16.msra.mxu0 0
    %1770 = vmatprep.subr.bf16.mxu0 0
    %1771 = vmatpush1.bf16.msra.mxu0 0
    %1772 = vmatprep.subr.bf16.mxu0 0
    %1773 = vmatpush1.bf16.msra.mxu0 0
    %1774 = vmatprep.subr.bf16.mxu0 0
    %1775 = vmatpush1.bf16.msra.mxu0 0
    %1776 = vmatprep.subr.bf16.mxu0 0
    %1777 = vmatpush1.bf16.msra.mxu0 0
    %1778 = vmatprep.subr.bf16.mxu0 0
    %1779 = vmatpush1.bf16.msra.mxu0 0
    %1780 = vmatprep.subr.bf16.mxu0 0
    %1781 = vmatpush1.bf16.msra.mxu0 0
    %1782 = vmatprep.subr.bf16.mxu0 0
    %1783 = vmatpush1.bf16.msra.mxu0 0
    %1784 = vmatprep.subr.bf16.mxu0 0
    %1785 = vmatpush1.bf16.msra.mxu0 0
    %1786 = vmatprep.subr.bf16.mxu0 0
    %1787 = vmatpush1.bf16.msra.mxu0 0
    %1788 = vmatprep.subr.bf16.mxu0 0
    %1789 = vmatpush1.bf16.msra.mxu0 0
    %1790 = vmatprep.subr.bf16.mxu0 0
    %1791 = vmatpush1.bf16.msra.mxu0 0
    %1792 = vmatprep.subr.bf16.mxu0 0
    %1793 = vmatpush1.bf16.msra.mxu0 0
    %1794 = vmatprep.mubr.bf16.mxu0 0
    %1795 = vmatmul.mubr.bf16.gmra.mrb[0].mxu0 %v1702
    %v1796 = vpop.f32.mrb[0].mxu0
    %v1797 = vadd.f32 %v1760, %v1796
    %v1798 = vpop.f32.mrb[0].mxu0
    %v1799 = vpop.f32.mrb[0].mxu0
    %v1800 = vadd.f32 %v1760, %v1799
    %v1801 = vpop.f32.mrb[0].mxu0
    %1802 = vdwg.mxu0
    %1803 = vst.msk [vmem:[#allocation3] sm:$0xff] %vm259, %v1797
    %1804 = vst.msk [vmem:[#allocation3 + $0x8] sm:$0xff] %vm259, %v1800
    %s1805 = scalar_lea.vmem [#allocation15], 64
    %v1806 = vld [vmem:[%s1805] sm:$0xff]
    %v1807 = vld [vmem:[%s1805 + $0x8] sm:$0xff]
    %v1808 = vld [vmem:[%s1805 + $0x10] sm:$0xff]
    %v1809 = vld [vmem:[%s1805 + $0x18] sm:$0xff]
    %v1810 = vpack.c.bf16 %v1807, %v1806
    %v1811 = vpack.c.bf16 %v1809, %v1808
    %s1812 = scalar_lea.vmem [#allocation17], 2
    %v1813 = vld [vmem:[%s1812] sm:$0x1]
    %v1815 = vlaneseq
    %v1816 = vshrl.u32 %v1815, 7
    %v1817 = vsub.s32 0, %v1816
    %v1818 = vrot.slane %v1813, %v1817
    %1820 = vmatprep.subr.bf16.mxu0 0
    %1821 = vmatpush1.bf16.msra.mxu0 %v1810
    %1822 = vmatprep.subr.bf16.mxu0 0
    %1823 = vmatpush1.bf16.msra.mxu0 %v1811
    %1824 = vmatprep.subr.bf16.mxu0 0
    %1825 = vmatpush1.bf16.msra.mxu0 0
    %1826 = vmatprep.subr.bf16.mxu0 0
    %1827 = vmatpush1.bf16.msra.mxu0 0
    %1828 = vmatprep.subr.bf16.mxu0 0
    %1829 = vmatpush1.bf16.msra.mxu0 0
    %1830 = vmatprep.subr.bf16.mxu0 0
    %1831 = vmatpush1.bf16.msra.mxu0 0
    %1832 = vmatprep.subr.bf16.mxu0 0
    %1833 = vmatpush1.bf16.msra.mxu0 0
    %1834 = vmatprep.subr.bf16.mxu0 0
    %1835 = vmatpush1.bf16.msra.mxu0 0
    %1836 = vmatprep.subr.bf16.mxu0 0
    %1837 = vmatpush1.bf16.msra.mxu0 0
    %1838 = vmatprep.subr.bf16.mxu0 0
    %1839 = vmatpush1.bf16.msra.mxu0 0
    %1840 = vmatprep.subr.bf16.mxu0 0
    %1841 = vmatpush1.bf16.msra.mxu0 0
    %1842 = vmatprep.subr.bf16.mxu0 0
    %1843 = vmatpush1.bf16.msra.mxu0 0
    %1844 = vmatprep.subr.bf16.mxu0 0
    %1845 = vmatpush1.bf16.msra.mxu0 0
    %1846 = vmatprep.subr.bf16.mxu0 0
    %1847 = vmatpush1.bf16.msra.mxu0 0
    %1848 = vmatprep.subr.bf16.mxu0 0
    %1849 = vmatpush1.bf16.msra.mxu0 0
    %1850 = vmatprep.subr.bf16.mxu0 0
    %1851 = vmatpush1.bf16.msra.mxu0 0
    %1852 = vmatprep.mubr.bf16.mxu0 0
    %1853 = vmatmul.mubr.bf16.gmra.mrb[0].mxu0 %v1702
    %v1854 = vpop.f32.mrb[0].mxu0
    %v1855 = vadd.f32 %v1818, %v1854
    %v1856 = vpop.f32.mrb[0].mxu0
    %v1857 = vpop.f32.mrb[0].mxu0
    %v1858 = vadd.f32 %v1818, %v1857
    %v1859 = vpop.f32.mrb[0].mxu0
    %1860 = vdwg.mxu0
    %1861 = vst.msk [vmem:[#allocation4] sm:$0xff] %vm259, %v1855
    %1862 = vst.msk [vmem:[#allocation4 + $0x8] sm:$0xff] %vm259, %v1858
    %v1863 = vld [vmem:[%s8] sm:$0xff]
    %v1864 = vld [vmem:[%s8 + $0x8] sm:$0xff]
    %v1865 = vld [vmem:[%s8 + $0x10] sm:$0xff]
    %v1866 = vld [vmem:[%s8 + $0x18] sm:$0xff]
    %v1867 = vpack.c.bf16 %v1864, %v1863
    %v1868 = vpack.c.bf16 %v1866, %v1865
    %s1869 = scalar_lea.vmem %s8, 32
    %v1870 = vld [vmem:[%s1869] sm:$0xff]
    %v1871 = vld [vmem:[%s1869 + $0x8] sm:$0xff]
    %v1872 = vld [vmem:[%s1869 + $0x10] sm:$0xff]
    %v1873 = vld [vmem:[%s1869 + $0x18] sm:$0xff]
    %v1874 = vpack.c.bf16 %v1871, %v1870
    %v1875 = vpack.c.bf16 %v1873, %v1872
    %s1876 = scalar_lea.vmem %s8, 64
    %v1877 = vld [vmem:[%s1876] sm:$0xff]
    %v1878 = vld [vmem:[%s1876 + $0x8] sm:$0xff]
    %v1879 = vld [vmem:[%s1876 + $0x10] sm:$0xff]
    %v1880 = vld [vmem:[%s1876 + $0x18] sm:$0xff]
    %v1881 = vpack.c.bf16 %v1878, %v1877
    %v1882 = vpack.c.bf16 %v1880, %v1879
    %v1883 = vld [vmem:[#allocation18] sm:$0x1]
    %s1884 = scalar_lea.vmem [#allocation18], 1
    %v1885 = vld [vmem:[%s1884] sm:$0x1]
    %s1886 = scalar_lea.vmem [#allocation18], 2
    %v1887 = vld [vmem:[%s1886] sm:$0x1]
    %v1888 = vld [vmem:[#allocation2] sm:$0x3]
    %v1889 = vld [vmem:[#allocation3] sm:$0x3]
    %v1890 = vld [vmem:[#allocation4] sm:$0x3]
    %v1892 = vlaneseq
    %v1893 = vshrl.u32 %v1892, 7
    %v1894 = vsub.s32 0, %v1893
    %v1895 = vrot.slane %v1883, %v1894
    %1897 = vmatprep.subr.bf16.mxu0 0
    %1898 = vmatpush1.bf16.msra.mxu0 %v1867
    %1899 = vmatprep.subr.bf16.mxu0 0
    %1900 = vmatpush1.bf16.msra.mxu0 %v1868
    %1901 = vmatprep.subr.bf16.mxu0 0
    %1902 = vmatpush1.bf16.msra.mxu0 0
    %1903 = vmatprep.subr.bf16.mxu0 0
    %1904 = vmatpush1.bf16.msra.mxu0 0
    %1905 = vmatprep.subr.bf16.mxu0 0
    %1906 = vmatpush1.bf16.msra.mxu0 0
    %1907 = vmatprep.subr.bf16.mxu0 0
    %1908 = vmatpush1.bf16.msra.mxu0 0
    %1909 = vmatprep.subr.bf16.mxu0 0
    %1910 = vmatpush1.bf16.msra.mxu0 0
    %1911 = vmatprep.subr.bf16.mxu0 0
    %1912 = vmatpush1.bf16.msra.mxu0 0
    %1913 = vmatprep.subr.bf16.mxu0 0
    %1914 = vmatpush1.bf16.msra.mxu0 0
    %1915 = vmatprep.subr.bf16.mxu0 0
    %1916 = vmatpush1.bf16.msra.mxu0 0
    %1917 = vmatprep.subr.bf16.mxu0 0
    %1918 = vmatpush1.bf16.msra.mxu0 0
    %1919 = vmatprep.subr.bf16.mxu0 0
    %1920 = vmatpush1.bf16.msra.mxu0 0
    %1921 = vmatprep.subr.bf16.mxu0 0
    %1922 = vmatpush1.bf16.msra.mxu0 0
    %1923 = vmatprep.subr.bf16.mxu0 0
    %1924 = vmatpush1.bf16.msra.mxu0 0
    %1925 = vmatprep.subr.bf16.mxu0 0
    %1926 = vmatpush1.bf16.msra.mxu0 0
    %1927 = vmatprep.subr.bf16.mxu0 0
    %1928 = vmatpush1.bf16.msra.mxu0 0
    %1929 = vmatprep.mubr.bf16.mxu0 0
    %1930 = vmatmul.mubr.bf16.gmra.mrb[0].mxu0 %v457
    %v1931 = vpop.f32.mrb[0].mxu0
    %v1932 = vadd.f32 %v1895, %v1931
    %v1933 = vpop.f32.mrb[0].mxu0
    %v1934 = vpop.f32.mrb[0].mxu0
    %v1935 = vpop.f32.mrb[0].mxu0
    %1936 = vdwg.mxu0
    %v1938 = vlaneseq
    %v1939 = vshrl.u32 %v1938, 7
    %v1940 = vsub.s32 0, %v1939
    %v1941 = vrot.slane %v1885, %v1940
    %1943 = vmatprep.subr.bf16.mxu0 0
    %1944 = vmatpush1.bf16.msra.mxu0 %v1874
    %1945 = vmatprep.subr.bf16.mxu0 0
    %1946 = vmatpush1.bf16.msra.mxu0 %v1875
    %1947 = vmatprep.subr.bf16.mxu0 0
    %1948 = vmatpush1.bf16.msra.mxu0 0
    %1949 = vmatprep.subr.bf16.mxu0 0
    %1950 = vmatpush1.bf16.msra.mxu0 0
    %1951 = vmatprep.subr.bf16.mxu0 0
    %1952 = vmatpush1.bf16.msra.mxu0 0
    %1953 = vmatprep.subr.bf16.mxu0 0
    %1954 = vmatpush1.bf16.msra.mxu0 0
    %1955 = vmatprep.subr.bf16.mxu0 0
    %1956 = vmatpush1.bf16.msra.mxu0 0
    %1957 = vmatprep.subr.bf16.mxu0 0
    %1958 = vmatpush1.bf16.msra.mxu0 0
    %1959 = vmatprep.subr.bf16.mxu0 0
    %1960 = vmatpush1.bf16.msra.mxu0 0
    %1961 = vmatprep.subr.bf16.mxu0 0
    %1962 = vmatpush1.bf16.msra.mxu0 0
    %1963 = vmatprep.subr.bf16.mxu0 0
    %1964 = vmatpush1.bf16.msra.mxu0 0
    %1965 = vmatprep.subr.bf16.mxu0 0
    %1966 = vmatpush1.bf16.msra.mxu0 0
    %1967 = vmatprep.subr.bf16.mxu0 0
    %1968 = vmatpush1.bf16.msra.mxu0 0
    %1969 = vmatprep.subr.bf16.mxu0 0
    %1970 = vmatpush1.bf16.msra.mxu0 0
    %1971 = vmatprep.subr.bf16.mxu0 0
    %1972 = vmatpush1.bf16.msra.mxu0 0
    %1973 = vmatprep.subr.bf16.mxu0 0
    %1974 = vmatpush1.bf16.msra.mxu0 0
    %1975 = vmatprep.mubr.bf16.mxu0 0
    %1976 = vmatmul.mubr.bf16.gmra.mrb[0].mxu0 %v457
    %v1977 = vpop.f32.mrb[0].mxu0
    %v1978 = vadd.f32 %v1941, %v1977
    %v1979 = vpop.f32.mrb[0].mxu0
    %v1980 = vpop.f32.mrb[0].mxu0
    %v1981 = vpop.f32.mrb[0].mxu0
    %1982 = vdwg.mxu0
    %v1984 = vlaneseq
    %v1985 = vshrl.u32 %v1984, 7
    %v1986 = vsub.s32 0, %v1985
    %v1987 = vrot.slane %v1887, %v1986
    %1989 = vmatprep.subr.bf16.mxu0 0
    %1990 = vmatpush1.bf16.msra.mxu0 %v1881
    %1991 = vmatprep.subr.bf16.mxu0 0
    %1992 = vmatpush1.bf16.msra.mxu0 %v1882
    %1993 = vmatprep.subr.bf16.mxu0 0
    %1994 = vmatpush1.bf16.msra.mxu0 0
    %1995 = vmatprep.subr.bf16.mxu0 0
    %1996 = vmatpush1.bf16.msra.mxu0 0
    %1997 = vmatprep.subr.bf16.mxu0 0
    %1998 = vmatpush1.bf16.msra.mxu0 0
    %1999 = vmatprep.subr.bf16.mxu0 0
    %2000 = vmatpush1.bf16.msra.mxu0 0
    %2001 = vmatprep.subr.bf16.mxu0 0
    %2002 = vmatpush1.bf16.msra.mxu0 0
    %2003 = vmatprep.subr.bf16.mxu0 0
    %2004 = vmatpush1.bf16.msra.mxu0 0
    %2005 = vmatprep.subr.bf16.mxu0 0
    %2006 = vmatpush1.bf16.msra.mxu0 0
    %2007 = vmatprep.subr.bf16.mxu0 0
    %2008 = vmatpush1.bf16.msra.mxu0 0
    %2009 = vmatprep.subr.bf16.mxu0 0
    %2010 = vmatpush1.bf16.msra.mxu0 0
    %2011 = vmatprep.subr.bf16.mxu0 0
    %2012 = vmatpush1.bf16.msra.mxu0 0
    %2013 = vmatprep.subr.bf16.mxu0 0
    %2014 = vmatpush1.bf16.msra.mxu0 0
    %2015 = vmatprep.subr.bf16.mxu0 0
    %2016 = vmatpush1.bf16.msra.mxu0 0
    %2017 = vmatprep.subr.bf16.mxu0 0
    %2018 = vmatpush1.bf16.msra.mxu0 0
    %2019 = vmatprep.subr.bf16.mxu0 0
    %2020 = vmatpush1.bf16.msra.mxu0 0
    %2021 = vmatprep.mubr.bf16.mxu0 0
    %2022 = vmatmul.mubr.bf16.gmra.mrb[0].mxu0 %v457
    %v2023 = vpop.f32.mrb[0].mxu0
    %v2024 = vadd.f32 %v1987, %v2023
    %v2025 = vpop.f32.mrb[0].mxu0
    %v2026 = vpop.f32.mrb[0].mxu0
    %v2027 = vpop.f32.mrb[0].mxu0
    %2028 = vdwg.mxu0
    %v2029 = vadd.f32 %v1888, %v1932
    %v2030 = vxor.u32 %v2029, 2147483648
    %v2031 = vmul.f32 %v2030, 1.442695
    %v2032 = vpow.pop %v2031
    %v2033 = vadd.f32 %v2032, 1.0
    %v2034 = vrcp.pop %v2033
    %v2035 = vmul.f32 1.0, %v2034
    %v2036 = vadd.f32 %v1889, %v1978
    %v2037 = vxor.u32 %v2036, 2147483648
    %v2038 = vmul.f32 %v2037, 1.442695
    %v2039 = vpow.pop %v2038
    %v2040 = vadd.f32 %v2039, 1.0
    %v2041 = vrcp.pop %v2040
    %v2042 = vmul.f32 1.0, %v2041
    %v2043 = vmul.f32 %v2035, %v2024
    %v2044 = vadd.f32 %v1890, %v2043
    %v2045 = vtanh.pop %v2044
    %v2046 = vsub.f32 1.0, %v2042
    %v2047 = vmul.f32 %v2046, %v2045
    %v2048 = vmul.f32 %v2042, 0.0
    %v2049 = vadd.f32 %v2047, %v2048
    %2050 = vst.msk [vmem:[#allocation5] sm:$0x3] %vm612, %v2049
    %v2051 = vld [vmem:[%s614] sm:$0x3]
    %v2052 = vld [vmem:[%s616] sm:$0x3]
    %v2053 = vld [vmem:[%s618] sm:$0x3]
    %v2054 = vpack.c.bf16 %v2049, %v2049
    %v2056 = vsel %vm259, %v2054, 0
    %2058 = vmatprep.subr.bf16.mxu0 0
    %2059 = vmatpush1.bf16.msra.mxu0 %v1867
    %2060 = vmatprep.subr.bf16.mxu0 0
    %2061 = vmatpush1.bf16.msra.mxu0 %v1868
    %2062 = vmatprep.subr.bf16.mxu0 0
    %2063 = vmatpush1.bf16.msra.mxu0 0
    %2064 = vmatprep.subr.bf16.mxu0 0
    %2065 = vmatpush1.bf16.msra.mxu0 0
    %2066 = vmatprep.subr.bf16.mxu0 0
    %2067 = vmatpush1.bf16.msra.mxu0 0
    %2068 = vmatprep.subr.bf16.mxu0 0
    %2069 = vmatpush1.bf16.msra.mxu0 0
    %2070 = vmatprep.subr.bf16.mxu0 0
    %2071 = vmatpush1.bf16.msra.mxu0 0
    %2072 = vmatprep.subr.bf16.mxu0 0
    %2073 = vmatpush1.bf16.msra.mxu0 0
    %2074 = vmatprep.subr.bf16.mxu0 0
    %2075 = vmatpush1.bf16.msra.mxu0 0
    %2076 = vmatprep.subr.bf16.mxu0 0
    %2077 = vmatpush1.bf16.msra.mxu0 0
    %2078 = vmatprep.subr.bf16.mxu0 0
    %2079 = vmatpush1.bf16.msra.mxu0 0
    %2080 = vmatprep.subr.bf16.mxu0 0
    %2081 = vmatpush1.bf16.msra.mxu0 0
    %2082 = vmatprep.subr.bf16.mxu0 0
    %2083 = vmatpush1.bf16.msra.mxu0 0
    %2084 = vmatprep.subr.bf16.mxu0 0
    %2085 = vmatpush1.bf16.msra.mxu0 0
    %2086 = vmatprep.subr.bf16.mxu0 0
    %2087 = vmatpush1.bf16.msra.mxu0 0
    %2088 = vmatprep.subr.bf16.mxu0 0
    %2089 = vmatpush1.bf16.msra.mxu0 0
    %2090 = vmatprep.mubr.bf16.mxu0 0
    %2091 = vmatmul.mubr.bf16.gmra.mrb[0].mxu0 %v2056
    %v2092 = vpop.f32.mrb[0].mxu0
    %v2093 = vadd.f32 %v1895, %v2092
    %v2094 = vpop.f32.mrb[0].mxu0
    %v2095 = vpop.f32.mrb[0].mxu0
    %v2096 = vpop.f32.mrb[0].mxu0
    %2097 = vdwg.mxu0
    %2098 = vmatprep.subr.bf16.mxu0 0
    %2099 = vmatpush1.bf16.msra.mxu0 %v1874
    %2100 = vmatprep.subr.bf16.mxu0 0
    %2101 = vmatpush1.bf16.msra.mxu0 %v1875
    %2102 = vmatprep.subr.bf16.mxu0 0
    %2103 = vmatpush1.bf16.msra.mxu0 0
    %2104 = vmatprep.subr.bf16.mxu0 0
    %2105 = vmatpush1.bf16.msra.mxu0 0
    %2106 = vmatprep.subr.bf16.mxu0 0
    %2107 = vmatpush1.bf16.msra.mxu0 0
    %2108 = vmatprep.subr.bf16.mxu0 0
    %2109 = vmatpush1.bf16.msra.mxu0 0
    %2110 = vmatprep.subr.bf16.mxu0 0
    %2111 = vmatpush1.bf16.msra.mxu0 0
    %2112 = vmatprep.subr.bf16.mxu0 0
    %2113 = vmatpush1.bf16.msra.mxu0 0
    %2114 = vmatprep.subr.bf16.mxu0 0
    %2115 = vmatpush1.bf16.msra.mxu0 0
    %2116 = vmatprep.subr.bf16.mxu0 0
    %2117 = vmatpush1.bf16.msra.mxu0 0
    %2118 = vmatprep.subr.bf16.mxu0 0
    %2119 = vmatpush1.bf16.msra.mxu0 0
    %2120 = vmatprep.subr.bf16.mxu0 0
    %2121 = vmatpush1.bf16.msra.mxu0 0
    %2122 = vmatprep.subr.bf16.mxu0 0
    %2123 = vmatpush1.bf16.msra.mxu0 0
    %2124 = vmatprep.subr.bf16.mxu0 0
    %2125 = vmatpush1.bf16.msra.mxu0 0
    %2126 = vmatprep.subr.bf16.mxu0 0
    %2127 = vmatpush1.bf16.msra.mxu0 0
    %2128 = vmatprep.subr.bf16.mxu0 0
    %2129 = vmatpush1.bf16.msra.mxu0 0
    %2130 = vmatprep.mubr.bf16.mxu0 0
    %2131 = vmatmul.mubr.bf16.gmra.mrb[0].mxu0 %v2056
    %v2132 = vpop.f32.mrb[0].mxu0
    %v2133 = vadd.f32 %v1941, %v2132
    %v2134 = vpop.f32.mrb[0].mxu0
    %v2135 = vpop.f32.mrb[0].mxu0
    %v2136 = vpop.f32.mrb[0].mxu0
    %2137 = vdwg.mxu0
    %2138 = vmatprep.subr.bf16.mxu0 0
    %2139 = vmatpush1.bf16.msra.mxu0 %v1881
    %2140 = vmatprep.subr.bf16.mxu0 0
    %2141 = vmatpush1.bf16.msra.mxu0 %v1882
    %2142 = vmatprep.subr.bf16.mxu0 0
    %2143 = vmatpush1.bf16.msra.mxu0 0
    %2144 = vmatprep.subr.bf16.mxu0 0
    %2145 = vmatpush1.bf16.msra.mxu0 0
    %2146 = vmatprep.subr.bf16.mxu0 0
    %2147 = vmatpush1.bf16.msra.mxu0 0
    %2148 = vmatprep.subr.bf16.mxu0 0
    %2149 = vmatpush1.bf16.msra.mxu0 0
    %2150 = vmatprep.subr.bf16.mxu0 0
    %2151 = vmatpush1.bf16.msra.mxu0 0
    %2152 = vmatprep.subr.bf16.mxu0 0
    %2153 = vmatpush1.bf16.msra.mxu0 0
    %2154 = vmatprep.subr.bf16.mxu0 0
    %2155 = vmatpush1.bf16.msra.mxu0 0
    %2156 = vmatprep.subr.bf16.mxu0 0
    %2157 = vmatpush1.bf16.msra.mxu0 0
    %2158 = vmatprep.subr.bf16.mxu0 0
    %2159 = vmatpush1.bf16.msra.mxu0 0
    %2160 = vmatprep.subr.bf16.mxu0 0
    %2161 = vmatpush1.bf16.msra.mxu0 0
    %2162 = vmatprep.subr.bf16.mxu0 0
    %2163 = vmatpush1.bf16.msra.mxu0 0
    %2164 = vmatprep.subr.bf16.mxu0 0
    %2165 = vmatpush1.bf16.msra.mxu0 0
    %2166 = vmatprep.subr.bf16.mxu0 0
    %2167 = vmatpush1.bf16.msra.mxu0 0
    %2168 = vmatprep.subr.bf16.mxu0 0
    %2169 = vmatpush1.bf16.msra.mxu0 0
    %2170 = vmatprep.mubr.bf16.mxu0 0
    %2171 = vmatmul.mubr.bf16.gmra.mrb[0].mxu0 %v2056
    %v2172 = vpop.f32.mrb[0].mxu0
    %v2173 = vadd.f32 %v1987, %v2172
    %v2174 = vpop.f32.mrb[0].mxu0
    %v2175 = vpop.f32.mrb[0].mxu0
    %v2176 = vpop.f32.mrb[0].mxu0
    %2177 = vdwg.mxu0
    %v2178 = vadd.f32 %v2051, %v2093
    %v2179 = vxor.u32 %v2178, 2147483648
    %v2180 = vmul.f32 %v2179, 1.442695
    %v2181 = vpow.pop %v2180
    %v2182 = vadd.f32 %v2181, 1.0
    %v2183 = vrcp.pop %v2182
    %v2184 = vmul.f32 1.0, %v2183
    %v2185 = vadd.f32 %v2052, %v2133
    %v2186 = vxor.u32 %v2185, 2147483648
    %v2187 = vmul.f32 %v2186, 1.442695
    %v2188 = vpow.pop %v2187
    %v2189 = vadd.f32 %v2188, 1.0
    %v2190 = vrcp.pop %v2189
    %v2191 = vmul.f32 1.0, %v2190
    %v2192 = vmul.f32 %v2184, %v2173
    %v2193 = vadd.f32 %v2053, %v2192
    %v2194 = vtanh.pop %v2193
    %v2195 = vsub.f32 1.0, %v2191
    %v2196 = vmul.f32 %v2195, %v2194
    %v2197 = vmul.f32 %v2191, %v2049
    %v2198 = vadd.f32 %v2196, %v2197
    %2199 = vst.msk [vmem:[%s765] sm:$0x3] %vm612, %v2198
    %v2200 = vld [vmem:[%s767] sm:$0x3]
    %v2201 = vld [vmem:[%s769] sm:$0x3]
    %v2202 = vld [vmem:[%s771] sm:$0x3]
    %v2203 = vpack.c.bf16 %v2198, %v2198
    %v2205 = vsel %vm259, %v2203, 0
    %2207 = vmatprep.subr.bf16.mxu0 0
    %2208 = vmatpush1.bf16.msra.mxu0 %v1867
    %2209 = vmatprep.subr.bf16.mxu0 0
    %2210 = vmatpush1.bf16.msra.mxu0 %v1868
    %2211 = vmatprep.subr.bf16.mxu0 0
    %2212 = vmatpush1.bf16.msra.mxu0 0
    %2213 = vmatprep.subr.bf16.mxu0 0
    %2214 = vmatpush1.bf16.msra.mxu0 0
    %2215 = vmatprep.subr.bf16.mxu0 0
    %2216 = vmatpush1.bf16.msra.mxu0 0
    %2217 = vmatprep.subr.bf16.mxu0 0
    %2218 = vmatpush1.bf16.msra.mxu0 0
    %2219 = vmatprep.subr.bf16.mxu0 0
    %2220 = vmatpush1.bf16.msra.mxu0 0
    %2221 = vmatprep.subr.bf16.mxu0 0
    %2222 = vmatpush1.bf16.msra.mxu0 0
    %2223 = vmatprep.subr.bf16.mxu0 0
    %2224 = vmatpush1.bf16.msra.mxu0 0
    %2225 = vmatprep.subr.bf16.mxu0 0
    %2226 = vmatpush1.bf16.msra.mxu0 0
    %2227 = vmatprep.subr.bf16.mxu0 0
    %2228 = vmatpush1.bf16.msra.mxu0 0
    %2229 = vmatprep.subr.bf16.mxu0 0
    %2230 = vmatpush1.bf16.msra.mxu0 0
    %2231 = vmatprep.subr.bf16.mxu0 0
    %2232 = vmatpush1.bf16.msra.mxu0 0
    %2233 = vmatprep.subr.bf16.mxu0 0
    %2234 = vmatpush1.bf16.msra.mxu0 0
    %2235 = vmatprep.subr.bf16.mxu0 0
    %2236 = vmatpush1.bf16.msra.mxu0 0
    %2237 = vmatprep.subr.bf16.mxu0 0
    %2238 = vmatpush1.bf16.msra.mxu0 0
    %2239 = vmatprep.mubr.bf16.mxu0 0
    %2240 = vmatmul.mubr.bf16.gmra.mrb[0].mxu0 %v2205
    %v2241 = vpop.f32.mrb[0].mxu0
    %v2242 = vadd.f32 %v1895, %v2241
    %v2243 = vpop.f32.mrb[0].mxu0
    %v2244 = vpop.f32.mrb[0].mxu0
    %v2245 = vpop.f32.mrb[0].mxu0
    %2246 = vdwg.mxu0
    %2247 = vmatprep.subr.bf16.mxu0 0
    %2248 = vmatpush1.bf16.msra.mxu0 %v1874
    %2249 = vmatprep.subr.bf16.mxu0 0
    %2250 = vmatpush1.bf16.msra.mxu0 %v1875
    %2251 = vmatprep.subr.bf16.mxu0 0
    %2252 = vmatpush1.bf16.msra.mxu0 0
    %2253 = vmatprep.subr.bf16.mxu0 0
    %2254 = vmatpush1.bf16.msra.mxu0 0
    %2255 = vmatprep.subr.bf16.mxu0 0
    %2256 = vmatpush1.bf16.msra.mxu0 0
    %2257 = vmatprep.subr.bf16.mxu0 0
    %2258 = vmatpush1.bf16.msra.mxu0 0
    %2259 = vmatprep.subr.bf16.mxu0 0
    %2260 = vmatpush1.bf16.msra.mxu0 0
    %2261 = vmatprep.subr.bf16.mxu0 0
    %2262 = vmatpush1.bf16.msra.mxu0 0
    %2263 = vmatprep.subr.bf16.mxu0 0
    %2264 = vmatpush1.bf16.msra.mxu0 0
    %2265 = vmatprep.subr.bf16.mxu0 0
    %2266 = vmatpush1.bf16.msra.mxu0 0
    %2267 = vmatprep.subr.bf16.mxu0 0
    %2268 = vmatpush1.bf16.msra.mxu0 0
    %2269 = vmatprep.subr.bf16.mxu0 0
    %2270 = vmatpush1.bf16.msra.mxu0 0
    %2271 = vmatprep.subr.bf16.mxu0 0
    %2272 = vmatpush1.bf16.msra.mxu0 0
    %2273 = vmatprep.subr.bf16.mxu0 0
    %2274 = vmatpush1.bf16.msra.mxu0 0
    %2275 = vmatprep.subr.bf16.mxu0 0
    %2276 = vmatpush1.bf16.msra.mxu0 0
    %2277 = vmatprep.subr.bf16.mxu0 0
    %2278 = vmatpush1.bf16.msra.mxu0 0
    %2279 = vmatprep.mubr.bf16.mxu0 0
    %2280 = vmatmul.mubr.bf16.gmra.mrb[0].mxu0 %v2205
    %v2281 = vpop.f32.mrb[0].mxu0
    %v2282 = vadd.f32 %v1941, %v2281
    %v2283 = vpop.f32.mrb[0].mxu0
    %v2284 = vpop.f32.mrb[0].mxu0
    %v2285 = vpop.f32.mrb[0].mxu0
    %2286 = vdwg.mxu0
    %2287 = vmatprep.subr.bf16.mxu0 0
    %2288 = vmatpush1.bf16.msra.mxu0 %v1881
    %2289 = vmatprep.subr.bf16.mxu0 0
    %2290 = vmatpush1.bf16.msra.mxu0 %v1882
    %2291 = vmatprep.subr.bf16.mxu0 0
    %2292 = vmatpush1.bf16.msra.mxu0 0
    %2293 = vmatprep.subr.bf16.mxu0 0
    %2294 = vmatpush1.bf16.msra.mxu0 0
    %2295 = vmatprep.subr.bf16.mxu0 0
    %2296 = vmatpush1.bf16.msra.mxu0 0
    %2297 = vmatprep.subr.bf16.mxu0 0
    %2298 = vmatpush1.bf16.msra.mxu0 0
    %2299 = vmatprep.subr.bf16.mxu0 0
    %2300 = vmatpush1.bf16.msra.mxu0 0
    %2301 = vmatprep.subr.bf16.mxu0 0
    %2302 = vmatpush1.bf16.msra.mxu0 0
    %2303 = vmatprep.subr.bf16.mxu0 0
    %2304 = vmatpush1.bf16.msra.mxu0 0
    %2305 = vmatprep.subr.bf16.mxu0 0
    %2306 = vmatpush1.bf16.msra.mxu0 0
    %2307 = vmatprep.subr.bf16.mxu0 0
    %2308 = vmatpush1.bf16.msra.mxu0 0
    %2309 = vmatprep.subr.bf16.mxu0 0
    %2310 = vmatpush1.bf16.msra.mxu0 0
    %2311 = vmatprep.subr.bf16.mxu0 0
    %2312 = vmatpush1.bf16.msra.mxu0 0
    %2313 = vmatprep.subr.bf16.mxu0 0
    %2314 = vmatpush1.bf16.msra.mxu0 0
    %2315 = vmatprep.subr.bf16.mxu0 0
    %2316 = vmatpush1.bf16.msra.mxu0 0
    %2317 = vmatprep.subr.bf16.mxu0 0
    %2318 = vmatpush1.bf16.msra.mxu0 0
    %2319 = vmatprep.mubr.bf16.mxu0 0
    %2320 = vmatmul.mubr.bf16.gmra.mrb[0].mxu0 %v2205
    %v2321 = vpop.f32.mrb[0].mxu0
    %v2322 = vadd.f32 %v1987, %v2321
    %v2323 = vpop.f32.mrb[0].mxu0
    %v2324 = vpop.f32.mrb[0].mxu0
    %v2325 = vpop.f32.mrb[0].mxu0
    %2326 = vdwg.mxu0
    %v2327 = vadd.f32 %v2200, %v2242
    %v2328 = vxor.u32 %v2327, 2147483648
    %v2329 = vmul.f32 %v2328, 1.442695
    %v2330 = vpow.pop %v2329
    %v2331 = vadd.f32 %v2330, 1.0
    %v2332 = vrcp.pop %v2331
    %v2333 = vmul.f32 1.0, %v2332
    %v2334 = vadd.f32 %v2201, %v2282
    %v2335 = vxor.u32 %v2334, 2147483648
    %v2336 = vmul.f32 %v2335, 1.442695
    %v2337 = vpow.pop %v2336
    %v2338 = vadd.f32 %v2337, 1.0
    %v2339 = vrcp.pop %v2338
    %v2340 = vmul.f32 1.0, %v2339
    %v2341 = vmul.f32 %v2333, %v2322
    %v2342 = vadd.f32 %v2202, %v2341
    %v2343 = vtanh.pop %v2342
    %v2344 = vsub.f32 1.0, %v2340
    %v2345 = vmul.f32 %v2344, %v2343
    %v2346 = vmul.f32 %v2340, %v2198
    %v2347 = vadd.f32 %v2345, %v2346
    %2348 = vst.msk [vmem:[%s918] sm:$0x3] %vm612, %v2347
    %v2349 = vld [vmem:[%s920] sm:$0x3]
    %v2350 = vld [vmem:[%s922] sm:$0x3]
    %v2351 = vld [vmem:[%s924] sm:$0x3]
    %v2352 = vpack.c.bf16 %v2347, %v2347
    %v2354 = vsel %vm259, %v2352, 0
    %2356 = vmatprep.subr.bf16.mxu0 0
    %2357 = vmatpush1.bf16.msra.mxu0 %v1867
    %2358 = vmatprep.subr.bf16.mxu0 0
    %2359 = vmatpush1.bf16.msra.mxu0 %v1868
    %2360 = vmatprep.subr.bf16.mxu0 0
    %2361 = vmatpush1.bf16.msra.mxu0 0
    %2362 = vmatprep.subr.bf16.mxu0 0
    %2363 = vmatpush1.bf16.msra.mxu0 0
    %2364 = vmatprep.subr.bf16.mxu0 0
    %2365 = vmatpush1.bf16.msra.mxu0 0
    %2366 = vmatprep.subr.bf16.mxu0 0
    %2367 = vmatpush1.bf16.msra.mxu0 0
    %2368 = vmatprep.subr.bf16.mxu0 0
    %2369 = vmatpush1.bf16.msra.mxu0 0
    %2370 = vmatprep.subr.bf16.mxu0 0
    %2371 = vmatpush1.bf16.msra.mxu0 0
    %2372 = vmatprep.subr.bf16.mxu0 0
    %2373 = vmatpush1.bf16.msra.mxu0 0
    %2374 = vmatprep.subr.bf16.mxu0 0
    %2375 = vmatpush1.bf16.msra.mxu0 0
    %2376 = vmatprep.subr.bf16.mxu0 0
    %2377 = vmatpush1.bf16.msra.mxu0 0
    %2378 = vmatprep.subr.bf16.mxu0 0
    %2379 = vmatpush1.bf16.msra.mxu0 0
    %2380 = vmatprep.subr.bf16.mxu0 0
    %2381 = vmatpush1.bf16.msra.mxu0 0
    %2382 = vmatprep.subr.bf16.mxu0 0
    %2383 = vmatpush1.bf16.msra.mxu0 0
    %2384 = vmatprep.subr.bf16.mxu0 0
    %2385 = vmatpush1.bf16.msra.mxu0 0
    %2386 = vmatprep.subr.bf16.mxu0 0
    %2387 = vmatpush1.bf16.msra.mxu0 0
    %2388 = vmatprep.mubr.bf16.mxu0 0
    %2389 = vmatmul.mubr.bf16.gmra.mrb[0].mxu0 %v2354
    %v2390 = vpop.f32.mrb[0].mxu0
    %v2391 = vadd.f32 %v1895, %v2390
    %v2392 = vpop.f32.mrb[0].mxu0
    %v2393 = vpop.f32.mrb[0].mxu0
    %v2394 = vpop.f32.mrb[0].mxu0
    %2395 = vdwg.mxu0
    %2396 = vmatprep.subr.bf16.mxu0 0
    %2397 = vmatpush1.bf16.msra.mxu0 %v1874
    %2398 = vmatprep.subr.bf16.mxu0 0
    %2399 = vmatpush1.bf16.msra.mxu0 %v1875
    %2400 = vmatprep.subr.bf16.mxu0 0
    %2401 = vmatpush1.bf16.msra.mxu0 0
    %2402 = vmatprep.subr.bf16.mxu0 0
    %2403 = vmatpush1.bf16.msra.mxu0 0
    %2404 = vmatprep.subr.bf16.mxu0 0
    %2405 = vmatpush1.bf16.msra.mxu0 0
    %2406 = vmatprep.subr.bf16.mxu0 0
    %2407 = vmatpush1.bf16.msra.mxu0 0
    %2408 = vmatprep.subr.bf16.mxu0 0
    %2409 = vmatpush1.bf16.msra.mxu0 0
    %2410 = vmatprep.subr.bf16.mxu0 0
    %2411 = vmatpush1.bf16.msra.mxu0 0
    %2412 = vmatprep.subr.bf16.mxu0 0
    %2413 = vmatpush1.bf16.msra.mxu0 0
    %2414 = vmatprep.subr.bf16.mxu0 0
    %2415 = vmatpush1.bf16.msra.mxu0 0
    %2416 = vmatprep.subr.bf16.mxu0 0
    %2417 = vmatpush1.bf16.msra.mxu0 0
    %2418 = vmatprep.subr.bf16.mxu0 0
    %2419 = vmatpush1.bf16.msra.mxu0 0
    %2420 = vmatprep.subr.bf16.mxu0 0
    %2421 = vmatpush1.bf16.msra.mxu0 0
    %2422 = vmatprep.subr.bf16.mxu0 0
    %2423 = vmatpush1.bf16.msra.mxu0 0
    %2424 = vmatprep.subr.bf16.mxu0 0
    %2425 = vmatpush1.bf16.msra.mxu0 0
    %2426 = vmatprep.subr.bf16.mxu0 0
    %2427 = vmatpush1.bf16.msra.mxu0 0
    %2428 = vmatprep.mubr.bf16.mxu0 0
    %2429 = vmatmul.mubr.bf16.gmra.mrb[0].mxu0 %v2354
    %v2430 = vpop.f32.mrb[0].mxu0
    %v2431 = vadd.f32 %v1941, %v2430
    %v2432 = vpop.f32.mrb[0].mxu0
    %v2433 = vpop.f32.mrb[0].mxu0
    %v2434 = vpop.f32.mrb[0].mxu0
    %2435 = vdwg.mxu0
    %2436 = vmatprep.subr.bf16.mxu0 0
    %2437 = vmatpush1.bf16.msra.mxu0 %v1881
    %2438 = vmatprep.subr.bf16.mxu0 0
    %2439 = vmatpush1.bf16.msra.mxu0 %v1882
    %2440 = vmatprep.subr.bf16.mxu0 0
    %2441 = vmatpush1.bf16.msra.mxu0 0
    %2442 = vmatprep.subr.bf16.mxu0 0
    %2443 = vmatpush1.bf16.msra.mxu0 0
    %2444 = vmatprep.subr.bf16.mxu0 0
    %2445 = vmatpush1.bf16.msra.mxu0 0
    %2446 = vmatprep.subr.bf16.mxu0 0
    %2447 = vmatpush1.bf16.msra.mxu0 0
    %2448 = vmatprep.subr.bf16.mxu0 0
    %2449 = vmatpush1.bf16.msra.mxu0 0
    %2450 = vmatprep.subr.bf16.mxu0 0
    %2451 = vmatpush1.bf16.msra.mxu0 0
    %2452 = vmatprep.subr.bf16.mxu0 0
    %2453 = vmatpush1.bf16.msra.mxu0 0
    %2454 = vmatprep.subr.bf16.mxu0 0
    %2455 = vmatpush1.bf16.msra.mxu0 0
    %2456 = vmatprep.subr.bf16.mxu0 0
    %2457 = vmatpush1.bf16.msra.mxu0 0
    %2458 = vmatprep.subr.bf16.mxu0 0
    %2459 = vmatpush1.bf16.msra.mxu0 0
    %2460 = vmatprep.subr.bf16.mxu0 0
    %2461 = vmatpush1.bf16.msra.mxu0 0
    %2462 = vmatprep.subr.bf16.mxu0 0
    %2463 = vmatpush1.bf16.msra.mxu0 0
    %2464 = vmatprep.subr.bf16.mxu0 0
    %2465 = vmatpush1.bf16.msra.mxu0 0
    %2466 = vmatprep.subr.bf16.mxu0 0
    %2467 = vmatpush1.bf16.msra.mxu0 0
    %2468 = vmatprep.mubr.bf16.mxu0 0
    %2469 = vmatmul.mubr.bf16.gmra.mrb[0].mxu0 %v2354
    %v2470 = vpop.f32.mrb[0].mxu0
    %v2471 = vadd.f32 %v1987, %v2470
    %v2472 = vpop.f32.mrb[0].mxu0
    %v2473 = vpop.f32.mrb[0].mxu0
    %v2474 = vpop.f32.mrb[0].mxu0
    %2475 = vdwg.mxu0
    %v2476 = vadd.f32 %v2349, %v2391
    %v2477 = vxor.u32 %v2476, 2147483648
    %v2478 = vmul.f32 %v2477, 1.442695
    %v2479 = vpow.pop %v2478
    %v2480 = vadd.f32 %v2479, 1.0
    %v2481 = vrcp.pop %v2480
    %v2482 = vmul.f32 1.0, %v2481
    %v2483 = vadd.f32 %v2350, %v2431
    %v2484 = vxor.u32 %v2483, 2147483648
    %v2485 = vmul.f32 %v2484, 1.442695
    %v2486 = vpow.pop %v2485
    %v2487 = vadd.f32 %v2486, 1.0
    %v2488 = vrcp.pop %v2487
    %v2489 = vmul.f32 1.0, %v2488
    %v2490 = vmul.f32 %v2482, %v2471
    %v2491 = vadd.f32 %v2351, %v2490
    %v2492 = vtanh.pop %v2491
    %v2493 = vsub.f32 1.0, %v2489
    %v2494 = vmul.f32 %v2493, %v2492
    %v2495 = vmul.f32 %v2489, %v2347
    %v2496 = vadd.f32 %v2494, %v2495
    %2497 = vst.msk [vmem:[%s1071] sm:$0x3] %vm612, %v2496
    %v2498 = vld [vmem:[%s1073] sm:$0x3]
    %v2499 = vld [vmem:[%s1075] sm:$0x3]
    %v2500 = vld [vmem:[%s1077] sm:$0x3]
    %v2501 = vpack.c.bf16 %v2496, %v2496
    %v2503 = vsel %vm259, %v2501, 0
    %2505 = vmatprep.subr.bf16.mxu0 0
    %2506 = vmatpush1.bf16.msra.mxu0 %v1867
    %2507 = vmatprep.subr.bf16.mxu0 0
    %2508 = vmatpush1.bf16.msra.mxu0 %v1868
    %2509 = vmatprep.subr.bf16.mxu0 0
    %2510 = vmatpush1.bf16.msra.mxu0 0
    %2511 = vmatprep.subr.bf16.mxu0 0
    %2512 = vmatpush1.bf16.msra.mxu0 0
    %2513 = vmatprep.subr.bf16.mxu0 0
    %2514 = vmatpush1.bf16.msra.mxu0 0
    %2515 = vmatprep.subr.bf16.mxu0 0
    %2516 = vmatpush1.bf16.msra.mxu0 0
    %2517 = vmatprep.subr.bf16.mxu0 0
    %2518 = vmatpush1.bf16.msra.mxu0 0
    %2519 = vmatprep.subr.bf16.mxu0 0
    %2520 = vmatpush1.bf16.msra.mxu0 0
    %2521 = vmatprep.subr.bf16.mxu0 0
    %2522 = vmatpush1.bf16.msra.mxu0 0
    %2523 = vmatprep.subr.bf16.mxu0 0
    %2524 = vmatpush1.bf16.msra.mxu0 0
    %2525 = vmatprep.subr.bf16.mxu0 0
    %2526 = vmatpush1.bf16.msra.mxu0 0
    %2527 = vmatprep.subr.bf16.mxu0 0
    %2528 = vmatpush1.bf16.msra.mxu0 0
    %2529 = vmatprep.subr.bf16.mxu0 0
    %2530 = vmatpush1.bf16.msra.mxu0 0
    %2531 = vmatprep.subr.bf16.mxu0 0
    %2532 = vmatpush1.bf16.msra.mxu0 0
    %2533 = vmatprep.subr.bf16.mxu0 0
    %2534 = vmatpush1.bf16.msra.mxu0 0
    %2535 = vmatprep.subr.bf16.mxu0 0
    %2536 = vmatpush1.bf16.msra.mxu0 0
    %2537 = vmatprep.mubr.bf16.mxu0 0
    %2538 = vmatmul.mubr.bf16.gmra.mrb[0].mxu0 %v2503
    %v2539 = vpop.f32.mrb[0].mxu0
    %v2540 = vadd.f32 %v1895, %v2539
    %v2541 = vpop.f32.mrb[0].mxu0
    %v2542 = vpop.f32.mrb[0].mxu0
    %v2543 = vpop.f32.mrb[0].mxu0
    %2544 = vdwg.mxu0
    %2545 = vmatprep.subr.bf16.mxu0 0
    %2546 = vmatpush1.bf16.msra.mxu0 %v1874
    %2547 = vmatprep.subr.bf16.mxu0 0
    %2548 = vmatpush1.bf16.msra.mxu0 %v1875
    %2549 = vmatprep.subr.bf16.mxu0 0
    %2550 = vmatpush1.bf16.msra.mxu0 0
    %2551 = vmatprep.subr.bf16.mxu0 0
    %2552 = vmatpush1.bf16.msra.mxu0 0
    %2553 = vmatprep.subr.bf16.mxu0 0
    %2554 = vmatpush1.bf16.msra.mxu0 0
    %2555 = vmatprep.subr.bf16.mxu0 0
    %2556 = vmatpush1.bf16.msra.mxu0 0
    %2557 = vmatprep.subr.bf16.mxu0 0
    %2558 = vmatpush1.bf16.msra.mxu0 0
    %2559 = vmatprep.subr.bf16.mxu0 0
    %2560 = vmatpush1.bf16.msra.mxu0 0
    %2561 = vmatprep.subr.bf16.mxu0 0
    %2562 = vmatpush1.bf16.msra.mxu0 0
    %2563 = vmatprep.subr.bf16.mxu0 0
    %2564 = vmatpush1.bf16.msra.mxu0 0
    %2565 = vmatprep.subr.bf16.mxu0 0
    %2566 = vmatpush1.bf16.msra.mxu0 0
    %2567 = vmatprep.subr.bf16.mxu0 0
    %2568 = vmatpush1.bf16.msra.mxu0 0
    %2569 = vmatprep.subr.bf16.mxu0 0
    %2570 = vmatpush1.bf16.msra.mxu0 0
    %2571 = vmatprep.subr.bf16.mxu0 0
    %2572 = vmatpush1.bf16.msra.mxu0 0
    %2573 = vmatprep.subr.bf16.mxu0 0
    %2574 = vmatpush1.bf16.msra.mxu0 0
    %2575 = vmatprep.subr.bf16.mxu0 0
    %2576 = vmatpush1.bf16.msra.mxu0 0
    %2577 = vmatprep.mubr.bf16.mxu0 0
    %2578 = vmatmul.mubr.bf16.gmra.mrb[0].mxu0 %v2503
    %v2579 = vpop.f32.mrb[0].mxu0
    %v2580 = vadd.f32 %v1941, %v2579
    %v2581 = vpop.f32.mrb[0].mxu0
    %v2582 = vpop.f32.mrb[0].mxu0
    %v2583 = vpop.f32.mrb[0].mxu0
    %2584 = vdwg.mxu0
    %2585 = vmatprep.subr.bf16.mxu0 0
    %2586 = vmatpush1.bf16.msra.mxu0 %v1881
    %2587 = vmatprep.subr.bf16.mxu0 0
    %2588 = vmatpush1.bf16.msra.mxu0 %v1882
    %2589 = vmatprep.subr.bf16.mxu0 0
    %2590 = vmatpush1.bf16.msra.mxu0 0
    %2591 = vmatprep.subr.bf16.mxu0 0
    %2592 = vmatpush1.bf16.msra.mxu0 0
    %2593 = vmatprep.subr.bf16.mxu0 0
    %2594 = vmatpush1.bf16.msra.mxu0 0
    %2595 = vmatprep.subr.bf16.mxu0 0
    %2596 = vmatpush1.bf16.msra.mxu0 0
    %2597 = vmatprep.subr.bf16.mxu0 0
    %2598 = vmatpush1.bf16.msra.mxu0 0
    %2599 = vmatprep.subr.bf16.mxu0 0
    %2600 = vmatpush1.bf16.msra.mxu0 0
    %2601 = vmatprep.subr.bf16.mxu0 0
    %2602 = vmatpush1.bf16.msra.mxu0 0
    %2603 = vmatprep.subr.bf16.mxu0 0
    %2604 = vmatpush1.bf16.msra.mxu0 0
    %2605 = vmatprep.subr.bf16.mxu0 0
    %2606 = vmatpush1.bf16.msra.mxu0 0
    %2607 = vmatprep.subr.bf16.mxu0 0
    %2608 = vmatpush1.bf16.msra.mxu0 0
    %2609 = vmatprep.subr.bf16.mxu0 0
    %2610 = vmatpush1.bf16.msra.mxu0 0
    %2611 = vmatprep.subr.bf16.mxu0 0
    %2612 = vmatpush1.bf16.msra.mxu0 0
    %2613 = vmatprep.subr.bf16.mxu0 0
    %2614 = vmatpush1.bf16.msra.mxu0 0
    %2615 = vmatprep.subr.bf16.mxu0 0
    %2616 = vmatpush1.bf16.msra.mxu0 0
    %2617 = vmatprep.mubr.bf16.mxu0 0
    %2618 = vmatmul.mubr.bf16.gmra.mrb[0].mxu0 %v2503
    %v2619 = vpop.f32.mrb[0].mxu0
    %v2620 = vadd.f32 %v1987, %v2619
    %v2621 = vpop.f32.mrb[0].mxu0
    %v2622 = vpop.f32.mrb[0].mxu0
    %v2623 = vpop.f32.mrb[0].mxu0
    %2624 = vdwg.mxu0
    %v2625 = vadd.f32 %v2498, %v2540
    %v2626 = vxor.u32 %v2625, 2147483648
    %v2627 = vmul.f32 %v2626, 1.442695
    %v2628 = vpow.pop %v2627
    %v2629 = vadd.f32 %v2628, 1.0
    %v2630 = vrcp.pop %v2629
    %v2631 = vmul.f32 1.0, %v2630
    %v2632 = vadd.f32 %v2499, %v2580
    %v2633 = vxor.u32 %v2632, 2147483648
    %v2634 = vmul.f32 %v2633, 1.442695
    %v2635 = vpow.pop %v2634
    %v2636 = vadd.f32 %v2635, 1.0
    %v2637 = vrcp.pop %v2636
    %v2638 = vmul.f32 1.0, %v2637
    %v2639 = vmul.f32 %v2631, %v2620
    %v2640 = vadd.f32 %v2500, %v2639
    %v2641 = vtanh.pop %v2640
    %v2642 = vsub.f32 1.0, %v2638
    %v2643 = vmul.f32 %v2642, %v2641
    %v2644 = vmul.f32 %v2638, %v2496
    %v2645 = vadd.f32 %v2643, %v2644
    %2646 = vst.msk [vmem:[%s1224] sm:$0x3] %vm612, %v2645
    %v2647 = vld [vmem:[%s1226] sm:$0x3]
    %v2648 = vld [vmem:[%s1228] sm:$0x3]
    %v2649 = vld [vmem:[%s1230] sm:$0x3]
    %v2650 = vpack.c.bf16 %v2645, %v2645
    %v2652 = vsel %vm259, %v2650, 0
    %2654 = vmatprep.subr.bf16.mxu0 0
    %2655 = vmatpush1.bf16.msra.mxu0 %v1867
    %2656 = vmatprep.subr.bf16.mxu0 0
    %2657 = vmatpush1.bf16.msra.mxu0 %v1868
    %2658 = vmatprep.subr.bf16.mxu0 0
    %2659 = vmatpush1.bf16.msra.mxu0 0
    %2660 = vmatprep.subr.bf16.mxu0 0
    %2661 = vmatpush1.bf16.msra.mxu0 0
    %2662 = vmatprep.subr.bf16.mxu0 0
    %2663 = vmatpush1.bf16.msra.mxu0 0
    %2664 = vmatprep.subr.bf16.mxu0 0
    %2665 = vmatpush1.bf16.msra.mxu0 0
    %2666 = vmatprep.subr.bf16.mxu0 0
    %2667 = vmatpush1.bf16.msra.mxu0 0
    %2668 = vmatprep.subr.bf16.mxu0 0
    %2669 = vmatpush1.bf16.msra.mxu0 0
    %2670 = vmatprep.subr.bf16.mxu0 0
    %2671 = vmatpush1.bf16.msra.mxu0 0
    %2672 = vmatprep.subr.bf16.mxu0 0
    %2673 = vmatpush1.bf16.msra.mxu0 0
    %2674 = vmatprep.subr.bf16.mxu0 0
    %2675 = vmatpush1.bf16.msra.mxu0 0
    %2676 = vmatprep.subr.bf16.mxu0 0
    %2677 = vmatpush1.bf16.msra.mxu0 0
    %2678 = vmatprep.subr.bf16.mxu0 0
    %2679 = vmatpush1.bf16.msra.mxu0 0
    %2680 = vmatprep.subr.bf16.mxu0 0
    %2681 = vmatpush1.bf16.msra.mxu0 0
    %2682 = vmatprep.subr.bf16.mxu0 0
    %2683 = vmatpush1.bf16.msra.mxu0 0
    %2684 = vmatprep.subr.bf16.mxu0 0
    %2685 = vmatpush1.bf16.msra.mxu0 0
    %2686 = vmatprep.mubr.bf16.mxu0 0
    %2687 = vmatmul.mubr.bf16.gmra.mrb[0].mxu0 %v2652
    %v2688 = vpop.f32.mrb[0].mxu0
    %v2689 = vadd.f32 %v1895, %v2688
    %v2690 = vpop.f32.mrb[0].mxu0
    %v2691 = vpop.f32.mrb[0].mxu0
    %v2692 = vpop.f32.mrb[0].mxu0
    %2693 = vdwg.mxu0
    %2694 = vmatprep.subr.bf16.mxu0 0
    %2695 = vmatpush1.bf16.msra.mxu0 %v1874
    %2696 = vmatprep.subr.bf16.mxu0 0
    %2697 = vmatpush1.bf16.msra.mxu0 %v1875
    %2698 = vmatprep.subr.bf16.mxu0 0
    %2699 = vmatpush1.bf16.msra.mxu0 0
    %2700 = vmatprep.subr.bf16.mxu0 0
    %2701 = vmatpush1.bf16.msra.mxu0 0
    %2702 = vmatprep.subr.bf16.mxu0 0
    %2703 = vmatpush1.bf16.msra.mxu0 0
    %2704 = vmatprep.subr.bf16.mxu0 0
    %2705 = vmatpush1.bf16.msra.mxu0 0
    %2706 = vmatprep.subr.bf16.mxu0 0
    %2707 = vmatpush1.bf16.msra.mxu0 0
    %2708 = vmatprep.subr.bf16.mxu0 0
    %2709 = vmatpush1.bf16.msra.mxu0 0
    %2710 = vmatprep.subr.bf16.mxu0 0
    %2711 = vmatpush1.bf16.msra.mxu0 0
    %2712 = vmatprep.subr.bf16.mxu0 0
    %2713 = vmatpush1.bf16.msra.mxu0 0
    %2714 = vmatprep.subr.bf16.mxu0 0
    %2715 = vmatpush1.bf16.msra.mxu0 0
    %2716 = vmatprep.subr.bf16.mxu0 0
    %2717 = vmatpush1.bf16.msra.mxu0 0
    %2718 = vmatprep.subr.bf16.mxu0 0
    %2719 = vmatpush1.bf16.msra.mxu0 0
    %2720 = vmatprep.subr.bf16.mxu0 0
    %2721 = vmatpush1.bf16.msra.mxu0 0
    %2722 = vmatprep.subr.bf16.mxu0 0
    %2723 = vmatpush1.bf16.msra.mxu0 0
    %2724 = vmatprep.subr.bf16.mxu0 0
    %2725 = vmatpush1.bf16.msra.mxu0 0
    %2726 = vmatprep.mubr.bf16.mxu0 0
    %2727 = vmatmul.mubr.bf16.gmra.mrb[0].mxu0 %v2652
    %v2728 = vpop.f32.mrb[0].mxu0
    %v2729 = vadd.f32 %v1941, %v2728
    %v2730 = vpop.f32.mrb[0].mxu0
    %v2731 = vpop.f32.mrb[0].mxu0
    %v2732 = vpop.f32.mrb[0].mxu0
    %2733 = vdwg.mxu0
    %2734 = vmatprep.subr.bf16.mxu0 0
    %2735 = vmatpush1.bf16.msra.mxu0 %v1881
    %2736 = vmatprep.subr.bf16.mxu0 0
    %2737 = vmatpush1.bf16.msra.mxu0 %v1882
    %2738 = vmatprep.subr.bf16.mxu0 0
    %2739 = vmatpush1.bf16.msra.mxu0 0
    %2740 = vmatprep.subr.bf16.mxu0 0
    %2741 = vmatpush1.bf16.msra.mxu0 0
    %2742 = vmatprep.subr.bf16.mxu0 0
    %2743 = vmatpush1.bf16.msra.mxu0 0
    %2744 = vmatprep.subr.bf16.mxu0 0
    %2745 = vmatpush1.bf16.msra.mxu0 0
    %2746 = vmatprep.subr.bf16.mxu0 0
    %2747 = vmatpush1.bf16.msra.mxu0 0
    %2748 = vmatprep.subr.bf16.mxu0 0
    %2749 = vmatpush1.bf16.msra.mxu0 0
    %2750 = vmatprep.subr.bf16.mxu0 0
    %2751 = vmatpush1.bf16.msra.mxu0 0
    %2752 = vmatprep.subr.bf16.mxu0 0
    %2753 = vmatpush1.bf16.msra.mxu0 0
    %2754 = vmatprep.subr.bf16.mxu0 0
    %2755 = vmatpush1.bf16.msra.mxu0 0
    %2756 = vmatprep.subr.bf16.mxu0 0
    %2757 = vmatpush1.bf16.msra.mxu0 0
    %2758 = vmatprep.subr.bf16.mxu0 0
    %2759 = vmatpush1.bf16.msra.mxu0 0
    %2760 = vmatprep.subr.bf16.mxu0 0
    %2761 = vmatpush1.bf16.msra.mxu0 0
    %2762 = vmatprep.subr.bf16.mxu0 0
    %2763 = vmatpush1.bf16.msra.mxu0 0
    %2764 = vmatprep.subr.bf16.mxu0 0
    %2765 = vmatpush1.bf16.msra.mxu0 0
    %2766 = vmatprep.mubr.bf16.mxu0 0
    %2767 = vmatmul.mubr.bf16.gmra.mrb[0].mxu0 %v2652
    %v2768 = vpop.f32.mrb[0].mxu0
    %v2769 = vadd.f32 %v1987, %v2768
    %v2770 = vpop.f32.mrb[0].mxu0
    %v2771 = vpop.f32.mrb[0].mxu0
    %v2772 = vpop.f32.mrb[0].mxu0
    %2773 = vdwg.mxu0
    %v2774 = vadd.f32 %v2647, %v2689
    %v2775 = vxor.u32 %v2774, 2147483648
    %v2776 = vmul.f32 %v2775, 1.442695
    %v2777 = vpow.pop %v2776
    %v2778 = vadd.f32 %v2777, 1.0
    %v2779 = vrcp.pop %v2778
    %v2780 = vmul.f32 1.0, %v2779
    %v2781 = vadd.f32 %v2648, %v2729
    %v2782 = vxor.u32 %v2781, 2147483648
    %v2783 = vmul.f32 %v2782, 1.442695
    %v2784 = vpow.pop %v2783
    %v2785 = vadd.f32 %v2784, 1.0
    %v2786 = vrcp.pop %v2785
    %v2787 = vmul.f32 1.0, %v2786
    %v2788 = vmul.f32 %v2780, %v2769
    %v2789 = vadd.f32 %v2649, %v2788
    %v2790 = vtanh.pop %v2789
    %v2791 = vsub.f32 1.0, %v2787
    %v2792 = vmul.f32 %v2791, %v2790
    %v2793 = vmul.f32 %v2787, %v2645
    %v2794 = vadd.f32 %v2792, %v2793
    %2795 = vst.msk [vmem:[%s1377] sm:$0x3] %vm612, %v2794
    %v2796 = vld [vmem:[%s1379] sm:$0x3]
    %v2797 = vld [vmem:[%s1381] sm:$0x3]
    %v2798 = vld [vmem:[%s1383] sm:$0x3]
    %v2799 = vpack.c.bf16 %v2794, %v2794
    %v2801 = vsel %vm259, %v2799, 0
    %2803 = vmatprep.subr.bf16.mxu0 0
    %2804 = vmatpush1.bf16.msra.mxu0 %v1867
    %2805 = vmatprep.subr.bf16.mxu0 0
    %2806 = vmatpush1.bf16.msra.mxu0 %v1868
    %2807 = vmatprep.subr.bf16.mxu0 0
    %2808 = vmatpush1.bf16.msra.mxu0 0
    %2809 = vmatprep.subr.bf16.mxu0 0
    %2810 = vmatpush1.bf16.msra.mxu0 0
    %2811 = vmatprep.subr.bf16.mxu0 0
    %2812 = vmatpush1.bf16.msra.mxu0 0
    %2813 = vmatprep.subr.bf16.mxu0 0
    %2814 = vmatpush1.bf16.msra.mxu0 0
    %2815 = vmatprep.subr.bf16.mxu0 0
    %2816 = vmatpush1.bf16.msra.mxu0 0
    %2817 = vmatprep.subr.bf16.mxu0 0
    %2818 = vmatpush1.bf16.msra.mxu0 0
    %2819 = vmatprep.subr.bf16.mxu0 0
    %2820 = vmatpush1.bf16.msra.mxu0 0
    %2821 = vmatprep.subr.bf16.mxu0 0
    %2822 = vmatpush1.bf16.msra.mxu0 0
    %2823 = vmatprep.subr.bf16.mxu0 0
    %2824 = vmatpush1.bf16.msra.mxu0 0
    %2825 = vmatprep.subr.bf16.mxu0 0
    %2826 = vmatpush1.bf16.msra.mxu0 0
    %2827 = vmatprep.subr.bf16.mxu0 0
    %2828 = vmatpush1.bf16.msra.mxu0 0
    %2829 = vmatprep.subr.bf16.mxu0 0
    %2830 = vmatpush1.bf16.msra.mxu0 0
    %2831 = vmatprep.subr.bf16.mxu0 0
    %2832 = vmatpush1.bf16.msra.mxu0 0
    %2833 = vmatprep.subr.bf16.mxu0 0
    %2834 = vmatpush1.bf16.msra.mxu0 0
    %2835 = vmatprep.mubr.bf16.mxu0 0
    %2836 = vmatmul.mubr.bf16.gmra.mrb[0].mxu0 %v2801
    %v2837 = vpop.f32.mrb[0].mxu0
    %v2838 = vadd.f32 %v1895, %v2837
    %v2839 = vpop.f32.mrb[0].mxu0
    %v2840 = vpop.f32.mrb[0].mxu0
    %v2841 = vpop.f32.mrb[0].mxu0
    %2842 = vdwg.mxu0
    %2843 = vmatprep.subr.bf16.mxu0 0
    %2844 = vmatpush1.bf16.msra.mxu0 %v1874
    %2845 = vmatprep.subr.bf16.mxu0 0
    %2846 = vmatpush1.bf16.msra.mxu0 %v1875
    %2847 = vmatprep.subr.bf16.mxu0 0
    %2848 = vmatpush1.bf16.msra.mxu0 0
    %2849 = vmatprep.subr.bf16.mxu0 0
    %2850 = vmatpush1.bf16.msra.mxu0 0
    %2851 = vmatprep.subr.bf16.mxu0 0
    %2852 = vmatpush1.bf16.msra.mxu0 0
    %2853 = vmatprep.subr.bf16.mxu0 0
    %2854 = vmatpush1.bf16.msra.mxu0 0
    %2855 = vmatprep.subr.bf16.mxu0 0
    %2856 = vmatpush1.bf16.msra.mxu0 0
    %2857 = vmatprep.subr.bf16.mxu0 0
    %2858 = vmatpush1.bf16.msra.mxu0 0
    %2859 = vmatprep.subr.bf16.mxu0 0
    %2860 = vmatpush1.bf16.msra.mxu0 0
    %2861 = vmatprep.subr.bf16.mxu0 0
    %2862 = vmatpush1.bf16.msra.mxu0 0
    %2863 = vmatprep.subr.bf16.mxu0 0
    %2864 = vmatpush1.bf16.msra.mxu0 0
    %2865 = vmatprep.subr.bf16.mxu0 0
    %2866 = vmatpush1.bf16.msra.mxu0 0
    %2867 = vmatprep.subr.bf16.mxu0 0
    %2868 = vmatpush1.bf16.msra.mxu0 0
    %2869 = vmatprep.subr.bf16.mxu0 0
    %2870 = vmatpush1.bf16.msra.mxu0 0
    %2871 = vmatprep.subr.bf16.mxu0 0
    %2872 = vmatpush1.bf16.msra.mxu0 0
    %2873 = vmatprep.subr.bf16.mxu0 0
    %2874 = vmatpush1.bf16.msra.mxu0 0
    %2875 = vmatprep.mubr.bf16.mxu0 0
    %2876 = vmatmul.mubr.bf16.gmra.mrb[0].mxu0 %v2801
    %v2877 = vpop.f32.mrb[0].mxu0
    %v2878 = vadd.f32 %v1941, %v2877
    %v2879 = vpop.f32.mrb[0].mxu0
    %v2880 = vpop.f32.mrb[0].mxu0
    %v2881 = vpop.f32.mrb[0].mxu0
    %2882 = vdwg.mxu0
    %2883 = vmatprep.subr.bf16.mxu0 0
    %2884 = vmatpush1.bf16.msra.mxu0 %v1881
    %2885 = vmatprep.subr.bf16.mxu0 0
    %2886 = vmatpush1.bf16.msra.mxu0 %v1882
    %2887 = vmatprep.subr.bf16.mxu0 0
    %2888 = vmatpush1.bf16.msra.mxu0 0
    %2889 = vmatprep.subr.bf16.mxu0 0
    %2890 = vmatpush1.bf16.msra.mxu0 0
    %2891 = vmatprep.subr.bf16.mxu0 0
    %2892 = vmatpush1.bf16.msra.mxu0 0
    %2893 = vmatprep.subr.bf16.mxu0 0
    %2894 = vmatpush1.bf16.msra.mxu0 0
    %2895 = vmatprep.subr.bf16.mxu0 0
    %2896 = vmatpush1.bf16.msra.mxu0 0
    %2897 = vmatprep.subr.bf16.mxu0 0
    %2898 = vmatpush1.bf16.msra.mxu0 0
    %2899 = vmatprep.subr.bf16.mxu0 0
    %2900 = vmatpush1.bf16.msra.mxu0 0
    %2901 = vmatprep.subr.bf16.mxu0 0
    %2902 = vmatpush1.bf16.msra.mxu0 0
    %2903 = vmatprep.subr.bf16.mxu0 0
    %2904 = vmatpush1.bf16.msra.mxu0 0
    %2905 = vmatprep.subr.bf16.mxu0 0
    %2906 = vmatpush1.bf16.msra.mxu0 0
    %2907 = vmatprep.subr.bf16.mxu0 0
    %2908 = vmatpush1.bf16.msra.mxu0 0
    %2909 = vmatprep.subr.bf16.mxu0 0
    %2910 = vmatpush1.bf16.msra.mxu0 0
    %2911 = vmatprep.subr.bf16.mxu0 0
    %2912 = vmatpush1.bf16.msra.mxu0 0
    %2913 = vmatprep.subr.bf16.mxu0 0
    %2914 = vmatpush1.bf16.msra.mxu0 0
    %2915 = vmatprep.mubr.bf16.mxu0 0
    %2916 = vmatmul.mubr.bf16.gmra.mrb[0].mxu0 %v2801
    %v2917 = vpop.f32.mrb[0].mxu0
    %v2918 = vadd.f32 %v1987, %v2917
    %v2919 = vpop.f32.mrb[0].mxu0
    %v2920 = vpop.f32.mrb[0].mxu0
    %v2921 = vpop.f32.mrb[0].mxu0
    %2922 = vdwg.mxu0
    %v2923 = vadd.f32 %v2796, %v2838
    %v2924 = vxor.u32 %v2923, 2147483648
    %v2925 = vmul.f32 %v2924, 1.442695
    %v2926 = vpow.pop %v2925
    %v2927 = vadd.f32 %v2926, 1.0
    %v2928 = vrcp.pop %v2927
    %v2929 = vmul.f32 1.0, %v2928
    %v2930 = vadd.f32 %v2797, %v2878
    %v2931 = vxor.u32 %v2930, 2147483648
    %v2932 = vmul.f32 %v2931, 1.442695
    %v2933 = vpow.pop %v2932
    %v2934 = vadd.f32 %v2933, 1.0
    %v2935 = vrcp.pop %v2934
    %v2936 = vmul.f32 1.0, %v2935
    %v2937 = vmul.f32 %v2929, %v2918
    %v2938 = vadd.f32 %v2798, %v2937
    %v2939 = vtanh.pop %v2938
    %v2940 = vsub.f32 1.0, %v2936
    %v2941 = vmul.f32 %v2940, %v2939
    %v2942 = vmul.f32 %v2936, %v2794
    %v2943 = vadd.f32 %v2941, %v2942
    %2944 = vst.msk [vmem:[%s1530] sm:$0x3] %vm612, %v2943
    %v2945 = vld [vmem:[%s1532] sm:$0x3]
    %v2946 = vld [vmem:[%s1534] sm:$0x3]
    %v2947 = vld [vmem:[%s1536] sm:$0x3]
    %v2948 = vpack.c.bf16 %v2943, %v2943
    %v2950 = vsel %vm259, %v2948, 0
    %2952 = vmatprep.subr.bf16.mxu0 0
    %2953 = vmatpush1.bf16.msra.mxu0 %v1867
    %2954 = vmatprep.subr.bf16.mxu0 0
    %2955 = vmatpush1.bf16.msra.mxu0 %v1868
    %2956 = vmatprep.subr.bf16.mxu0 0
    %2957 = vmatpush1.bf16.msra.mxu0 0
    %2958 = vmatprep.subr.bf16.mxu0 0
    %2959 = vmatpush1.bf16.msra.mxu0 0
    %2960 = vmatprep.subr.bf16.mxu0 0
    %2961 = vmatpush1.bf16.msra.mxu0 0
    %2962 = vmatprep.subr.bf16.mxu0 0
    %2963 = vmatpush1.bf16.msra.mxu0 0
    %2964 = vmatprep.subr.bf16.mxu0 0
    %2965 = vmatpush1.bf16.msra.mxu0 0
    %2966 = vmatprep.subr.bf16.mxu0 0
    %2967 = vmatpush1.bf16.msra.mxu0 0
    %2968 = vmatprep.subr.bf16.mxu0 0
    %2969 = vmatpush1.bf16.msra.mxu0 0
    %2970 = vmatprep.subr.bf16.mxu0 0
    %2971 = vmatpush1.bf16.msra.mxu0 0
    %2972 = vmatprep.subr.bf16.mxu0 0
    %2973 = vmatpush1.bf16.msra.mxu0 0
    %2974 = vmatprep.subr.bf16.mxu0 0
    %2975 = vmatpush1.bf16.msra.mxu0 0
    %2976 = vmatprep.subr.bf16.mxu0 0
    %2977 = vmatpush1.bf16.msra.mxu0 0
    %2978 = vmatprep.subr.bf16.mxu0 0
    %2979 = vmatpush1.bf16.msra.mxu0 0
    %2980 = vmatprep.subr.bf16.mxu0 0
    %2981 = vmatpush1.bf16.msra.mxu0 0
    %2982 = vmatprep.subr.bf16.mxu0 0
    %2983 = vmatpush1.bf16.msra.mxu0 0
    %2984 = vmatprep.mubr.bf16.mxu0 0
    %2985 = vmatmul.mubr.bf16.gmra.mrb[0].mxu0 %v2950
    %v2986 = vpop.f32.mrb[0].mxu0
    %v2987 = vadd.f32 %v1895, %v2986
    %v2988 = vpop.f32.mrb[0].mxu0
    %v2989 = vpop.f32.mrb[0].mxu0
    %v2990 = vpop.f32.mrb[0].mxu0
    %2991 = vdwg.mxu0
    %2992 = vmatprep.subr.bf16.mxu0 0
    %2993 = vmatpush1.bf16.msra.mxu0 %v1874
    %2994 = vmatprep.subr.bf16.mxu0 0
    %2995 = vmatpush1.bf16.msra.mxu0 %v1875
    %2996 = vmatprep.subr.bf16.mxu0 0
    %2997 = vmatpush1.bf16.msra.mxu0 0
    %2998 = vmatprep.subr.bf16.mxu0 0
    %2999 = vmatpush1.bf16.msra.mxu0 0
    %3000 = vmatprep.subr.bf16.mxu0 0
    %3001 = vmatpush1.bf16.msra.mxu0 0
    %3002 = vmatprep.subr.bf16.mxu0 0
    %3003 = vmatpush1.bf16.msra.mxu0 0
    %3004 = vmatprep.subr.bf16.mxu0 0
    %3005 = vmatpush1.bf16.msra.mxu0 0
    %3006 = vmatprep.subr.bf16.mxu0 0
    %3007 = vmatpush1.bf16.msra.mxu0 0
    %3008 = vmatprep.subr.bf16.mxu0 0
    %3009 = vmatpush1.bf16.msra.mxu0 0
    %3010 = vmatprep.subr.bf16.mxu0 0
    %3011 = vmatpush1.bf16.msra.mxu0 0
    %3012 = vmatprep.subr.bf16.mxu0 0
    %3013 = vmatpush1.bf16.msra.mxu0 0
    %3014 = vmatprep.subr.bf16.mxu0 0
    %3015 = vmatpush1.bf16.msra.mxu0 0
    %3016 = vmatprep.subr.bf16.mxu0 0
    %3017 = vmatpush1.bf16.msra.mxu0 0
    %3018 = vmatprep.subr.bf16.mxu0 0
    %3019 = vmatpush1.bf16.msra.mxu0 0
    %3020 = vmatprep.subr.bf16.mxu0 0
    %3021 = vmatpush1.bf16.msra.mxu0 0
    %3022 = vmatprep.subr.bf16.mxu0 0
    %3023 = vmatpush1.bf16.msra.mxu0 0
    %3024 = vmatprep.mubr.bf16.mxu0 0
    %3025 = vmatmul.mubr.bf16.gmra.mrb[0].mxu0 %v2950
    %v3026 = vpop.f32.mrb[0].mxu0
    %v3027 = vadd.f32 %v1941, %v3026
    %v3028 = vpop.f32.mrb[0].mxu0
    %v3029 = vpop.f32.mrb[0].mxu0
    %v3030 = vpop.f32.mrb[0].mxu0
    %3031 = vdwg.mxu0
    %3032 = vmatprep.subr.bf16.mxu0 0
    %3033 = vmatpush1.bf16.msra.mxu0 %v1881
    %3034 = vmatprep.subr.bf16.mxu0 0
    %3035 = vmatpush1.bf16.msra.mxu0 %v1882
    %3036 = vmatprep.subr.bf16.mxu0 0
    %3037 = vmatpush1.bf16.msra.mxu0 0
    %3038 = vmatprep.subr.bf16.mxu0 0
    %3039 = vmatpush1.bf16.msra.mxu0 0
    %3040 = vmatprep.subr.bf16.mxu0 0
    %3041 = vmatpush1.bf16.msra.mxu0 0
    %3042 = vmatprep.subr.bf16.mxu0 0
    %3043 = vmatpush1.bf16.msra.mxu0 0
    %3044 = vmatprep.subr.bf16.mxu0 0
    %3045 = vmatpush1.bf16.msra.mxu0 0
    %3046 = vmatprep.subr.bf16.mxu0 0
    %3047 = vmatpush1.bf16.msra.mxu0 0
    %3048 = vmatprep.subr.bf16.mxu0 0
    %3049 = vmatpush1.bf16.msra.mxu0 0
    %3050 = vmatprep.subr.bf16.mxu0 0
    %3051 = vmatpush1.bf16.msra.mxu0 0
    %3052 = vmatprep.subr.bf16.mxu0 0
    %3053 = vmatpush1.bf16.msra.mxu0 0
    %3054 = vmatprep.subr.bf16.mxu0 0
    %3055 = vmatpush1.bf16.msra.mxu0 0
    %3056 = vmatprep.subr.bf16.mxu0 0
    %3057 = vmatpush1.bf16.msra.mxu0 0
    %3058 = vmatprep.subr.bf16.mxu0 0
    %3059 = vmatpush1.bf16.msra.mxu0 0
    %3060 = vmatprep.subr.bf16.mxu0 0
    %3061 = vmatpush1.bf16.msra.mxu0 0
    %3062 = vmatprep.subr.bf16.mxu0 0
    %3063 = vmatpush1.bf16.msra.mxu0 0
    %3064 = vmatprep.mubr.bf16.mxu0 0
    %3065 = vmatmul.mubr.bf16.gmra.mrb[0].mxu0 %v2950
    %v3066 = vpop.f32.mrb[0].mxu0
    %v3067 = vadd.f32 %v1987, %v3066
    %v3068 = vpop.f32.mrb[0].mxu0
    %v3069 = vpop.f32.mrb[0].mxu0
    %v3070 = vpop.f32.mrb[0].mxu0
    %3071 = vdwg.mxu0
    %v3072 = vadd.f32 %v2945, %v2987
    %v3073 = vxor.u32 %v3072, 2147483648
    %v3074 = vmul.f32 %v3073, 1.442695
    %v3075 = vpow.pop %v3074
    %v3076 = vadd.f32 %v3075, 1.0
    %v3077 = vrcp.pop %v3076
    %v3078 = vmul.f32 1.0, %v3077
    %v3079 = vadd.f32 %v2946, %v3027
    %v3080 = vxor.u32 %v3079, 2147483648
    %v3081 = vmul.f32 %v3080, 1.442695
    %v3082 = vpow.pop %v3081
    %v3083 = vadd.f32 %v3082, 1.0
    %v3084 = vrcp.pop %v3083
    %v3085 = vmul.f32 1.0, %v3084
    %v3086 = vmul.f32 %v3078, %v3067
    %v3087 = vadd.f32 %v2947, %v3086
    %v3088 = vtanh.pop %v3087
    %v3089 = vsub.f32 1.0, %v3085
    %v3090 = vmul.f32 %v3089, %v3088
    %v3091 = vmul.f32 %v3085, %v2943
    %v3092 = vadd.f32 %v3090, %v3091
    %3093 = vst.msk [vmem:[%s1683] sm:$0x3] %vm612, %v3092
    %v3094 = vld [vmem:[#allocation5] sm:$0xff]
    %v3095 = vld [vmem:[#allocation5 + $0x8] sm:$0xff]
    %v3096 = vld [vmem:[#allocation20] sm:$0xff]
    %v3097 = vld [vmem:[#allocation20 + $0x8] sm:$0xff]
    %v3098 = vld [vmem:[#allocation20 + $0x10] sm:$0xff]
    %v3099 = vld [vmem:[#allocation20 + $0x18] sm:$0xff]
    %v3100 = vpack.c.bf16 %v3095, %v3094
    %v3101 = vpack.c.bf16 %v3097, %v3096
    %v3102 = vpack.c.bf16 %v3099, %v3098
    %v3103 = vld [vmem:[#allocation21] sm:$0x1]
    %v3105 = vlaneseq
    %v3106 = vshrl.u32 %v3105, 7
    %v3107 = vsub.s32 0, %v3106
    %v3108 = vrot.slane %v3103, %v3107
    %v3111 = vsel %vm259, %v3100, 0
    %3113 = vmatprep.subr.bf16.mxu0 0
    %3114 = vmatpush1.bf16.msra.mxu0 %v3101
    %3115 = vmatprep.subr.bf16.mxu0 0
    %3116 = vmatpush1.bf16.msra.mxu0 %v3102
    %3117 = vmatprep.subr.bf16.mxu0 0
    %3118 = vmatpush1.bf16.msra.mxu0 0
    %3119 = vmatprep.subr.bf16.mxu0 0
    %3120 = vmatpush1.bf16.msra.mxu0 0
    %3121 = vmatprep.subr.bf16.mxu0 0
    %3122 = vmatpush1.bf16.msra.mxu0 0
    %3123 = vmatprep.subr.bf16.mxu0 0
    %3124 = vmatpush1.bf16.msra.mxu0 0
    %3125 = vmatprep.subr.bf16.mxu0 0
    %3126 = vmatpush1.bf16.msra.mxu0 0
    %3127 = vmatprep.subr.bf16.mxu0 0
    %3128 = vmatpush1.bf16.msra.mxu0 0
    %3129 = vmatprep.subr.bf16.mxu0 0
    %3130 = vmatpush1.bf16.msra.mxu0 0
    %3131 = vmatprep.subr.bf16.mxu0 0
    %3132 = vmatpush1.bf16.msra.mxu0 0
    %3133 = vmatprep.subr.bf16.mxu0 0
    %3134 = vmatpush1.bf16.msra.mxu0 0
    %3135 = vmatprep.subr.bf16.mxu0 0
    %3136 = vmatpush1.bf16.msra.mxu0 0
    %3137 = vmatprep.subr.bf16.mxu0 0
    %3138 = vmatpush1.bf16.msra.mxu0 0
    %3139 = vmatprep.subr.bf16.mxu0 0
    %3140 = vmatpush1.bf16.msra.mxu0 0
    %3141 = vmatprep.subr.bf16.mxu0 0
    %3142 = vmatpush1.bf16.msra.mxu0 0
    %3143 = vmatprep.subr.bf16.mxu0 0
    %3144 = vmatpush1.bf16.msra.mxu0 0
    %3145 = vmatprep.mubr.bf16.mxu0 0
    %3146 = vmatmul.mubr.bf16.gmra.mrb[0].mxu0 %v3111
    %v3147 = vpop.f32.mrb[0].mxu0
    %v3148 = vadd.f32 %v3108, %v3147
    %v3149 = vpop.f32.mrb[0].mxu0
    %v3150 = vpop.f32.mrb[0].mxu0
    %v3151 = vadd.f32 %v3108, %v3150
    %v3152 = vpop.f32.mrb[0].mxu0
    %3153 = vdwg.mxu0
    %v3154 = vmax.f32 %v3148, 0.0
    %v3155 = vmax.f32 %v3151, 0.0
    %v3156 = vld [vmem:[%s13] sm:$0xff]
    %v3157 = vld [vmem:[%s13 + $0x8] sm:$0xff]
    %v3158 = vld [vmem:[%s13 + $0x10] sm:$0xff]
    %v3159 = vld [vmem:[%s13 + $0x18] sm:$0xff]
    %v3160 = vpack.c.bf16 %v3155, %v3154
    %v3161 = vpack.c.bf16 %v3157, %v3156
    %v3162 = vpack.c.bf16 %v3159, %v3158
    %v3163 = vld [vmem:[%s14] sm:$0x1]
    %v3165 = vlaneseq
    %v3166 = vshrl.u32 %v3165, 7
    %v3167 = vsub.s32 0, %v3166
    %v3168 = vrot.slane %v3163, %v3167
    %v3171 = vsel %vm259, %v3160, 0
    %3173 = vmatprep.subr.bf16.mxu0 0
    %3174 = vmatpush1.bf16.msra.mxu0 %v3161
    %3175 = vmatprep.subr.bf16.mxu0 0
    %3176 = vmatpush1.bf16.msra.mxu0 %v3162
    %3177 = vmatprep.subr.bf16.mxu0 0
    %3178 = vmatpush1.bf16.msra.mxu0 0
    %3179 = vmatprep.subr.bf16.mxu0 0
    %3180 = vmatpush1.bf16.msra.mxu0 0
    %3181 = vmatprep.subr.bf16.mxu0 0
    %3182 = vmatpush1.bf16.msra.mxu0 0
    %3183 = vmatprep.subr.bf16.mxu0 0
    %3184 = vmatpush1.bf16.msra.mxu0 0
    %3185 = vmatprep.subr.bf16.mxu0 0
    %3186 = vmatpush1.bf16.msra.mxu0 0
    %3187 = vmatprep.subr.bf16.mxu0 0
    %3188 = vmatpush1.bf16.msra.mxu0 0
    %3189 = vmatprep.subr.bf16.mxu0 0
    %3190 = vmatpush1.bf16.msra.mxu0 0
    %3191 = vmatprep.subr.bf16.mxu0 0
    %3192 = vmatpush1.bf16.msra.mxu0 0
    %3193 = vmatprep.subr.bf16.mxu0 0
    %3194 = vmatpush1.bf16.msra.mxu0 0
    %3195 = vmatprep.subr.bf16.mxu0 0
    %3196 = vmatpush1.bf16.msra.mxu0 0
    %3197 = vmatprep.subr.bf16.mxu0 0
    %3198 = vmatpush1.bf16.msra.mxu0 0
    %3199 = vmatprep.subr.bf16.mxu0 0
    %3200 = vmatpush1.bf16.msra.mxu0 0
    %3201 = vmatprep.subr.bf16.mxu0 0
    %3202 = vmatpush1.bf16.msra.mxu0 0
    %3203 = vmatprep.subr.bf16.mxu0 0
    %3204 = vmatpush1.bf16.msra.mxu0 0
    %3205 = vmatprep.mubr.bf16.mxu0 0
    %3206 = vmatmul.mubr.bf16.gmra.mrb[0].mxu0 %v3171
    %v3207 = vpop.f32.mrb[0].mxu0
    %v3208 = vadd.f32 %v3168, %v3207
    %v3209 = vpop.f32.mrb[0].mxu0
    %v3210 = vpop.f32.mrb[0].mxu0
    %v3211 = vadd.f32 %v3168, %v3210
    %v3212 = vpop.f32.mrb[0].mxu0
    %3213 = vdwg.mxu0
    %vm3214 = vcmask 130048
    %v3215 = vsel %vm3214, %v3208, -inf
    %3216 = vmax.xlane.f32.xlu0 %v3215
    %v3217 = vpop.xlane.xlu0 %3216
    %v3218 = vsel %vm3214, %v3211, -inf
    %3219 = vmax.xlane.f32.xlu0 %v3218
    %v3220 = vpop.xlane.xlu0 %3219
    %v3221 = vsub.f32 %v3208, %v3217
    %v3222 = vsub.f32 %v3211, %v3220
    %v3223 = vmul.f32 %v3221, 1.442695
    %v3224 = vpow.pop %v3223
    %v3225 = vmul.f32 %v3222, 1.442695
    %v3226 = vpow.pop %v3225
    %v3227 = vsel %vm3214, %v3224, 0.0
    %3228 = vadd.xlane.f32.xlu0 %v3227
    %v3229 = vpop.xlane.xlu0 %3228
    %v3230 = vsel %vm3214, %v3226, 0.0
    %3231 = vadd.xlane.f32.xlu0 %v3230
    %v3232 = vpop.xlane.xlu0 %3231
    %v3233 = vrcp.pop %v3229
    %v3234 = vmul.f32 %v3224, %v3233
    %v3235 = vrcp.pop %v3232
    %v3236 = vmul.f32 %v3226, %v3235
    %3237 = vst.msk [vmem:[#allocation23] sm:$0xff] %vm3214, %v3234
    %3238 = vst.msk [vmem:[#allocation23 + $0x8] sm:$0xff] %vm3214, %v3236
    // Predicated region
    $region102: #{tpu_custom_call.1} parent=1 // pred_check
      _
    $region103: #{tpu_custom_call.1} parent=1 // pred_check_branch
      %3240 = sbr.rel (0) target = $region105
    $region104: #{tpu_custom_call.1} parent=1 // pred_region
      %s3242 = ssub.s32 256, 256
      %3243 = vsyncadd [#allocation8], %s3242
      %s3244 = sshll.u32 [#allocation23], 4
      %s3245 = int_to_ptr.vmem [resolvable:$true] %s3244
      %3250 = dma.vmem_to_hbm [thread:$0]  %s3245, 256, %s15, [#allocation8], 128, 128, 8
    $region105: #{tpu_custom_call.1} parent=1 // pred_fallthru
      _
    // Predicated region
    $region106: #{tpu_custom_call.1} parent=1 // pred_check
      _
    $region107: #{tpu_custom_call.1} parent=1 // pred_check_branch
      %3252 = sbr.rel (0) target = $region109
    $region108: #{tpu_custom_call.1} parent=1 // pred_region
      %3253 = dma.done [#allocation8], 256
    $region109: #{tpu_custom_call.1} parent=1 // pred_fallthru
      _
    %3254 = vsyncpa [#allocation7], 1
    %3255 = vsyncpa [#allocation10], 1
    %3256 = vsyncpa [#allocation13], 1
    %3257 = vsyncpa [#allocation16], 1
    %3258 = vsyncpa [#allocation19], 1
    %3259 = vsyncpa [#allocation22], 1
    %3260 = vsyncpa [#allocation8], 1

</llo_original>
